<compile_context>
chip_gen: v6e
topology: v6e:2x2x1
jax: 0.10.0
libtpu: 0.0.40
codegen_flags: <defaults>
</compile_context>

<pallas_src>
import functools
import math

import jax
import jax.numpy as jnp
import numpy as np
from jax.experimental import pallas as pl
from jax.experimental.pallas import tpu as pltpu


# -----------------------------------------------------------------------------
# in-kernel helpers (all math f32 unless an HBM weight is involved -> bf16 MXU)
# -----------------------------------------------------------------------------
def _bert_layernorm(x, gamma, beta, eps=1e-12):
    # pytorch-pretrained-bert BertLayerNorm: biased variance, eps inside sqrt.
    u = jnp.mean(x, axis=-1, keepdims=True)
    s = jnp.mean((x - u) ** 2, axis=-1, keepdims=True)
    return (x - u) * jax.lax.rsqrt(s + eps) * gamma + beta


def _norm(x, alpha, bias, eps=1e-6):
    # Norm module: alpha * (x - mean) / (unbiased_std + eps) + bias
    h = x.shape[-1]
    mu = jnp.mean(x, axis=-1, keepdims=True)
    var = jnp.sum((x - mu) ** 2, axis=-1, keepdims=True) * (1.0 / (h - 1))
    inv = pl.reciprocal(jnp.sqrt(var) + eps, approx=True)
    return alpha * (x - mu) * inv + bias


def _project_qkv(x, w_qkv, b_qkv):
    """Fused Q|K|V projection: one [H,3H] bf16 matmul, then lane-aligned slices."""
    h = x.shape[-1]
    qkv = jnp.dot(x.astype(w_qkv.dtype), w_qkv,
                  preferred_element_type=jnp.float32) + b_qkv
    return qkv[:, :h], qkv[:, h:2 * h], qkv[:, 2 * h:]


def _heads_attend(q, k, v, bias, n_heads):
    """Multi-head scaled dot-product attention context (no output projection).

    q:[Tq,H], k/v:[Tk,H] f32; bias broadcastable to [Tq,Tk] (additive mask).
    Head width dh = H/n_heads is a multiple of 128 in the demo config, so the
    static per-head loop works on lane-tile-aligned slices and the final concat
    is free tile placement.
    # TODO(synk): for large head counts switch to a batched dot_general / a
    # head grid axis instead of the unrolled loop.
    """
    tq, h = q.shape
    dh = h // n_heads
    scale = 1.0 / math.sqrt(dh)
    outs = []
    for i in range(n_heads):
        sl = slice(i * dh, (i + 1) * dh)
        s = jax.lax.dot_general(q[:, sl], k[:, sl], (((1,), (1,)), ((), ())),
                                preferred_element_type=jnp.float32) * scale + bias
        m = jnp.max(s, axis=-1, keepdims=True)
        e = jnp.exp(s - m)
        p = e * pl.reciprocal(jnp.sum(e, axis=-1, keepdims=True), approx=True)
        outs.append(jnp.dot(p, v[:, sl], preferred_element_type=jnp.float32))
    return jnp.concatenate(outs, axis=-1)  # [Tq, H]


# -----------------------------------------------------------------------------
# Kernel 1: BERT embeddings + full BERT encoder stack.  grid = (B, L_bert)
# -----------------------------------------------------------------------------
def bert_stack_kernel(we_ref, pe_ref, te_ref, eg_ref, eb_ref, bias_ref,
                      wqkv_ref, bqkv_ref, wo_ref, bo_ref, g1_ref, b1_ref,
                      wi_ref, bi_ref, wfo_ref, bfo_ref, g2_ref, b2_ref,
                      o_ref, x_sc, *, n_heads):
    l = pl.program_id(1)

    @pl.when(l == 0)
    def _():  # BertEmbeddings: word + position + token_type, LayerNorm
        x0 = we_ref[...] + pe_ref[...] + te_ref[...]
        x_sc[...] = _bert_layernorm(x0, eg_ref[...], eb_ref[...])

    x = x_sc[...]

    # --- self-attention sub-layer (post-LN, BERT style) -----------------------
    q, k, v = _project_qkv(x, wqkv_ref[...], bqkv_ref[...])
    ctx = _heads_attend(q, k, v, bias_ref[...], n_heads)          # bias: [1, T]
    attn_out = jnp.dot(ctx.astype(jnp.bfloat16), wo_ref[...],
                       preferred_element_type=jnp.float32) + bo_ref[...]
    x = _bert_layernorm(x + attn_out, g1_ref[...], b1_ref[...])

    # --- feed-forward sub-layer ------------------------------------------------
    hmid = jnp.dot(x.astype(jnp.bfloat16), wi_ref[...],
                   preferred_element_type=jnp.float32) + bi_ref[...]
    # TODO(synk): original BERT uses exact erf GELU; tanh-approx GELU used here.
    hmid = jax.nn.gelu(hmid, approximate=True)
    ffn_out = jnp.dot(hmid.astype(jnp.bfloat16), wfo_ref[...],
                      preferred_element_type=jnp.float32) + bfo_ref[...]
    x = _bert_layernorm(x + ffn_out, g2_ref[...], b2_ref[...])

    x_sc[...] = x

    @pl.when(l == pl.num_programs(1) - 1)
    def _():
        o_ref[...] = x


# -----------------------------------------------------------------------------
# Kernel 2: PositionalEncoder + decoder stack + final Norm.  grid = (B, L_dec)
# -----------------------------------------------------------------------------
def dec_stack_kernel(x_ref, pe_ref, enc_ref, self_bias_ref, cross_bias_ref,
                     n1a_ref, n1b_ref, a1_wqkv_ref, a1_bqkv_ref, a1_wo_ref,
                     a1_bo_ref, n2a_ref, n2b_ref, a2_wq_ref, a2_bq_ref,
                     a2_wkv_ref, a2_bkv_ref, a2_wo_ref, a2_bo_ref,
                     n3a_ref, n3b_ref, w1_ref, b1_ref, w2_ref, b2_ref,
                     fa_ref, fb_ref, o_ref, x_sc, *, n_heads, d_model):
    l = pl.program_id(1)

    @pl.when(l == 0)
    def _():  # PositionalEncoder: x * sqrt(d_model) + pe
        x_sc[...] = x_ref[...] * jnp.float32(math.sqrt(d_model)) + pe_ref[...]

    x = x_sc[...]
    h = d_model

    # --- masked self-attention (pre-norm) --------------------------------------
    x2 = _norm(x, n1a_ref[...], n1b_ref[...])
    q, k, v = _project_qkv(x2, a1_wqkv_ref[...], a1_bqkv_ref[...])
    ctx = _heads_attend(q, k, v, self_bias_ref[...], n_heads)     # bias: [T, T]
    x = x + jnp.dot(ctx.astype(jnp.bfloat16), a1_wo_ref[...],
                    preferred_element_type=jnp.float32) + a1_bo_ref[...]

    # --- cross-attention over encoder outputs (pre-norm) -----------------------
    x2 = _norm(x, n2a_ref[...], n2b_ref[...])
    q = jnp.dot(x2.astype(jnp.bfloat16), a2_wq_ref[...],
                preferred_element_type=jnp.float32) + a2_bq_ref[...]
    kv = jnp.dot(enc_ref[...], a2_wkv_ref[...],                   # enc is bf16
                 preferred_element_type=jnp.float32) + a2_bkv_ref[...]
    ctx = _heads_attend(q, kv[:, :h], kv[:, h:], cross_bias_ref[...], n_heads)
    x = x + jnp.dot(ctx.astype(jnp.bfloat16), a2_wo_ref[...],
                    preferred_element_type=jnp.float32) + a2_bo_ref[...]

    # --- ReLU feed-forward (pre-norm) ------------------------------------------
    # TODO(synk): at production sizes (H=768, FF/BI>=2048) K-tile these weight
    # matmuls with an f32 accumulator + pl.Buffered(1) weights for v7x's 64 MiB VMEM.
    x2 = _norm(x, n3a_ref[...], n3b_ref[...])
    hmid = jnp.maximum(
        jnp.dot(x2.astype(jnp.bfloat16), w1_ref[...],
                preferred_element_type=jnp.float32) + b1_ref[...], 0.0)
    x = x + jnp.dot(hmid.astype(jnp.bfloat16), w2_ref[...],
                    preferred_element_type=jnp.float32) + b2_ref[...]

    x_sc[...] = x

    @pl.when(l == pl.num_programs(1) - 1)
    def _():
        o_ref[...] = _norm(x, fa_ref[...], fb_ref[...])


# -----------------------------------------------------------------------------
# pallas_call wrapper: grid = (batch, layer); batched args squeeze the batch
# dim, layer-stacked args squeeze the layer dim, shared args are full blocks.
# -----------------------------------------------------------------------------
def _stack_call(kernel, out_struct, args, kinds, grid, scratch, **static):
    in_specs = []
    for a, kind in zip(args, kinds):
        nd = a.ndim
        if kind == "b":      # batched: [B, ...] -> kernel sees [...]
            in_specs.append(pl.BlockSpec(
                (None,) + tuple(a.shape[1:]),
                lambda b, l, _n=nd: (b,) + (0,) * (_n - 1)))
        elif kind == "l":    # layer-stacked: [L, ...] -> kernel sees [...]
            in_specs.append(pl.BlockSpec(
                (None,) + tuple(a.shape[1:]),
                lambda b, l, _n=nd: (l,) + (0,) * (_n - 1)))
        else:                # shared: full array every step
            in_specs.append(pl.BlockSpec(
                tuple(a.shape), lambda b, l, _n=nd: (0,) * _n))
    out_nd = len(out_struct.shape)
    out_spec = pl.BlockSpec((None,) + tuple(out_struct.shape[1:]),
                            lambda b, l, _n=out_nd: (b,) + (0,) * (_n - 1))
    return pl.pallas_call(
        functools.partial(kernel, **static),
        out_shape=out_struct,
        grid=grid,
        in_specs=in_specs,
        out_specs=out_spec,
        scratch_shapes=scratch,
        compiler_params=pltpu.CompilerParams(
            dimension_semantics=("parallel", "arbitrary"),
            vmem_limit_bytes=48 * 1024 * 1024),
    )(*args)


# -----------------------------------------------------------------------------
# parameters (deterministic, synthetic); matmul weights bf16, everything else f32
# -----------------------------------------------------------------------------
def _pe_table(max_len, d_model):
    # Reproduces the PositionalEncoder table of the reference implementation.
    pe = np.zeros((max_len, d_model), np.float32)
    for pos in range(max_len):
        for i in range(0, d_model, 2):
            pe[pos, i] = math.sin(pos / (10000 ** ((2 * i) / d_model)))
            if i + 1 < d_model:
                pe[pos, i + 1] = math.cos(pos / (10000 ** ((2 * (i + 1)) / d_model)))
    return jnp.asarray(pe)


def init_params(key, cfg):
    keys = iter(jax.random.split(key, 128))
    f32, bf16 = jnp.float32, jnp.bfloat16
    H, BI, FF = cfg["hidden"], cfg["bert_inter"], cfg["d_ff"]
    Lb, Ld = cfg["bert_layers"], cfg["dec_layers"]

    def w(shape, dtype=bf16, scale=0.02):
        return (jax.random.normal(next(keys), shape, f32) * scale).astype(dtype)

    def b(shape):
        return w(shape, dtype=f32)

    ones = lambda s: jnp.ones(s, f32)
    zeros = lambda s: jnp.zeros(s, f32)

    return dict(
        # embeddings
        word_emb=w((cfg["vocab"], H), f32),
        pos_emb=w((cfg["max_pos"], H), f32),
        type_emb=w((cfg["type_vocab"], H), f32),
        emb_ln_g=ones((1, H)), emb_ln_b=zeros((1, H)),
        # BERT encoder stack (weights stacked over the layer axis, QKV fused)
        b_wqkv=w((Lb, H, 3 * H)), b_bqkv=b((Lb, 1, 3 * H)),
        b_wo=w((Lb, H, H)), b_bo=b((Lb, 1, H)),
        b_g1=ones((Lb, 1, H)), b_b1=zeros((Lb, 1, H)),
        b_wi=w((Lb, H, BI)), b_bi=b((Lb, 1, BI)),
        b_wfo=w((Lb, BI, H)), b_bfo=b((Lb, 1, H)),
        b_g2=ones((Lb, 1, H)), b_b2=zeros((Lb, 1, H)),
        # positional encoder table
        pe_table=_pe_table(cfg["max_pos"], H),
        # decoder stack (self-attn QKV fused, cross-attn K|V fused)
        d_n1a=ones((Ld, 1, H)), d_n1b=zeros((Ld, 1, H)),
        d_a1_wqkv=w((Ld, H, 3 * H)), d_a1_bqkv=b((Ld, 1, 3 * H)),
        d_a1_wo=w((Ld, H, H)), d_a1_bo=b((Ld, 1, H)),
        d_n2a=ones((Ld, 1, H)), d_n2b=zeros((Ld, 1, H)),
        d_a2_wq=w((Ld, H, H)), d_a2_bq=b((Ld, 1, H)),
        d_a2_wkv=w((Ld, H, 2 * H)), d_a2_bkv=b((Ld, 1, 2 * H)),
        d_a2_wo=w((Ld, H, H)), d_a2_bo=b((Ld, 1, H)),
        d_n3a=ones((Ld, 1, H)), d_n3b=zeros((Ld, 1, H)),
        d_w1=w((Ld, H, FF)), d_b1=b((Ld, 1, FF)),
        d_w2=w((Ld, FF, H)), d_b2=b((Ld, 1, H)),
        # final Norm
        final_a=ones((1, H)), final_b=zeros((1, H)),
    )


# -----------------------------------------------------------------------------
# forward: 2 pallas_calls total (all hot-path math lives in the kernels)
# -----------------------------------------------------------------------------
def forward(params, target_ids, target_token_type_ids, target_mask,
            target_nopeak_mask, encoder_outputs, src_mask, *, n_heads, bert_heads):
    p = params
    B, T = target_ids.shape
    H = p["word_emb"].shape[1]
    f32 = jnp.float32
    struct = jax.ShapeDtypeStruct((B, T, H), f32)

    # glue gathers (embedding lookups)
    # TODO(synk): fold into the kernel via scalar-prefetch row DMA to avoid the
    # extra [B,T,H] HBM round-trips.
    we = jnp.take(p["word_emb"], target_ids, axis=0)
    te = jnp.take(p["type_emb"], target_token_type_ids, axis=0)
    pe_bert = p["pos_emb"][:T]

    # additive attention-mask biases (computed once; kernels only add)
    bert_bias = ((1.0 - target_mask.astype(f32)) * -10000.0)[:, None, :]    # [B,1,T]
    self_bias = jnp.where(target_nopeak_mask[:, 0].astype(f32) == 0.0,
                          f32(-1e9), f32(0.0))                              # [B,T,T]
    cross_bias = jnp.where(src_mask[:, 0, 0, :].astype(f32) == 0.0,
                           f32(-1e9), f32(0.0))[:, None, :]                 # [B,1,S]
    enc_bf16 = encoder_outputs.astype(jnp.bfloat16)

    # ---- BERT embeddings + encoder stack (one fused pallas_call) --------------
    bert_args = [we, pe_bert, te, p["emb_ln_g"], p["emb_ln_b"], bert_bias,
                 p["b_wqkv"], p["b_bqkv"], p["b_wo"], p["b_bo"], p["b_g1"],
                 p["b_b1"], p["b_wi"], p["b_bi"], p["b_wfo"], p["b_bfo"],
                 p["b_g2"], p["b_b2"]]
    bert_kinds = ["b", "s", "b", "s", "s", "b"] + ["l"] * 12
    Lb = p["b_wqkv"].shape[0]
    x = _stack_call(bert_stack_kernel, struct, bert_args, bert_kinds,
                    grid=(B, Lb), scratch=[pltpu.VMEM((T, H), f32)],
                    n_heads=bert_heads)

    # ---- PositionalEncoder + decoder stack + final Norm (one fused call) ------
    dec_args = [x, p["pe_table"][:T], enc_bf16, self_bias, cross_bias,
                p["d_n1a"], p["d_n1b"], p["d_a1_wqkv"], p["d_a1_bqkv"],
                p["d_a1_wo"], p["d_a1_bo"], p["d_n2a"], p["d_n2b"],
                p["d_a2_wq"], p["d_a2_bq"], p["d_a2_wkv"], p["d_a2_bkv"],
                p["d_a2_wo"], p["d_a2_bo"], p["d_n3a"], p["d_n3b"],
                p["d_w1"], p["d_b1"], p["d_w2"], p["d_b2"],
                p["final_a"], p["final_b"]]
    dec_kinds = ["b", "s", "b", "b", "b"] + ["l"] * 20 + ["s", "s"]
    Ld = p["d_w1"].shape[0]
    return _stack_call(dec_stack_kernel, struct, dec_args, dec_kinds,
                       grid=(B, Ld), scratch=[pltpu.VMEM((T, H), f32)],
                       n_heads=n_heads, d_model=H)


# -----------------------------------------------------------------------------
if __name__ == "__main__":
    B, T, S = 2, 8, 8
    H, NH = 256, 2            # dh = 128 -> head slices are lane-tile aligned
    cfg = dict(vocab=64, type_vocab=2, max_pos=64, hidden=H,
               bert_layers=2, bert_inter=512, dec_layers=2, d_ff=512)

    key = jax.random.PRNGKey(0)
    kp, kid, kenc = jax.random.split(key, 3)
    params = init_params(kp, cfg)

    target_ids = jax.random.randint(kid, (B, T), 1, cfg["vocab"]).astype(jnp.int32)
    target_token_type_ids = jnp.zeros((B, T), jnp.int32)
    target_mask = jnp.ones((B, T), jnp.int32)

    pad = (target_ids != 0).astype(jnp.float32)                       # [B,T]
    nopeak = jnp.tril(jnp.ones((T, T), jnp.float32))                  # [T,T]
    target_nopeak_mask = (pad[:, None, :] * nopeak[None, :, :])[:, None, :, :]  # [B,1,T,T]

    encoder_outputs = jax.random.normal(kenc, (B, S, H), jnp.float32)
    src_mask = jnp.ones((B, 1, 1, S), jnp.float32).at[1, 0, 0, S - 1].set(0.0)

    out = forward(params, target_ids, target_token_type_ids, target_mask,
                  target_nopeak_mask, encoder_outputs, src_mask,
                  n_heads=NH, bert_heads=NH)
    out = jax.block_until_ready(out)
    assert out.shape == (B, T, H) and out.dtype == jnp.float32
    assert bool(jnp.all(jnp.isfinite(out)))
    print("KERNEL_OK")
</pallas_src>

<mosaic_0001>
module attributes {stable_mosaic.version = 11 : i64} {
  func.func @bert_stack_kernel(%arg0: i32, %arg1: i32, %arg2: memref<1x8x256xf32, #tpu.memory_space<vmem>>, %arg3: memref<8x256xf32, #tpu.memory_space<vmem>>, %arg4: memref<1x8x256xf32, #tpu.memory_space<vmem>>, %arg5: memref<1x256xf32, #tpu.memory_space<vmem>>, %arg6: memref<1x256xf32, #tpu.memory_space<vmem>>, %arg7: memref<1x1x8xf32, #tpu.memory_space<vmem>>, %arg8: memref<1x256x768xbf16, #tpu.memory_space<vmem>>, %arg9: memref<1x1x768xf32, #tpu.memory_space<vmem>>, %arg10: memref<1x256x256xbf16, #tpu.memory_space<vmem>>, %arg11: memref<1x1x256xf32, #tpu.memory_space<vmem>>, %arg12: memref<1x1x256xf32, #tpu.memory_space<vmem>>, %arg13: memref<1x1x256xf32, #tpu.memory_space<vmem>>, %arg14: memref<1x256x512xbf16, #tpu.memory_space<vmem>>, %arg15: memref<1x1x512xf32, #tpu.memory_space<vmem>>, %arg16: memref<1x512x256xbf16, #tpu.memory_space<vmem>>, %arg17: memref<1x1x256xf32, #tpu.memory_space<vmem>>, %arg18: memref<1x1x256xf32, #tpu.memory_space<vmem>>, %arg19: memref<1x1x256xf32, #tpu.memory_space<vmem>>, %arg20: memref<1x8x256xf32, #tpu.memory_space<vmem>>, %arg21: memref<8x256xf32, #tpu.memory_space<vmem>>) attributes {dimension_semantics = [#tpu.dimension_semantics<parallel>, #tpu.dimension_semantics<arbitrary>], iteration_bounds = array<i64: 2, 2>, scalar_prefetch = 0 : i64, scratch_operands = 1 : i64, tpu.core_type = #tpu.core_type<tc>, window_params = [{transform_indices = @transform_0, window_bounds = array<i64: 1, 8, 256>}, {pipeline_mode = #tpu.pipeline_mode<synchronous>, transform_indices = @transform_1, window_bounds = array<i64: 8, 256>}, {transform_indices = @transform_2, window_bounds = array<i64: 1, 8, 256>}, {pipeline_mode = #tpu.pipeline_mode<synchronous>, transform_indices = @transform_3, window_bounds = array<i64: 1, 256>}, {pipeline_mode = #tpu.pipeline_mode<synchronous>, transform_indices = @transform_4, window_bounds = array<i64: 1, 256>}, {transform_indices = @transform_5, window_bounds = array<i64: 1, 1, 8>}, {transform_indices = @transform_6, window_bounds = array<i64: 1, 256, 768>}, {transform_indices = @transform_7, window_bounds = array<i64: 1, 1, 768>}, {transform_indices = @transform_8, window_bounds = array<i64: 1, 256, 256>}, {transform_indices = @transform_9, window_bounds = array<i64: 1, 1, 256>}, {transform_indices = @transform_10, window_bounds = array<i64: 1, 1, 256>}, {transform_indices = @transform_11, window_bounds = array<i64: 1, 1, 256>}, {transform_indices = @transform_12, window_bounds = array<i64: 1, 256, 512>}, {transform_indices = @transform_13, window_bounds = array<i64: 1, 1, 512>}, {transform_indices = @transform_14, window_bounds = array<i64: 1, 512, 256>}, {transform_indices = @transform_15, window_bounds = array<i64: 1, 1, 256>}, {transform_indices = @transform_16, window_bounds = array<i64: 1, 1, 256>}, {transform_indices = @transform_17, window_bounds = array<i64: 1, 1, 256>}, {transform_indices = @transform_18, window_bounds = array<i64: 1, 8, 256>}]} {
    %c0_i32 = arith.constant 0 : i32
    %0 = arith.cmpi eq, %arg1, %c0_i32 : i32
    %1 = arith.extui %0 : i1 to i32
    %c0_i32_0 = arith.constant 0 : i32
    %2 = arith.cmpi ne, %1, %c0_i32_0 : i32
    scf.if %2 {
      %c0_71 = arith.constant 0 : index
      %c0_72 = arith.constant 0 : index
      %c0_73 = arith.constant 0 : index
      %151 = vector.load %arg2[%c0_71, %c0_72, %c0_73] : memref<1x8x256xf32, #tpu.memory_space<vmem>>, vector<1x8x256xf32>
      %152 = vector.shape_cast %151 : vector<1x8x256xf32> to vector<8x256xf32>
      %c0_74 = arith.constant 0 : index
      %c0_75 = arith.constant 0 : index
      %153 = vector.load %arg3[%c0_74, %c0_75] : memref<8x256xf32, #tpu.memory_space<vmem>>, vector<8x256xf32>
      %154 = arith.addf %152, %153 : vector<8x256xf32>
      %c0_76 = arith.constant 0 : index
      %c0_77 = arith.constant 0 : index
      %c0_78 = arith.constant 0 : index
      %155 = vector.load %arg4[%c0_76, %c0_77, %c0_78] : memref<1x8x256xf32, #tpu.memory_space<vmem>>, vector<1x8x256xf32>
      %156 = vector.shape_cast %155 : vector<1x8x256xf32> to vector<8x256xf32>
      %157 = arith.addf %154, %156 : vector<8x256xf32>
      %c0_79 = arith.constant 0 : index
      %c0_80 = arith.constant 0 : index
      %158 = vector.load %arg5[%c0_79, %c0_80] : memref<1x256xf32, #tpu.memory_space<vmem>>, vector<1x256xf32>
      %c0_81 = arith.constant 0 : index
      %c0_82 = arith.constant 0 : index
      %159 = vector.load %arg6[%c0_81, %c0_82] : memref<1x256xf32, #tpu.memory_space<vmem>>, vector<1x256xf32>
      %cst_83 = arith.constant dense<0.000000e+00> : vector<8xf32>
      %160 = vector.multi_reduction <add>, %157, %cst_83 [1] : vector<8x256xf32> to vector<8xf32>
      %161 = vector.shape_cast %160 : vector<8xf32> to vector<8x1xf32>
      %cst_84 = arith.constant 2.560000e+02 : f32
      %162 = vector.broadcast %cst_84 : f32 to vector<8x1xf32>
      %163 = arith.divf %161, %162 : vector<8x1xf32>
      %164 = vector.broadcast %163 : vector<8x1xf32> to vector<8x256xf32>
      %165 = arith.subf %157, %164 : vector<8x256xf32>
      %166 = arith.mulf %165, %165 : vector<8x256xf32>
      %cst_85 = arith.constant dense<0.000000e+00> : vector<8xf32>
      %167 = vector.multi_reduction <add>, %166, %cst_85 [1] : vector<8x256xf32> to vector<8xf32>
      %168 = vector.shape_cast %167 : vector<8xf32> to vector<8x1xf32>
      %cst_86 = arith.constant 2.560000e+02 : f32
      %169 = vector.broadcast %cst_86 : f32 to vector<8x1xf32>
      %170 = arith.divf %168, %169 : vector<8x1xf32>
      %171 = vector.broadcast %163 : vector<8x1xf32> to vector<8x256xf32>
      %172 = arith.subf %157, %171 : vector<8x256xf32>
      %cst_87 = arith.constant 9.99999996E-13 : f32
      %173 = vector.broadcast %cst_87 : f32 to vector<8x1xf32>
      %174 = arith.addf %170, %173 : vector<8x1xf32>
      %175 = math.rsqrt %174 : vector<8x1xf32>
      %176 = vector.broadcast %175 : vector<8x1xf32> to vector<8x256xf32>
      %177 = arith.mulf %172, %176 : vector<8x256xf32>
      %178 = vector.broadcast %158 : vector<1x256xf32> to vector<8x256xf32>
      %179 = arith.mulf %177, %178 : vector<8x256xf32>
      %180 = vector.broadcast %159 : vector<1x256xf32> to vector<8x256xf32>
      %181 = arith.addf %179, %180 : vector<8x256xf32>
      %c0_88 = arith.constant 0 : index
      %c0_89 = arith.constant 0 : index
      %182 = vector.load %arg21[%c0_88, %c0_89] : memref<8x256xf32, #tpu.memory_space<vmem>>, vector<8x256xf32>
      tpu.vector_store %arg21[%c0_88, %c0_89], %181 {strides = array<i32>} : memref<8x256xf32, #tpu.memory_space<vmem>>, vector<8x256xf32>,
    } else {
    }
    %c0 = arith.constant 0 : index
    %c0_1 = arith.constant 0 : index
    %3 = vector.load %arg21[%c0, %c0_1] : memref<8x256xf32, #tpu.memory_space<vmem>>, vector<8x256xf32>
    %c0_2 = arith.constant 0 : index
    %c0_3 = arith.constant 0 : index
    %c0_4 = arith.constant 0 : index
    %4 = vector.load %arg8[%c0_2, %c0_3, %c0_4] : memref<1x256x768xbf16, #tpu.memory_space<vmem>>, vector<1x256x768xbf16>
    %5 = vector.shape_cast %4 : vector<1x256x768xbf16> to vector<256x768xbf16>
    %c0_5 = arith.constant 0 : index
    %c0_6 = arith.constant 0 : index
    %c0_7 = arith.constant 0 : index
    %6 = vector.load %arg9[%c0_5, %c0_6, %c0_7] : memref<1x1x768xf32, #tpu.memory_space<vmem>>, vector<1x1x768xf32>
    %7 = vector.shape_cast %6 : vector<1x1x768xf32> to vector<1x768xf32>
    %8 = arith.truncf %3 : vector<8x256xf32> to vector<8x256xbf16>
    %cst = arith.constant dense<0.000000e+00> : vector<8x768xf32>
    %9 = tpu.matmul %8, %5, %cst {dimension_numbers = #tpu.dot_dimension_numbers<[1], [0], [0], [1], [0, 0, 1, 1], [], []>} : vector<8x256xbf16>, vector<256x768xbf16>, vector<8x768xf32> -> vector<8x768xf32>
    %10 = vector.broadcast %7 : vector<1x768xf32> to vector<8x768xf32>
    %11 = arith.addf %9, %10 : vector<8x768xf32>
    %12 = vector.extract_strided_slice %11 {offsets = [0, 0], sizes = [8, 256], strides = [1, 1]} : vector<8x768xf32> to vector<8x256xf32>
    %13 = vector.extract_strided_slice %11 {offsets = [0, 256], sizes = [8, 256], strides = [1, 1]} : vector<8x768xf32> to vector<8x256xf32>
    %14 = vector.extract_strided_slice %11 {offsets = [0, 512], sizes = [8, 256], strides = [1, 1]} : vector<8x768xf32> to vector<8x256xf32>
    %c0_8 = arith.constant 0 : index
    %c0_9 = arith.constant 0 : index
    %c0_10 = arith.constant 0 : index
    %15 = vector.load %arg7[%c0_8, %c0_9, %c0_10] : memref<1x1x8xf32, #tpu.memory_space<vmem>>, vector<1x1x8xf32>
    %16 = vector.shape_cast %15 : vector<1x1x8xf32> to vector<1x8xf32>
    %17 = vector.extract_strided_slice %12 {offsets = [0, 0], sizes = [8, 128], strides = [1, 1]} : vector<8x256xf32> to vector<8x128xf32>
    %18 = vector.extract_strided_slice %13 {offsets = [0, 0], sizes = [8, 128], strides = [1, 1]} : vector<8x256xf32> to vector<8x128xf32>
    %cst_11 = arith.constant dense<0.000000e+00> : vector<8x8xf32>
    %19 = tpu.matmul %17, %18, %cst_11 {dimension_numbers = #tpu.dot_dimension_numbers<[1], [1], [0], [0], [0, 0, 1, 0], [], []>} : vector<8x128xf32>, vector<8x128xf32>, vector<8x8xf32> -> vector<8x8xf32>
    %cst_12 = arith.constant 0.0883883461 : f32
    %20 = vector.broadcast %cst_12 : f32 to vector<8x8xf32>
    %21 = arith.mulf %19, %20 : vector<8x8xf32>
    %22 = vector.broadcast %16 : vector<1x8xf32> to vector<8x8xf32>
    %23 = arith.addf %21, %22 : vector<8x8xf32>
    %cst_13 = arith.constant dense<0xFF800000> : vector<8xf32>
    %24 = vector.multi_reduction <maximumf>, %23, %cst_13 [1] : vector<8x8xf32> to vector<8xf32>
    %25 = vector.shape_cast %24 : vector<8xf32> to vector<8x1xf32>
    %26 = vector.broadcast %25 : vector<8x1xf32> to vector<8x8xf32>
    %27 = arith.subf %23, %26 : vector<8x8xf32>
    %28 = math.exp %27 : vector<8x8xf32>
    %cst_14 = arith.constant dense<0.000000e+00> : vector<8xf32>
    %29 = vector.multi_reduction <add>, %28, %cst_14 [1] : vector<8x8xf32> to vector<8xf32>
    %30 = vector.shape_cast %29 : vector<8xf32> to vector<8x1xf32>
    %31 = tpu.reciprocal %30 {approx = true} : vector<8x1xf32> -> vector<8x1xf32>
    %32 = vector.broadcast %31 : vector<8x1xf32> to vector<8x8xf32>
    %33 = arith.mulf %28, %32 : vector<8x8xf32>
    %34 = vector.extract_strided_slice %14 {offsets = [0, 0], sizes = [8, 128], strides = [1, 1]} : vector<8x256xf32> to vector<8x128xf32>
    %cst_15 = arith.constant dense<0.000000e+00> : vector<8x128xf32>
    %35 = tpu.matmul %33, %34, %cst_15 {dimension_numbers = #tpu.dot_dimension_numbers<[1], [0], [0], [1], [0, 0, 1, 1], [], []>} : vector<8x8xf32>, vector<8x128xf32>, vector<8x128xf32> -> vector<8x128xf32>
    %36 = vector.extract_strided_slice %12 {offsets = [0, 128], sizes = [8, 128], strides = [1, 1]} : vector<8x256xf32> to vector<8x128xf32>
    %37 = vector.extract_strided_slice %13 {offsets = [0, 128], sizes = [8, 128], strides = [1, 1]} : vector<8x256xf32> to vector<8x128xf32>
    %cst_16 = arith.constant dense<0.000000e+00> : vector<8x8xf32>
    %38 = tpu.matmul %36, %37, %cst_16 {dimension_numbers = #tpu.dot_dimension_numbers<[1], [1], [0], [0], [0, 0, 1, 0], [], []>} : vector<8x128xf32>, vector<8x128xf32>, vector<8x8xf32> -> vector<8x8xf32>
    %cst_17 = arith.constant 0.0883883461 : f32
    %39 = vector.broadcast %cst_17 : f32 to vector<8x8xf32>
    %40 = arith.mulf %38, %39 : vector<8x8xf32>
    %41 = vector.broadcast %16 : vector<1x8xf32> to vector<8x8xf32>
    %42 = arith.addf %40, %41 : vector<8x8xf32>
    %cst_18 = arith.constant dense<0xFF800000> : vector<8xf32>
    %43 = vector.multi_reduction <maximumf>, %42, %cst_18 [1] : vector<8x8xf32> to vector<8xf32>
    %44 = vector.shape_cast %43 : vector<8xf32> to vector<8x1xf32>
    %45 = vector.broadcast %44 : vector<8x1xf32> to vector<8x8xf32>
    %46 = arith.subf %42, %45 : vector<8x8xf32>
    %47 = math.exp %46 : vector<8x8xf32>
    %cst_19 = arith.constant dense<0.000000e+00> : vector<8xf32>
    %48 = vector.multi_reduction <add>, %47, %cst_19 [1] : vector<8x8xf32> to vector<8xf32>
    %49 = vector.shape_cast %48 : vector<8xf32> to vector<8x1xf32>
    %50 = tpu.reciprocal %49 {approx = true} : vector<8x1xf32> -> vector<8x1xf32>
    %51 = vector.broadcast %50 : vector<8x1xf32> to vector<8x8xf32>
    %52 = arith.mulf %47, %51 : vector<8x8xf32>
    %53 = vector.extract_strided_slice %14 {offsets = [0, 128], sizes = [8, 128], strides = [1, 1]} : vector<8x256xf32> to vector<8x128xf32>
    %cst_20 = arith.constant dense<0.000000e+00> : vector<8x128xf32>
    %54 = tpu.matmul %52, %53, %cst_20 {dimension_numbers = #tpu.dot_dimension_numbers<[1], [0], [0], [1], [0, 0, 1, 1], [], []>} : vector<8x8xf32>, vector<8x128xf32>, vector<8x128xf32> -> vector<8x128xf32>
    %55 = tpu.concatenate %35, %54 in 1 : vector<8x128xf32>, vector<8x128xf32> -> vector<8x256xf32>
    %56 = arith.truncf %55 : vector<8x256xf32> to vector<8x256xbf16>
    %c0_21 = arith.constant 0 : index
    %c0_22 = arith.constant 0 : index
    %c0_23 = arith.constant 0 : index
    %57 = vector.load %arg10[%c0_21, %c0_22, %c0_23] : memref<1x256x256xbf16, #tpu.memory_space<vmem>>, vector<1x256x256xbf16>
    %58 = vector.shape_cast %57 : vector<1x256x256xbf16> to vector<256x256xbf16>
    %cst_24 = arith.constant dense<0.000000e+00> : vector<8x256xf32>
    %59 = tpu.matmul %56, %58, %cst_24 {dimension_numbers = #tpu.dot_dimension_numbers<[1], [0], [0], [1], [0, 0, 1, 1], [], []>} : vector<8x256xbf16>, vector<256x256xbf16>, vector<8x256xf32> -> vector<8x256xf32>
    %c0_25 = arith.constant 0 : index
    %c0_26 = arith.constant 0 : index
    %c0_27 = arith.constant 0 : index
    %60 = vector.load %arg11[%c0_25, %c0_26, %c0_27] : memref<1x1x256xf32, #tpu.memory_space<vmem>>, vector<1x1x256xf32>
    %61 = vector.shape_cast %60 : vector<1x1x256xf32> to vector<1x256xf32>
    %62 = vector.broadcast %61 : vector<1x256xf32> to vector<8x256xf32>
    %63 = arith.addf %59, %62 : vector<8x256xf32>
    %64 = arith.addf %3, %63 : vector<8x256xf32>
    %c0_28 = arith.constant 0 : index
    %c0_29 = arith.constant 0 : index
    %c0_30 = arith.constant 0 : index
    %65 = vector.load %arg12[%c0_28, %c0_29, %c0_30] : memref<1x1x256xf32, #tpu.memory_space<vmem>>, vector<1x1x256xf32>
    %66 = vector.shape_cast %65 : vector<1x1x256xf32> to vector<1x256xf32>
    %c0_31 = arith.constant 0 : index
    %c0_32 = arith.constant 0 : index
    %c0_33 = arith.constant 0 : index
    %67 = vector.load %arg13[%c0_31, %c0_32, %c0_33] : memref<1x1x256xf32, #tpu.memory_space<vmem>>, vector<1x1x256xf32>
    %68 = vector.shape_cast %67 : vector<1x1x256xf32> to vector<1x256xf32>
    %cst_34 = arith.constant dense<0.000000e+00> : vector<8xf32>
    %69 = vector.multi_reduction <add>, %64, %cst_34 [1] : vector<8x256xf32> to vector<8xf32>
    %70 = vector.shape_cast %69 : vector<8xf32> to vector<8x1xf32>
    %cst_35 = arith.constant 2.560000e+02 : f32
    %71 = vector.broadcast %cst_35 : f32 to vector<8x1xf32>
    %72 = arith.divf %70, %71 : vector<8x1xf32>
    %73 = vector.broadcast %72 : vector<8x1xf32> to vector<8x256xf32>
    %74 = arith.subf %64, %73 : vector<8x256xf32>
    %75 = arith.mulf %74, %74 : vector<8x256xf32>
    %cst_36 = arith.constant dense<0.000000e+00> : vector<8xf32>
    %76 = vector.multi_reduction <add>, %75, %cst_36 [1] : vector<8x256xf32> to vector<8xf32>
    %77 = vector.shape_cast %76 : vector<8xf32> to vector<8x1xf32>
    %cst_37 = arith.constant 2.560000e+02 : f32
    %78 = vector.broadcast %cst_37 : f32 to vector<8x1xf32>
    %79 = arith.divf %77, %78 : vector<8x1xf32>
    %80 = vector.broadcast %72 : vector<8x1xf32> to vector<8x256xf32>
    %81 = arith.subf %64, %80 : vector<8x256xf32>
    %cst_38 = arith.constant 9.99999996E-13 : f32
    %82 = vector.broadcast %cst_38 : f32 to vector<8x1xf32>
    %83 = arith.addf %79, %82 : vector<8x1xf32>
    %84 = math.rsqrt %83 : vector<8x1xf32>
    %85 = vector.broadcast %84 : vector<8x1xf32> to vector<8x256xf32>
    %86 = arith.mulf %81, %85 : vector<8x256xf32>
    %87 = vector.broadcast %66 : vector<1x256xf32> to vector<8x256xf32>
    %88 = arith.mulf %86, %87 : vector<8x256xf32>
    %89 = vector.broadcast %68 : vector<1x256xf32> to vector<8x256xf32>
    %90 = arith.addf %88, %89 : vector<8x256xf32>
    %91 = arith.truncf %90 : vector<8x256xf32> to vector<8x256xbf16>
    %c0_39 = arith.constant 0 : index
    %c0_40 = arith.constant 0 : index
    %c0_41 = arith.constant 0 : index
    %92 = vector.load %arg14[%c0_39, %c0_40, %c0_41] : memref<1x256x512xbf16, #tpu.memory_space<vmem>>, vector<1x256x512xbf16>
    %93 = vector.shape_cast %92 : vector<1x256x512xbf16> to vector<256x512xbf16>
    %cst_42 = arith.constant dense<0.000000e+00> : vector<8x512xf32>
    %94 = tpu.matmul %91, %93, %cst_42 {dimension_numbers = #tpu.dot_dimension_numbers<[1], [0], [0], [1], [0, 0, 1, 1], [], []>} : vector<8x256xbf16>, vector<256x512xbf16>, vector<8x512xf32> -> vector<8x512xf32>
    %c0_43 = arith.constant 0 : index
    %c0_44 = arith.constant 0 : index
    %c0_45 = arith.constant 0 : index
    %95 = vector.load %arg15[%c0_43, %c0_44, %c0_45] : memref<1x1x512xf32, #tpu.memory_space<vmem>>, vector<1x1x512xf32>
    %96 = vector.shape_cast %95 : vector<1x1x512xf32> to vector<1x512xf32>
    %97 = vector.broadcast %96 : vector<1x512xf32> to vector<8x512xf32>
    %98 = arith.addf %94, %97 : vector<8x512xf32>
    %99 = arith.mulf %98, %98 : vector<8x512xf32>
    %100 = arith.mulf %98, %99 : vector<8x512xf32>
    %cst_46 = arith.constant 4.471500e-02 : f32
    %101 = vector.broadcast %cst_46 : f32 to vector<8x512xf32>
    %102 = arith.mulf %101, %100 : vector<8x512xf32>
    %103 = arith.addf %98, %102 : vector<8x512xf32>
    %cst_47 = arith.constant 0.797884583 : f32
    %104 = vector.broadcast %cst_47 : f32 to vector<8x512xf32>
    %105 = arith.mulf %104, %103 : vector<8x512xf32>
    %106 = math.tanh %105 : vector<8x512xf32>
    %cst_48 = arith.constant 1.000000e+00 : f32
    %107 = vector.broadcast %cst_48 : f32 to vector<8x512xf32>
    %108 = arith.addf %107, %106 : vector<8x512xf32>
    %cst_49 = arith.constant 5.000000e-01 : f32
    %109 = vector.broadcast %cst_49 : f32 to vector<8x512xf32>
    %110 = arith.mulf %109, %108 : vector<8x512xf32>
    %111 = arith.mulf %98, %110 : vector<8x512xf32>
    %112 = arith.truncf %111 : vector<8x512xf32> to vector<8x512xbf16>
    %c0_50 = arith.constant 0 : index
    %c0_51 = arith.constant 0 : index
    %c0_52 = arith.constant 0 : index
    %113 = vector.load %arg16[%c0_50, %c0_51, %c0_52] : memref<1x512x256xbf16, #tpu.memory_space<vmem>>, vector<1x512x256xbf16>
    %114 = vector.shape_cast %113 : vector<1x512x256xbf16> to vector<512x256xbf16>
    %cst_53 = arith.constant dense<0.000000e+00> : vector<8x256xf32>
    %115 = tpu.matmul %112, %114, %cst_53 {dimension_numbers = #tpu.dot_dimension_numbers<[1], [0], [0], [1], [0, 0, 1, 1], [], []>} : vector<8x512xbf16>, vector<512x256xbf16>, vector<8x256xf32> -> vector<8x256xf32>
    %c0_54 = arith.constant 0 : index
    %c0_55 = arith.constant 0 : index
    %c0_56 = arith.constant 0 : index
    %116 = vector.load %arg17[%c0_54, %c0_55, %c0_56] : memref<1x1x256xf32, #tpu.memory_space<vmem>>, vector<1x1x256xf32>
    %117 = vector.shape_cast %116 : vector<1x1x256xf32> to vector<1x256xf32>
    %118 = vector.broadcast %117 : vector<1x256xf32> to vector<8x256xf32>
    %119 = arith.addf %115, %118 : vector<8x256xf32>
    %120 = arith.addf %90, %119 : vector<8x256xf32>
    %c0_57 = arith.constant 0 : index
    %c0_58 = arith.constant 0 : index
    %c0_59 = arith.constant 0 : index
    %121 = vector.load %arg18[%c0_57, %c0_58, %c0_59] : memref<1x1x256xf32, #tpu.memory_space<vmem>>, vector<1x1x256xf32>
    %122 = vector.shape_cast %121 : vector<1x1x256xf32> to vector<1x256xf32>
    %c0_60 = arith.constant 0 : index
    %c0_61 = arith.constant 0 : index
    %c0_62 = arith.constant 0 : index
    %123 = vector.load %arg19[%c0_60, %c0_61, %c0_62] : memref<1x1x256xf32, #tpu.memory_space<vmem>>, vector<1x1x256xf32>
    %124 = vector.shape_cast %123 : vector<1x1x256xf32> to vector<1x256xf32>
    %cst_63 = arith.constant dense<0.000000e+00> : vector<8xf32>
    %125 = vector.multi_reduction <add>, %120, %cst_63 [1] : vector<8x256xf32> to vector<8xf32>
    %126 = vector.shape_cast %125 : vector<8xf32> to vector<8x1xf32>
    %cst_64 = arith.constant 2.560000e+02 : f32
    %127 = vector.broadcast %cst_64 : f32 to vector<8x1xf32>
    %128 = arith.divf %126, %127 : vector<8x1xf32>
    %129 = vector.broadcast %128 : vector<8x1xf32> to vector<8x256xf32>
    %130 = arith.subf %120, %129 : vector<8x256xf32>
    %131 = arith.mulf %130, %130 : vector<8x256xf32>
    %cst_65 = arith.constant dense<0.000000e+00> : vector<8xf32>
    %132 = vector.multi_reduction <add>, %131, %cst_65 [1] : vector<8x256xf32> to vector<8xf32>
    %133 = vector.shape_cast %132 : vector<8xf32> to vector<8x1xf32>
    %cst_66 = arith.constant 2.560000e+02 : f32
    %134 = vector.broadcast %cst_66 : f32 to vector<8x1xf32>
    %135 = arith.divf %133, %134 : vector<8x1xf32>
    %136 = vector.broadcast %128 : vector<8x1xf32> to vector<8x256xf32>
    %137 = arith.subf %120, %136 : vector<8x256xf32>
    %cst_67 = arith.constant 9.99999996E-13 : f32
    %138 = vector.broadcast %cst_67 : f32 to vector<8x1xf32>
    %139 = arith.addf %135, %138 : vector<8x1xf32>
    %140 = math.rsqrt %139 : vector<8x1xf32>
    %141 = vector.broadcast %140 : vector<8x1xf32> to vector<8x256xf32>
    %142 = arith.mulf %137, %141 : vector<8x256xf32>
    %143 = vector.broadcast %122 : vector<1x256xf32> to vector<8x256xf32>
    %144 = arith.mulf %142, %143 : vector<8x256xf32>
    %145 = vector.broadcast %124 : vector<1x256xf32> to vector<8x256xf32>
    %146 = arith.addf %144, %145 : vector<8x256xf32>
    %c0_68 = arith.constant 0 : index
    %c0_69 = arith.constant 0 : index
    %147 = vector.load %arg21[%c0_68, %c0_69] : memref<8x256xf32, #tpu.memory_space<vmem>>, vector<8x256xf32>
    tpu.vector_store %arg21[%c0_68, %c0_69], %146 {strides = array<i32>} : memref<8x256xf32, #tpu.memory_space<vmem>>, vector<8x256xf32>,
    %c1_i32 = arith.constant 1 : i32
    %148 = arith.cmpi eq, %arg1, %c1_i32 : i32
    %149 = arith.extui %148 : i1 to i32
    %c0_i32_70 = arith.constant 0 : i32
    %150 = arith.cmpi ne, %149, %c0_i32_70 : i32
    scf.if %150 {
      %c0_71 = arith.constant 0 : index
      %c0_72 = arith.constant 0 : index
      %c0_73 = arith.constant 0 : index
      %151 = vector.load %arg20[%c0_71, %c0_72, %c0_73] : memref<1x8x256xf32, #tpu.memory_space<vmem>>, vector<1x8x256xf32>
      %152 = vector.shape_cast %151 : vector<1x8x256xf32> to vector<8x256xf32>
      %153 = vector.shape_cast %146 : vector<8x256xf32> to vector<1x8x256xf32>
      tpu.vector_store %arg20[%c0_71, %c0_72, %c0_73], %153 {strides = array<i32>} : memref<1x8x256xf32, #tpu.memory_space<vmem>>, vector<1x8x256xf32>,
    } else {
    }
    return
  }
  func.func @transform_0(%arg0: i32, %arg1: i32) -> (i32, i32, i32) {
    %c0_i32 = arith.constant 0 : i32
    %c0_i32_0 = arith.constant 0 : i32
    %c0_i32_1 = arith.constant 0 : i32
    return %arg0, %c0_i32, %c0_i32_0 : i32, i32, i32
  }
  func.func @transform_1(%arg0: i32, %arg1: i32) -> (i32, i32) {
    %c0_i32 = arith.constant 0 : i32
    %c0_i32_0 = arith.constant 0 : i32
    %c0_i32_1 = arith.constant 0 : i32
    return %c0_i32, %c0_i32_0 : i32, i32
  }
  func.func @transform_2(%arg0: i32, %arg1: i32) -> (i32, i32, i32) {
    %c0_i32 = arith.constant 0 : i32
    %c0_i32_0 = arith.constant 0 : i32
    %c0_i32_1 = arith.constant 0 : i32
    return %arg0, %c0_i32, %c0_i32_0 : i32, i32, i32
  }
  func.func @transform_3(%arg0: i32, %arg1: i32) -> (i32, i32) {
    %c0_i32 = arith.constant 0 : i32
    %c0_i32_0 = arith.constant 0 : i32
    %c0_i32_1 = arith.constant 0 : i32
    return %c0_i32, %c0_i32_0 : i32, i32
  }
  func.func @transform_4(%arg0: i32, %arg1: i32) -> (i32, i32) {
    %c0_i32 = arith.constant 0 : i32
    %c0_i32_0 = arith.constant 0 : i32
    %c0_i32_1 = arith.constant 0 : i32
    return %c0_i32, %c0_i32_0 : i32, i32
  }
  func.func @transform_5(%arg0: i32, %arg1: i32) -> (i32, i32, i32) {
    %c0_i32 = arith.constant 0 : i32
    %c0_i32_0 = arith.constant 0 : i32
    %c0_i32_1 = arith.constant 0 : i32
    return %arg0, %c0_i32, %c0_i32_0 : i32, i32, i32
  }
  func.func @transform_6(%arg0: i32, %arg1: i32) -> (i32, i32, i32) {
    %c0_i32 = arith.constant 0 : i32
    %c0_i32_0 = arith.constant 0 : i32
    %c0_i32_1 = arith.constant 0 : i32
    return %arg1, %c0_i32, %c0_i32_0 : i32, i32, i32
  }
  func.func @transform_7(%arg0: i32, %arg1: i32) -> (i32, i32, i32) {
    %c0_i32 = arith.constant 0 : i32
    %c0_i32_0 = arith.constant 0 : i32
    %c0_i32_1 = arith.constant 0 : i32
    return %arg1, %c0_i32, %c0_i32_0 : i32, i32, i32
  }
  func.func @transform_8(%arg0: i32, %arg1: i32) -> (i32, i32, i32) {
    %c0_i32 = arith.constant 0 : i32
    %c0_i32_0 = arith.constant 0 : i32
    %c0_i32_1 = arith.constant 0 : i32
    return %arg1, %c0_i32, %c0_i32_0 : i32, i32, i32
  }
  func.func @transform_9(%arg0: i32, %arg1: i32) -> (i32, i32, i32) {
    %c0_i32 = arith.constant 0 : i32
    %c0_i32_0 = arith.constant 0 : i32
    %c0_i32_1 = arith.constant 0 : i32
    return %arg1, %c0_i32, %c0_i32_0 : i32, i32, i32
  }
  func.func @transform_10(%arg0: i32, %arg1: i32) -> (i32, i32, i32) {
    %c0_i32 = arith.constant 0 : i32
    %c0_i32_0 = arith.constant 0 : i32
    %c0_i32_1 = arith.constant 0 : i32
    return %arg1, %c0_i32, %c0_i32_0 : i32, i32, i32
  }
  func.func @transform_11(%arg0: i32, %arg1: i32) -> (i32, i32, i32) {
    %c0_i32 = arith.constant 0 : i32
    %c0_i32_0 = arith.constant 0 : i32
    %c0_i32_1 = arith.constant 0 : i32
    return %arg1, %c0_i32, %c0_i32_0 : i32, i32, i32
  }
  func.func @transform_12(%arg0: i32, %arg1: i32) -> (i32, i32, i32) {
    %c0_i32 = arith.constant 0 : i32
    %c0_i32_0 = arith.constant 0 : i32
    %c0_i32_1 = arith.constant 0 : i32
    return %arg1, %c0_i32, %c0_i32_0 : i32, i32, i32
  }
  func.func @transform_13(%arg0: i32, %arg1: i32) -> (i32, i32, i32) {
    %c0_i32 = arith.constant 0 : i32
    %c0_i32_0 = arith.constant 0 : i32
    %c0_i32_1 = arith.constant 0 : i32
    return %arg1, %c0_i32, %c0_i32_0 : i32, i32, i32
  }
  func.func @transform_14(%arg0: i32, %arg1: i32) -> (i32, i32, i32) {
    %c0_i32 = arith.constant 0 : i32
    %c0_i32_0 = arith.constant 0 : i32
    %c0_i32_1 = arith.constant 0 : i32
    return %arg1, %c0_i32, %c0_i32_0 : i32, i32, i32
  }
  func.func @transform_15(%arg0: i32, %arg1: i32) -> (i32, i32, i32) {
    %c0_i32 = arith.constant 0 : i32
    %c0_i32_0 = arith.constant 0 : i32
    %c0_i32_1 = arith.constant 0 : i32
    return %arg1, %c0_i32, %c0_i32_0 : i32, i32, i32
  }
  func.func @transform_16(%arg0: i32, %arg1: i32) -> (i32, i32, i32) {
    %c0_i32 = arith.constant 0 : i32
    %c0_i32_0 = arith.constant 0 : i32
    %c0_i32_1 = arith.constant 0 : i32
    return %arg1, %c0_i32, %c0_i32_0 : i32, i32, i32
  }
  func.func @transform_17(%arg0: i32, %arg1: i32) -> (i32, i32, i32) {
    %c0_i32 = arith.constant 0 : i32
    %c0_i32_0 = arith.constant 0 : i32
    %c0_i32_1 = arith.constant 0 : i32
    return %arg1, %c0_i32, %c0_i32_0 : i32, i32, i32
  }
  func.func @transform_18(%arg0: i32, %arg1: i32) -> (i32, i32, i32) {
    %c0_i32 = arith.constant 0 : i32
    %c0_i32_0 = arith.constant 0 : i32
    %c0_i32_1 = arith.constant 0 : i32
    return %arg0, %c0_i32, %c0_i32_0 : i32, i32, i32
  }
}

</mosaic_0001>

<llo_original>
// kernel: tpu_custom_call.1
$region0: #{tpu_custom_call.1}
  #allocation0 [shape = 'u32[]', space=smem, size = 0x4, offset = 0x4, fixed_abs, tag = 'smem constant byte address 0x4 - core index']
  #allocation1 [shape = 'u32[144,128]{1,0:T(1,128)}', space=vmem, size = 0x12000, scoped, tag = 'internal scratch']
  #allocation2 [shape = 'f32[8,256]{1,0:T(8,128)}', space=vmem, size = 0x2000, scoped, tag = 'scratch operand']
  %s0 = inlined_call_operand.hbm [shape: f32[2,8,256], index: 0, kind: input, shape index: {}]
  %s1 = inlined_call_operand.hbm [shape: f32[8,256], index: 1, kind: input, shape index: {}]
  %s2 = inlined_call_operand.hbm [shape: f32[2,8,256], index: 2, kind: input, shape index: {}]
  %s3 = inlined_call_operand.hbm [shape: f32[1,256], index: 3, kind: input, shape index: {}]
  %s4 = inlined_call_operand.hbm [shape: f32[1,256], index: 4, kind: input, shape index: {}]
  %s5 = inlined_call_operand.hbm [shape: f32[2,1,8], index: 5, kind: input, shape index: {}]
  %s6 = inlined_call_operand.hbm [shape: bf16[2,256,768], index: 6, kind: input, shape index: {}]
  %s7 = inlined_call_operand.vmem [shape: f32[2,1,768], index: 7, kind: input, shape index: {}]
  %s8 = inlined_call_operand.hbm [shape: bf16[2,256,256], index: 8, kind: input, shape index: {}]
  %s9 = inlined_call_operand.hbm [shape: f32[2,1,256], index: 9, kind: input, shape index: {}]
  %s10 = inlined_call_operand.hbm [shape: f32[2,1,256], index: 10, kind: input, shape index: {}]
  %s11 = inlined_call_operand.hbm [shape: f32[2,1,256], index: 11, kind: input, shape index: {}]
  %s12 = inlined_call_operand.hbm [shape: bf16[2,256,512], index: 12, kind: input, shape index: {}]
  %s13 = inlined_call_operand.vmem [shape: f32[2,1,512], index: 13, kind: input, shape index: {}]
  %s14 = inlined_call_operand.hbm [shape: bf16[2,512,256], index: 14, kind: input, shape index: {}]
  %s15 = inlined_call_operand.vmem [shape: f32[2,1,256], index: 15, kind: input, shape index: {}]
  %s16 = inlined_call_operand.vmem [shape: f32[2,1,256], index: 16, kind: input, shape index: {}]
  %s17 = inlined_call_operand.hbm [shape: f32[2,1,256], index: 17, kind: input, shape index: {}]
  %s18 = inlined_call_operand.hbm [shape: f32[2,8,256], index: 18, kind: output, shape index: {}]
  %s19 = sld [smem:[#allocation0]]
  $region169: #{tpu_custom_call.1} parent=0
    _
  %s21 = ssub.s32 1, %s19
  %s22 = scalar_select 0, %s21, %s19
  $region1: #{tpu_custom_call.1} parent=0
    #allocation3 [shape = 'u8[16384]{0}', space=vmem, size = 0x4000, scoped, tag = 'input window, operand 0']
    #allocation4 [shape = 's32[2]{0}', space=sflag, size = 0x8, scoped, tag = 'scoped memory for tpu_custom_call.1']
    #allocation5 [shape = 's32[2]{0}', space=sflag, size = 0x8, scoped, tag = 'scoped memory for tpu_custom_call.1']
    #allocation6 [shape = 'u8[8192]{0}', space=vmem, size = 0x2000, scoped, tag = 'input window, operand 1, single buffered']
    #allocation7 [shape = 's32[1]{0}', space=sflag, size = 0x4, scoped, tag = 'scoped memory for tpu_custom_call.1']
    #allocation8 [shape = 'u8[16384]{0}', space=vmem, size = 0x4000, scoped, tag = 'input window, operand 2']
    #allocation9 [shape = 'u8[1024]{0}', space=vmem, size = 0x400, scoped, tag = 'input window, operand 3, single buffered']
    #allocation10 [shape = 'u8[1024]{0}', space=vmem, size = 0x400, scoped, tag = 'input window, operand 4, single buffered']
    #allocation11 [shape = 's32[1]{0}', space=sflag, size = 0x4, scoped, tag = 'scoped memory for tpu_custom_call.1']
    #allocation12 [shape = 'u8[1024]{0}', space=vmem, size = 0x400, scoped, tag = 'input window, operand 5']
    #allocation13 [shape = 'u8[786432]{0}', space=vmem, size = 0xc0000, scoped, tag = 'input window, operand 6']
    #allocation14 [shape = 'u8[262144]{0}', space=vmem, size = 0x40000, scoped, tag = 'input window, operand 8']
    #allocation15 [shape = 'u8[2048]{0}', space=vmem, size = 0x800, scoped, tag = 'input window, operand 9']
    #allocation16 [shape = 'u8[2048]{0}', space=vmem, size = 0x800, scoped, tag = 'input window, operand 10']
    #allocation17 [shape = 'u8[2048]{0}', space=vmem, size = 0x800, scoped, tag = 'input window, operand 11']
    #allocation18 [shape = 'u8[524288]{0}', space=vmem, size = 0x80000, scoped, tag = 'input window, operand 12']
    #allocation19 [shape = 'u8[524288]{0}', space=vmem, size = 0x80000, scoped, tag = 'input window, operand 14']
    #allocation20 [shape = 'u8[2048]{0}', space=vmem, size = 0x800, scoped, tag = 'input window, operand 17']
    #allocation21 [shape = 'u8[16384]{0}', space=vmem, size = 0x4000, scoped, tag = 'output window, operand 0']
    %23 = vsyncpa [#allocation4], 0
    %s24 = scalar_lea.sflag [#allocation4], 1
    %25 = vsyncpa %s24, 0
    %26 = vsyncpa [#allocation7], 0
    %27 = vsyncpa [#allocation11], 0
    %28 = vsyncpa [#allocation5], 0
    %s29 = scalar_lea.sflag [#allocation5], 1
    %30 = vsyncpa %s29, 0
    loop: start=0, step=1, limit=6
    $region2: #{tpu_custom_call.1} parent=1 // loop_pre_header
      _
    $region3: #{tpu_custom_call.1} parent=1 // loop_header
      %s32 = sphi 0, %s36
      %p33 = scmp.ge.s32.totalorder %s32, 6
      %s39 = sphi 0, %s51
      %s40 = sphi 0, %s47
      %s41 = sphi 0, %s39
      %s42 = sphi 0, %s40
      %s43 = sphi 0, %s41
      %s44 = sphi 0, %s42
      %s54 = sphi 0, %s56
      %s57 = sphi 0, %s54
      %s58 = sphi 0, %s57
      %s74 = sphi 0, %s58
      %s78 = sphi 0, %s78
      %s80 = sphi 0, %s78
      %s81 = sphi 0, %s80
      %s95 = sphi 0, %s81
      %s101 = sphi 0, %s103
      %s104 = sphi 0, %s101
      %s105 = sphi 0, %s104
      %s121 = sphi 0, %s105
      %s125 = sphi 0, %s125
      %s127 = sphi 0, %s125
      %s128 = sphi 0, %s127
      %s142 = sphi 0, %s128
      %s146 = sphi 0, %s146
      %s148 = sphi 0, %s146
      %s149 = sphi 0, %s148
      %s163 = sphi 0, %s149
      %s169 = sphi 0, %s171
      %s172 = sphi 0, %s169
      %s173 = sphi 0, %s172
      %s189 = sphi 0, %s173
      %s195 = sphi 0, %s197
      %s198 = sphi 0, %s195
      %s199 = sphi 0, %s198
      %s215 = sphi 0, %s199
      %s221 = sphi 0, %s223
      %s224 = sphi 0, %s221
      %s225 = sphi 0, %s224
      %s241 = sphi 0, %s225
      %s247 = sphi 0, %s249
      %s250 = sphi 0, %s247
      %s251 = sphi 0, %s250
      %s267 = sphi 0, %s251
      %s273 = sphi 0, %s275
      %s276 = sphi 0, %s273
      %s277 = sphi 0, %s276
      %s293 = sphi 0, %s277
      %s299 = sphi 0, %s301
      %s302 = sphi 0, %s299
      %s303 = sphi 0, %s302
      %s319 = sphi 0, %s303
      %s325 = sphi 0, %s327
      %s328 = sphi 0, %s325
      %s329 = sphi 0, %s328
      %s345 = sphi 0, %s329
      %s351 = sphi 0, %s353
      %s354 = sphi 0, %s351
      %s355 = sphi 0, %s354
      %s371 = sphi 0, %s355
      %s377 = sphi 0, %s379
      %s380 = sphi 0, %s377
      %s381 = sphi 0, %s380
      %s397 = sphi 0, %s381
      %s403 = sphi 0, %s405
      %s406 = sphi 0, %s403
      %s407 = sphi 0, %s406
      %s423 = sphi 0, %s407
      %s429 = sphi 0, %s431
      %s432 = sphi 0, %s429
      %s433 = sphi 0, %s432
      %s449 = sphi 0, %s433
      %s455 = sphi 0, %s457
      %s458 = sphi 0, %s455
      %s459 = sphi 0, %s458
      %s475 = sphi 0, %s459
      %s481 = sphi 0, %s483
      %s484 = sphi 0, %s481
      %s485 = sphi 0, %s484
      %s501 = sphi 0, %s485
      %s507 = sphi 0, %s509
      %s510 = sphi 0, %s507
      %s511 = sphi 0, %s510
      %s527 = sphi 0, %s511
    $region4: #{tpu_custom_call.1} parent=1 // loop_header_branch
      %35 = sbr.rel (%p33) target = $region8
    $region5: #{tpu_custom_call.1} parent=1 // loop_body
      %s37 = ssub.s32 %s32, 1
      %s38 = ssub.s32 %s32, 2
      %s45 = sadd.s32 1, %s40
      %p46 = scmp.ge.s32.totalorder %s45, 2
      %s47 = scalar_select %p46, 0, %s45
      %s48 = sadd.s32 1, %s39
      %s49 = scalar_select %p46, %s48, %s39
      %p50 = scmp.ge.s32.totalorder %s49, 2
      %s51 = scalar_select %p50, 0, %s49
      %s52 = ssub.s32 %s39, %s51
      %p53 = scmp.eq.s32.totalorder %s52, 0
      %s55 = sadd.s32 %s54, 1
      %s56 = scalar_select %p53, %s54, %s55
      %p59 = pneg %p53
      %p60 = scmp.eq.s32.totalorder %s32, 3
      %p61 = por %p59, %p60
      %p62 = scmp.ne.s32.totalorder %s54, %s57
      %p63 = scmp.eq.s32.totalorder %s32, 0
      %p64 = por %p62, %p63
      %p65 = scmp.ne.s32.totalorder %s54, %s57
      %p66 = scmp.eq.s32.totalorder %s37, 3
      %p67 = por %p65, %p66
      %p68 = scmp.ne.s32.totalorder %s57, %s58
      %p69 = scmp.eq.s32.totalorder %s37, 0
      %p70 = por %p68, %p69
      %p71 = scmp.ne.s32.totalorder %s57, %s58
      %p72 = scmp.eq.s32.totalorder %s38, 3
      %p73 = por %p71, %p72
      %p75 = scmp.ne.s32.totalorder %s58, %s74
      %p76 = scmp.eq.s32.totalorder %s38, 0
      %p77 = por %p75, %p76
      %s79 = sadd.s32 %s78, 1
      %p82 = scmp.eq.s32.totalorder %s32, 3
      %p83 = scmp.ne.s32.totalorder %s78, %s80
      %p84 = scmp.eq.s32.totalorder %s32, 0
      %p85 = por %p83, %p84
      %p86 = scmp.ne.s32.totalorder %s78, %s80
      %p87 = scmp.eq.s32.totalorder %s37, 3
      %p88 = por %p86, %p87
      %p89 = scmp.ne.s32.totalorder %s80, %s81
      %p90 = scmp.eq.s32.totalorder %s37, 0
      %p91 = por %p89, %p90
      %p92 = scmp.ne.s32.totalorder %s80, %s81
      %p93 = scmp.eq.s32.totalorder %s38, 3
      %p94 = por %p92, %p93
      %p96 = scmp.ne.s32.totalorder %s81, %s95
      %p97 = scmp.eq.s32.totalorder %s38, 0
      %p98 = por %p96, %p97
      %s99 = ssub.s32 %s39, %s51
      %p100 = scmp.eq.s32.totalorder %s99, 0
      %s102 = sadd.s32 %s101, 1
      %s103 = scalar_select %p100, %s101, %s102
      %p106 = pneg %p100
      %p107 = scmp.eq.s32.totalorder %s32, 3
      %p108 = por %p106, %p107
      %p109 = scmp.ne.s32.totalorder %s101, %s104
      %p110 = scmp.eq.s32.totalorder %s32, 0
      %p111 = por %p109, %p110
      %p112 = scmp.ne.s32.totalorder %s101, %s104
      %p113 = scmp.eq.s32.totalorder %s37, 3
      %p114 = por %p112, %p113
      %p115 = scmp.ne.s32.totalorder %s104, %s105
      %p116 = scmp.eq.s32.totalorder %s37, 0
      %p117 = por %p115, %p116
      %p118 = scmp.ne.s32.totalorder %s104, %s105
      %p119 = scmp.eq.s32.totalorder %s38, 3
      %p120 = por %p118, %p119
      %p122 = scmp.ne.s32.totalorder %s105, %s121
      %p123 = scmp.eq.s32.totalorder %s38, 0
      %p124 = por %p122, %p123
      %s126 = sadd.s32 %s125, 1
      %p129 = scmp.eq.s32.totalorder %s32, 3
      %p130 = scmp.ne.s32.totalorder %s125, %s127
      %p131 = scmp.eq.s32.totalorder %s32, 0
      %p132 = por %p130, %p131
      %p133 = scmp.ne.s32.totalorder %s125, %s127
      %p134 = scmp.eq.s32.totalorder %s37, 3
      %p135 = por %p133, %p134
      %p136 = scmp.ne.s32.totalorder %s127, %s128
      %p137 = scmp.eq.s32.totalorder %s37, 0
      %p138 = por %p136, %p137
      %p139 = scmp.ne.s32.totalorder %s127, %s128
      %p140 = scmp.eq.s32.totalorder %s38, 3
      %p141 = por %p139, %p140
      %p143 = scmp.ne.s32.totalorder %s128, %s142
      %p144 = scmp.eq.s32.totalorder %s38, 0
      %p145 = por %p143, %p144
      %s147 = sadd.s32 %s146, 1
      %p150 = scmp.eq.s32.totalorder %s32, 3
      %p151 = scmp.ne.s32.totalorder %s146, %s148
      %p152 = scmp.eq.s32.totalorder %s32, 0
      %p153 = por %p151, %p152
      %p154 = scmp.ne.s32.totalorder %s146, %s148
      %p155 = scmp.eq.s32.totalorder %s37, 3
      %p156 = por %p154, %p155
      %p157 = scmp.ne.s32.totalorder %s148, %s149
      %p158 = scmp.eq.s32.totalorder %s37, 0
      %p159 = por %p157, %p158
      %p160 = scmp.ne.s32.totalorder %s148, %s149
      %p161 = scmp.eq.s32.totalorder %s38, 3
      %p162 = por %p160, %p161
      %p164 = scmp.ne.s32.totalorder %s149, %s163
      %p165 = scmp.eq.s32.totalorder %s38, 0
      %p166 = por %p164, %p165
      %s167 = ssub.s32 %s39, %s51
      %p168 = scmp.eq.s32.totalorder %s167, 0
      %s170 = sadd.s32 %s169, 1
      %s171 = scalar_select %p168, %s169, %s170
      %p174 = pneg %p168
      %p175 = scmp.eq.s32.totalorder %s32, 3
      %p176 = por %p174, %p175
      %p177 = scmp.ne.s32.totalorder %s169, %s172
      %p178 = scmp.eq.s32.totalorder %s32, 0
      %p179 = por %p177, %p178
      %p180 = scmp.ne.s32.totalorder %s169, %s172
      %p181 = scmp.eq.s32.totalorder %s37, 3
      %p182 = por %p180, %p181
      %p183 = scmp.ne.s32.totalorder %s172, %s173
      %p184 = scmp.eq.s32.totalorder %s37, 0
      %p185 = por %p183, %p184
      %p186 = scmp.ne.s32.totalorder %s172, %s173
      %p187 = scmp.eq.s32.totalorder %s38, 3
      %p188 = por %p186, %p187
      %p190 = scmp.ne.s32.totalorder %s173, %s189
      %p191 = scmp.eq.s32.totalorder %s38, 0
      %p192 = por %p190, %p191
      %s193 = ssub.s32 %s40, %s47
      %p194 = scmp.eq.s32.totalorder %s193, 0
      %s196 = sadd.s32 %s195, 1
      %s197 = scalar_select %p194, %s195, %s196
      %p200 = pneg %p194
      %p201 = scmp.eq.s32.totalorder %s32, 3
      %p202 = por %p200, %p201
      %p203 = scmp.ne.s32.totalorder %s195, %s198
      %p204 = scmp.eq.s32.totalorder %s32, 0
      %p205 = por %p203, %p204
      %p206 = scmp.ne.s32.totalorder %s195, %s198
      %p207 = scmp.eq.s32.totalorder %s37, 3
      %p208 = por %p206, %p207
      %p209 = scmp.ne.s32.totalorder %s198, %s199
      %p210 = scmp.eq.s32.totalorder %s37, 0
      %p211 = por %p209, %p210
      %p212 = scmp.ne.s32.totalorder %s198, %s199
      %p213 = scmp.eq.s32.totalorder %s38, 3
      %p214 = por %p212, %p213
      %p216 = scmp.ne.s32.totalorder %s199, %s215
      %p217 = scmp.eq.s32.totalorder %s38, 0
      %p218 = por %p216, %p217
      %s219 = ssub.s32 %s40, %s47
      %p220 = scmp.eq.s32.totalorder %s219, 0
      %s222 = sadd.s32 %s221, 1
      %s223 = scalar_select %p220, %s221, %s222
      %p226 = pneg %p220
      %p227 = scmp.eq.s32.totalorder %s32, 3
      %p228 = por %p226, %p227
      %p229 = scmp.ne.s32.totalorder %s221, %s224
      %p230 = scmp.eq.s32.totalorder %s32, 0
      %p231 = por %p229, %p230
      %p232 = scmp.ne.s32.totalorder %s221, %s224
      %p233 = scmp.eq.s32.totalorder %s37, 3
      %p234 = por %p232, %p233
      %p235 = scmp.ne.s32.totalorder %s224, %s225
      %p236 = scmp.eq.s32.totalorder %s37, 0
      %p237 = por %p235, %p236
      %p238 = scmp.ne.s32.totalorder %s224, %s225
      %p239 = scmp.eq.s32.totalorder %s38, 3
      %p240 = por %p238, %p239
      %p242 = scmp.ne.s32.totalorder %s225, %s241
      %p243 = scmp.eq.s32.totalorder %s38, 0
      %p244 = por %p242, %p243
      %s245 = ssub.s32 %s40, %s47
      %p246 = scmp.eq.s32.totalorder %s245, 0
      %s248 = sadd.s32 %s247, 1
      %s249 = scalar_select %p246, %s247, %s248
      %p252 = pneg %p246
      %p253 = scmp.eq.s32.totalorder %s32, 3
      %p254 = por %p252, %p253
      %p255 = scmp.ne.s32.totalorder %s247, %s250
      %p256 = scmp.eq.s32.totalorder %s32, 0
      %p257 = por %p255, %p256
      %p258 = scmp.ne.s32.totalorder %s247, %s250
      %p259 = scmp.eq.s32.totalorder %s37, 3
      %p260 = por %p258, %p259
      %p261 = scmp.ne.s32.totalorder %s250, %s251
      %p262 = scmp.eq.s32.totalorder %s37, 0
      %p263 = por %p261, %p262
      %p264 = scmp.ne.s32.totalorder %s250, %s251
      %p265 = scmp.eq.s32.totalorder %s38, 3
      %p266 = por %p264, %p265
      %p268 = scmp.ne.s32.totalorder %s251, %s267
      %p269 = scmp.eq.s32.totalorder %s38, 0
      %p270 = por %p268, %p269
      %s271 = ssub.s32 %s40, %s47
      %p272 = scmp.eq.s32.totalorder %s271, 0
      %s274 = sadd.s32 %s273, 1
      %s275 = scalar_select %p272, %s273, %s274
      %p278 = pneg %p272
      %p279 = scmp.eq.s32.totalorder %s32, 3
      %p280 = por %p278, %p279
      %p281 = scmp.ne.s32.totalorder %s273, %s276
      %p282 = scmp.eq.s32.totalorder %s32, 0
      %p283 = por %p281, %p282
      %p284 = scmp.ne.s32.totalorder %s273, %s276
      %p285 = scmp.eq.s32.totalorder %s37, 3
      %p286 = por %p284, %p285
      %p287 = scmp.ne.s32.totalorder %s276, %s277
      %p288 = scmp.eq.s32.totalorder %s37, 0
      %p289 = por %p287, %p288
      %p290 = scmp.ne.s32.totalorder %s276, %s277
      %p291 = scmp.eq.s32.totalorder %s38, 3
      %p292 = por %p290, %p291
      %p294 = scmp.ne.s32.totalorder %s277, %s293
      %p295 = scmp.eq.s32.totalorder %s38, 0
      %p296 = por %p294, %p295
      %s297 = ssub.s32 %s40, %s47
      %p298 = scmp.eq.s32.totalorder %s297, 0
      %s300 = sadd.s32 %s299, 1
      %s301 = scalar_select %p298, %s299, %s300
      %p304 = pneg %p298
      %p305 = scmp.eq.s32.totalorder %s32, 3
      %p306 = por %p304, %p305
      %p307 = scmp.ne.s32.totalorder %s299, %s302
      %p308 = scmp.eq.s32.totalorder %s32, 0
      %p309 = por %p307, %p308
      %p310 = scmp.ne.s32.totalorder %s299, %s302
      %p311 = scmp.eq.s32.totalorder %s37, 3
      %p312 = por %p310, %p311
      %p313 = scmp.ne.s32.totalorder %s302, %s303
      %p314 = scmp.eq.s32.totalorder %s37, 0
      %p315 = por %p313, %p314
      %p316 = scmp.ne.s32.totalorder %s302, %s303
      %p317 = scmp.eq.s32.totalorder %s38, 3
      %p318 = por %p316, %p317
      %p320 = scmp.ne.s32.totalorder %s303, %s319
      %p321 = scmp.eq.s32.totalorder %s38, 0
      %p322 = por %p320, %p321
      %s323 = ssub.s32 %s40, %s47
      %p324 = scmp.eq.s32.totalorder %s323, 0
      %s326 = sadd.s32 %s325, 1
      %s327 = scalar_select %p324, %s325, %s326
      %p330 = pneg %p324
      %p331 = scmp.eq.s32.totalorder %s32, 3
      %p332 = por %p330, %p331
      %p333 = scmp.ne.s32.totalorder %s325, %s328
      %p334 = scmp.eq.s32.totalorder %s32, 0
      %p335 = por %p333, %p334
      %p336 = scmp.ne.s32.totalorder %s325, %s328
      %p337 = scmp.eq.s32.totalorder %s37, 3
      %p338 = por %p336, %p337
      %p339 = scmp.ne.s32.totalorder %s328, %s329
      %p340 = scmp.eq.s32.totalorder %s37, 0
      %p341 = por %p339, %p340
      %p342 = scmp.ne.s32.totalorder %s328, %s329
      %p343 = scmp.eq.s32.totalorder %s38, 3
      %p344 = por %p342, %p343
      %p346 = scmp.ne.s32.totalorder %s329, %s345
      %p347 = scmp.eq.s32.totalorder %s38, 0
      %p348 = por %p346, %p347
      %s349 = ssub.s32 %s40, %s47
      %p350 = scmp.eq.s32.totalorder %s349, 0
      %s352 = sadd.s32 %s351, 1
      %s353 = scalar_select %p350, %s351, %s352
      %p356 = pneg %p350
      %p357 = scmp.eq.s32.totalorder %s32, 3
      %p358 = por %p356, %p357
      %p359 = scmp.ne.s32.totalorder %s351, %s354
      %p360 = scmp.eq.s32.totalorder %s32, 0
      %p361 = por %p359, %p360
      %p362 = scmp.ne.s32.totalorder %s351, %s354
      %p363 = scmp.eq.s32.totalorder %s37, 3
      %p364 = por %p362, %p363
      %p365 = scmp.ne.s32.totalorder %s354, %s355
      %p366 = scmp.eq.s32.totalorder %s37, 0
      %p367 = por %p365, %p366
      %p368 = scmp.ne.s32.totalorder %s354, %s355
      %p369 = scmp.eq.s32.totalorder %s38, 3
      %p370 = por %p368, %p369
      %p372 = scmp.ne.s32.totalorder %s355, %s371
      %p373 = scmp.eq.s32.totalorder %s38, 0
      %p374 = por %p372, %p373
      %s375 = ssub.s32 %s40, %s47
      %p376 = scmp.eq.s32.totalorder %s375, 0
      %s378 = sadd.s32 %s377, 1
      %s379 = scalar_select %p376, %s377, %s378
      %p382 = pneg %p376
      %p383 = scmp.eq.s32.totalorder %s32, 3
      %p384 = por %p382, %p383
      %p385 = scmp.ne.s32.totalorder %s377, %s380
      %p386 = scmp.eq.s32.totalorder %s32, 0
      %p387 = por %p385, %p386
      %p388 = scmp.ne.s32.totalorder %s377, %s380
      %p389 = scmp.eq.s32.totalorder %s37, 3
      %p390 = por %p388, %p389
      %p391 = scmp.ne.s32.totalorder %s380, %s381
      %p392 = scmp.eq.s32.totalorder %s37, 0
      %p393 = por %p391, %p392
      %p394 = scmp.ne.s32.totalorder %s380, %s381
      %p395 = scmp.eq.s32.totalorder %s38, 3
      %p396 = por %p394, %p395
      %p398 = scmp.ne.s32.totalorder %s381, %s397
      %p399 = scmp.eq.s32.totalorder %s38, 0
      %p400 = por %p398, %p399
      %s401 = ssub.s32 %s40, %s47
      %p402 = scmp.eq.s32.totalorder %s401, 0
      %s404 = sadd.s32 %s403, 1
      %s405 = scalar_select %p402, %s403, %s404
      %p408 = pneg %p402
      %p409 = scmp.eq.s32.totalorder %s32, 3
      %p410 = por %p408, %p409
      %p411 = scmp.ne.s32.totalorder %s403, %s406
      %p412 = scmp.eq.s32.totalorder %s32, 0
      %p413 = por %p411, %p412
      %p414 = scmp.ne.s32.totalorder %s403, %s406
      %p415 = scmp.eq.s32.totalorder %s37, 3
      %p416 = por %p414, %p415
      %p417 = scmp.ne.s32.totalorder %s406, %s407
      %p418 = scmp.eq.s32.totalorder %s37, 0
      %p419 = por %p417, %p418
      %p420 = scmp.ne.s32.totalorder %s406, %s407
      %p421 = scmp.eq.s32.totalorder %s38, 3
      %p422 = por %p420, %p421
      %p424 = scmp.ne.s32.totalorder %s407, %s423
      %p425 = scmp.eq.s32.totalorder %s38, 0
      %p426 = por %p424, %p425
      %s427 = ssub.s32 %s40, %s47
      %p428 = scmp.eq.s32.totalorder %s427, 0
      %s430 = sadd.s32 %s429, 1
      %s431 = scalar_select %p428, %s429, %s430
      %p434 = pneg %p428
      %p435 = scmp.eq.s32.totalorder %s32, 3
      %p436 = por %p434, %p435
      %p437 = scmp.ne.s32.totalorder %s429, %s432
      %p438 = scmp.eq.s32.totalorder %s32, 0
      %p439 = por %p437, %p438
      %p440 = scmp.ne.s32.totalorder %s429, %s432
      %p441 = scmp.eq.s32.totalorder %s37, 3
      %p442 = por %p440, %p441
      %p443 = scmp.ne.s32.totalorder %s432, %s433
      %p444 = scmp.eq.s32.totalorder %s37, 0
      %p445 = por %p443, %p444
      %p446 = scmp.ne.s32.totalorder %s432, %s433
      %p447 = scmp.eq.s32.totalorder %s38, 3
      %p448 = por %p446, %p447
      %p450 = scmp.ne.s32.totalorder %s433, %s449
      %p451 = scmp.eq.s32.totalorder %s38, 0
      %p452 = por %p450, %p451
      %s453 = ssub.s32 %s40, %s47
      %p454 = scmp.eq.s32.totalorder %s453, 0
      %s456 = sadd.s32 %s455, 1
      %s457 = scalar_select %p454, %s455, %s456
      %p460 = pneg %p454
      %p461 = scmp.eq.s32.totalorder %s32, 3
      %p462 = por %p460, %p461
      %p463 = scmp.ne.s32.totalorder %s455, %s458
      %p464 = scmp.eq.s32.totalorder %s32, 0
      %p465 = por %p463, %p464
      %p466 = scmp.ne.s32.totalorder %s455, %s458
      %p467 = scmp.eq.s32.totalorder %s37, 3
      %p468 = por %p466, %p467
      %p469 = scmp.ne.s32.totalorder %s458, %s459
      %p470 = scmp.eq.s32.totalorder %s37, 0
      %p471 = por %p469, %p470
      %p472 = scmp.ne.s32.totalorder %s458, %s459
      %p473 = scmp.eq.s32.totalorder %s38, 3
      %p474 = por %p472, %p473
      %p476 = scmp.ne.s32.totalorder %s459, %s475
      %p477 = scmp.eq.s32.totalorder %s38, 0
      %p478 = por %p476, %p477
      %s479 = ssub.s32 %s40, %s47
      %p480 = scmp.eq.s32.totalorder %s479, 0
      %s482 = sadd.s32 %s481, 1
      %s483 = scalar_select %p480, %s481, %s482
      %p486 = pneg %p480
      %p487 = scmp.eq.s32.totalorder %s32, 3
      %p488 = por %p486, %p487
      %p489 = scmp.ne.s32.totalorder %s481, %s484
      %p490 = scmp.eq.s32.totalorder %s32, 0
      %p491 = por %p489, %p490
      %p492 = scmp.ne.s32.totalorder %s481, %s484
      %p493 = scmp.eq.s32.totalorder %s37, 3
      %p494 = por %p492, %p493
      %p495 = scmp.ne.s32.totalorder %s484, %s485
      %p496 = scmp.eq.s32.totalorder %s37, 0
      %p497 = por %p495, %p496
      %p498 = scmp.ne.s32.totalorder %s484, %s485
      %p499 = scmp.eq.s32.totalorder %s38, 3
      %p500 = por %p498, %p499
      %p502 = scmp.ne.s32.totalorder %s485, %s501
      %p503 = scmp.eq.s32.totalorder %s38, 0
      %p504 = por %p502, %p503
      %s505 = ssub.s32 %s39, %s51
      %p506 = scmp.eq.s32.totalorder %s505, 0
      %s508 = sadd.s32 %s507, 1
      %s509 = scalar_select %p506, %s507, %s508
      %p512 = pneg %p506
      %p513 = scmp.eq.s32.totalorder %s32, 3
      %p514 = por %p512, %p513
      %p515 = scmp.ne.s32.totalorder %s507, %s510
      %p516 = scmp.eq.s32.totalorder %s32, 0
      %p517 = por %p515, %p516
      %p518 = scmp.ne.s32.totalorder %s507, %s510
      %p519 = scmp.eq.s32.totalorder %s37, 3
      %p520 = por %p518, %p519
      %p521 = scmp.ne.s32.totalorder %s510, %s511
      %p522 = scmp.eq.s32.totalorder %s37, 0
      %p523 = por %p521, %p522
      %p524 = scmp.ne.s32.totalorder %s510, %s511
      %p525 = scmp.eq.s32.totalorder %s38, 3
      %p526 = por %p524, %p525
      %p528 = scmp.ne.s32.totalorder %s511, %s527
      %p529 = scmp.eq.s32.totalorder %s38, 0
      %p530 = por %p528, %p529
      %p531 = scmp.le.s32.totalorder 1, %s32
      %p532 = scmp.lt.s32.totalorder %s32, 5
      %p533 = pnand %p531, %p532
      %p534 = pneg %p533
      // Predicated region
      $region9: #{tpu_custom_call.1} parent=5 // pred_check
        _
      $region10: #{tpu_custom_call.1} parent=5 // pred_check_branch
        %536 = sbr.rel (%p533) target = $region12
      $region11: #{tpu_custom_call.1} parent=5 // pred_region
        %s537 = ssub.s32 %s32, 1
        // Predicated region
        $region13: #{tpu_custom_call.1} parent=11 // pred_check
          %p538 = pneg %p91
        $region14: #{tpu_custom_call.1} parent=11 // pred_check_branch
          %540 = sbr.rel (%p538) target = $region16
        $region15: #{tpu_custom_call.1} parent=11 // pred_region
          %s542 = ssub.s32 256, 256
          %543 = vsyncadd [#allocation7], %s542
          %s545 = sshll.u32 [#allocation6], 4
          %s546 = int_to_ptr.vmem [resolvable:$true] %s545
          %548 = dma.hbm_to_vmem [thread:$0]  %s1, 256, %s546, [#allocation7]
        $region16: #{tpu_custom_call.1} parent=11 // pred_fallthru
          _
        // Predicated region
        $region17: #{tpu_custom_call.1} parent=11 // pred_check
          %p549 = pneg %p138
        $region18: #{tpu_custom_call.1} parent=11 // pred_check_branch
          %551 = sbr.rel (%p549) target = $region20
        $region19: #{tpu_custom_call.1} parent=11 // pred_region
          %s553 = ssub.s32 32, 32
          %554 = vsyncadd [#allocation7], %s553
          %s556 = sshll.u32 [#allocation9], 4
          %s557 = int_to_ptr.vmem [resolvable:$true] %s556
          %559 = dma.hbm_to_vmem [thread:$0]  %s3, 32, %s557, [#allocation7]
        $region20: #{tpu_custom_call.1} parent=11 // pred_fallthru
          _
        // Predicated region
        $region21: #{tpu_custom_call.1} parent=11 // pred_check
          %p560 = pneg %p159
        $region22: #{tpu_custom_call.1} parent=11 // pred_check_branch
          %562 = sbr.rel (%p560) target = $region24
        $region23: #{tpu_custom_call.1} parent=11 // pred_region
          %s564 = ssub.s32 32, 32
          %565 = vsyncadd [#allocation11], %s564
          %s567 = sshll.u32 [#allocation10], 4
          %s568 = int_to_ptr.vmem [resolvable:$true] %s567
          %570 = dma.hbm_to_vmem [thread:$0]  %s4, 32, %s568, [#allocation11]
        $region24: #{tpu_custom_call.1} parent=11 // pred_fallthru
          _
      $region12: #{tpu_custom_call.1} parent=5 // pred_fallthru
        _
      %p571 = scmp.lt.s32.totalorder %s32, 4
      // Predicated region
      $region25: #{tpu_custom_call.1} parent=5 // pred_check
        %p572 = pneg %p571
      $region26: #{tpu_custom_call.1} parent=5 // pred_check_branch
        %574 = sbr.rel (%p572) target = $region28
      $region27: #{tpu_custom_call.1} parent=5 // pred_region
        // Predicated region
        $region29: #{tpu_custom_call.1} parent=27 // pred_check
          %p575 = pneg %p64
        $region30: #{tpu_custom_call.1} parent=27 // pred_check_branch
          %577 = sbr.rel (%p575) target = $region32
        $region31: #{tpu_custom_call.1} parent=27 // pred_region
          %s578 = sand.u32 %s32, 1
          %s579 = scalar_lea.sflag [#allocation4], %s578
          %s580 = sand.u32 %s54, 1
          %s581 = smul.addr %s580, 16
          %s582 = scalar_lea.vmem [#allocation3], %s581
          %s584 = ssub.s32 256, 256
          %585 = vsyncadd %s579, %s584
          %s586 = smul.addr %s39, 2
          %s587 = smul.addr %s586, 128
          %s588 = scalar_lea.hbm %s0, %s587
          %s590 = sshll.u32 %s582, 4
          %s591 = int_to_ptr.vmem [resolvable:$true] %s590
          %593 = dma.hbm_to_vmem [thread:$0]  %s588, 256, %s591, %s579
        $region32: #{tpu_custom_call.1} parent=27 // pred_fallthru
          _
        // Predicated region
        $region33: #{tpu_custom_call.1} parent=27 // pred_check
          %p594 = pneg %p111
        $region34: #{tpu_custom_call.1} parent=27 // pred_check_branch
          %596 = sbr.rel (%p594) target = $region36
        $region35: #{tpu_custom_call.1} parent=27 // pred_region
          %s597 = sand.u32 %s32, 1
          %s598 = scalar_lea.sflag [#allocation4], %s597
          %s599 = sand.u32 %s101, 1
          %s600 = smul.addr %s599, 16
          %s601 = scalar_lea.vmem [#allocation8], %s600
          %s603 = ssub.s32 256, 256
          %604 = vsyncadd %s598, %s603
          %s605 = smul.addr %s39, 2
          %s606 = smul.addr %s605, 128
          %s607 = scalar_lea.hbm %s2, %s606
          %s609 = sshll.u32 %s601, 4
          %s610 = int_to_ptr.vmem [resolvable:$true] %s609
          %612 = dma.hbm_to_vmem [thread:$0]  %s607, 256, %s610, %s598
        $region36: #{tpu_custom_call.1} parent=27 // pred_fallthru
          _
        // Predicated region
        $region37: #{tpu_custom_call.1} parent=27 // pred_check
          %p613 = pneg %p179
        $region38: #{tpu_custom_call.1} parent=27 // pred_check_branch
          %615 = sbr.rel (%p613) target = $region40
        $region39: #{tpu_custom_call.1} parent=27 // pred_region
          %s616 = sand.u32 %s32, 1
          %s617 = scalar_lea.sflag [#allocation4], %s616
          %s618 = sand.u32 %s169, 1
          %s619 = scalar_lea.vmem [#allocation12], %s618
          %s621 = ssub.s32 16, 16
          %622 = vsyncadd %s617, %s621
          %s623 = smul.addr %s39, 16
          %s624 = scalar_lea.hbm %s5, %s623
          %s626 = sshll.u32 %s619, 4
          %s627 = int_to_ptr.vmem [resolvable:$true] %s626
          %629 = dma.hbm_to_vmem [thread:$0]  %s624, 16, %s627, %s617
        $region40: #{tpu_custom_call.1} parent=27 // pred_fallthru
          _
        // Predicated region
        $region41: #{tpu_custom_call.1} parent=27 // pred_check
          %p630 = pneg %p205
        $region42: #{tpu_custom_call.1} parent=27 // pred_check_branch
          %632 = sbr.rel (%p630) target = $region44
        $region43: #{tpu_custom_call.1} parent=27 // pred_region
          %s633 = sand.u32 %s32, 1
          %s634 = scalar_lea.sflag [#allocation4], %s633
          %s635 = sand.u32 %s195, 1
          %s636 = smul.addr %s635, 768
          %s637 = scalar_lea.vmem [#allocation13], %s636
          %s639 = ssub.s32 12288, 12288
          %640 = vsyncadd %s634, %s639
          %s641 = smul.addr %s40, 192
          %s642 = smul.addr %s641, 64
          %s643 = scalar_lea.hbm %s6, %s642
          %s644 = sshll.u32 %s637, 4
          %s645 = int_to_ptr.vmem [resolvable:$true] %s644
          %650 = dma.hbm_to_vmem [thread:$0]  %s643, 12288, %s645, %s634, 384, 384, 24
        $region44: #{tpu_custom_call.1} parent=27 // pred_fallthru
          _
        // Predicated region
        $region45: #{tpu_custom_call.1} parent=27 // pred_check
          %p651 = pneg %p231
        $region46: #{tpu_custom_call.1} parent=27 // pred_check_branch
          %653 = sbr.rel (%p651) target = $region48
        $region47: #{tpu_custom_call.1} parent=27 // pred_region
          %p654 = scmp.lt.s32.totalorder %s40, 1
          %s655 = scalar_select %p654, %s40, 1
          %s656 = smul.addr %s655, 6
          %s657 = scalar_lea.vmem %s7, %s656
        $region48: #{tpu_custom_call.1} parent=27 // pred_fallthru
          _
        // Predicated region
        $region49: #{tpu_custom_call.1} parent=27 // pred_check
          %p658 = pneg %p257
        $region50: #{tpu_custom_call.1} parent=27 // pred_check_branch
          %660 = sbr.rel (%p658) target = $region52
        $region51: #{tpu_custom_call.1} parent=27 // pred_region
          %s661 = sand.u32 %s32, 1
          %s662 = scalar_lea.sflag [#allocation4], %s661
          %s663 = sand.u32 %s247, 1
          %s664 = smul.addr %s663, 256
          %s665 = scalar_lea.vmem [#allocation14], %s664
          %s667 = ssub.s32 4096, 4096
          %668 = vsyncadd %s662, %s667
          %s669 = smul.addr %s40, 64
          %s670 = smul.addr %s669, 64
          %s671 = scalar_lea.hbm %s8, %s670
          %s672 = sshll.u32 %s665, 4
          %s673 = int_to_ptr.vmem [resolvable:$true] %s672
          %678 = dma.hbm_to_vmem [thread:$0]  %s671, 4096, %s673, %s662, 128, 128, 8
        $region52: #{tpu_custom_call.1} parent=27 // pred_fallthru
          _
        // Predicated region
        $region53: #{tpu_custom_call.1} parent=27 // pred_check
          %p679 = pneg %p283
        $region54: #{tpu_custom_call.1} parent=27 // pred_check_branch
          %681 = sbr.rel (%p679) target = $region56
        $region55: #{tpu_custom_call.1} parent=27 // pred_region
          %s682 = sand.u32 %s32, 1
          %s683 = scalar_lea.sflag [#allocation4], %s682
          %s684 = sand.u32 %s273, 1
          %s685 = smul.addr %s684, 2
          %s686 = scalar_lea.vmem [#allocation15], %s685
          %s688 = ssub.s32 32, 32
          %689 = vsyncadd %s683, %s688
          %s690 = smul.addr %s40, 2
          %s691 = smul.addr %s690, 16
          %s692 = scalar_lea.hbm %s9, %s691
          %s694 = sshll.u32 %s686, 4
          %s695 = int_to_ptr.vmem [resolvable:$true] %s694
          %697 = dma.hbm_to_vmem [thread:$0]  %s692, 32, %s695, %s683
        $region56: #{tpu_custom_call.1} parent=27 // pred_fallthru
          _
        // Predicated region
        $region57: #{tpu_custom_call.1} parent=27 // pred_check
          %p698 = pneg %p309
        $region58: #{tpu_custom_call.1} parent=27 // pred_check_branch
          %700 = sbr.rel (%p698) target = $region60
        $region59: #{tpu_custom_call.1} parent=27 // pred_region
          %s701 = sand.u32 %s32, 1
          %s702 = scalar_lea.sflag [#allocation4], %s701
          %s703 = sand.u32 %s299, 1
          %s704 = smul.addr %s703, 2
          %s705 = scalar_lea.vmem [#allocation16], %s704
          %s707 = ssub.s32 32, 32
          %708 = vsyncadd %s702, %s707
          %s709 = smul.addr %s40, 2
          %s710 = smul.addr %s709, 16
          %s711 = scalar_lea.hbm %s10, %s710
          %s713 = sshll.u32 %s705, 4
          %s714 = int_to_ptr.vmem [resolvable:$true] %s713
          %716 = dma.hbm_to_vmem [thread:$0]  %s711, 32, %s714, %s702
        $region60: #{tpu_custom_call.1} parent=27 // pred_fallthru
          _
        // Predicated region
        $region61: #{tpu_custom_call.1} parent=27 // pred_check
          %p717 = pneg %p335
        $region62: #{tpu_custom_call.1} parent=27 // pred_check_branch
          %719 = sbr.rel (%p717) target = $region64
        $region63: #{tpu_custom_call.1} parent=27 // pred_region
          %s720 = sand.u32 %s32, 1
          %s721 = scalar_lea.sflag [#allocation4], %s720
          %s722 = sand.u32 %s325, 1
          %s723 = smul.addr %s722, 2
          %s724 = scalar_lea.vmem [#allocation17], %s723
          %s726 = ssub.s32 32, 32
          %727 = vsyncadd %s721, %s726
          %s728 = smul.addr %s40, 2
          %s729 = smul.addr %s728, 16
          %s730 = scalar_lea.hbm %s11, %s729
          %s732 = sshll.u32 %s724, 4
          %s733 = int_to_ptr.vmem [resolvable:$true] %s732
          %735 = dma.hbm_to_vmem [thread:$0]  %s730, 32, %s733, %s721
        $region64: #{tpu_custom_call.1} parent=27 // pred_fallthru
          _
        // Predicated region
        $region65: #{tpu_custom_call.1} parent=27 // pred_check
          %p736 = pneg %p361
        $region66: #{tpu_custom_call.1} parent=27 // pred_check_branch
          %738 = sbr.rel (%p736) target = $region68
        $region67: #{tpu_custom_call.1} parent=27 // pred_region
          %s739 = sand.u32 %s32, 1
          %s740 = scalar_lea.sflag [#allocation4], %s739
          %s741 = sand.u32 %s351, 1
          %s742 = smul.addr %s741, 512
          %s743 = scalar_lea.vmem [#allocation18], %s742
          %s745 = ssub.s32 8192, 8192
          %746 = vsyncadd %s740, %s745
          %s747 = smul.addr %s40, 128
          %s748 = smul.addr %s747, 64
          %s749 = scalar_lea.hbm %s12, %s748
          %s750 = sshll.u32 %s743, 4
          %s751 = int_to_ptr.vmem [resolvable:$true] %s750
          %756 = dma.hbm_to_vmem [thread:$0]  %s749, 8192, %s751, %s740, 256, 256, 16
        $region68: #{tpu_custom_call.1} parent=27 // pred_fallthru
          _
        // Predicated region
        $region69: #{tpu_custom_call.1} parent=27 // pred_check
          %p757 = pneg %p387
        $region70: #{tpu_custom_call.1} parent=27 // pred_check_branch
          %759 = sbr.rel (%p757) target = $region72
        $region71: #{tpu_custom_call.1} parent=27 // pred_region
          %p760 = scmp.lt.s32.totalorder %s40, 1
          %s761 = scalar_select %p760, %s40, 1
          %s762 = smul.addr %s761, 4
          %s763 = scalar_lea.vmem %s13, %s762
        $region72: #{tpu_custom_call.1} parent=27 // pred_fallthru
          _
        // Predicated region
        $region73: #{tpu_custom_call.1} parent=27 // pred_check
          %p764 = pneg %p413
        $region74: #{tpu_custom_call.1} parent=27 // pred_check_branch
          %766 = sbr.rel (%p764) target = $region76
        $region75: #{tpu_custom_call.1} parent=27 // pred_region
          %s767 = sand.u32 %s32, 1
          %s768 = scalar_lea.sflag [#allocation4], %s767
          %s769 = sand.u32 %s403, 1
          %s770 = smul.addr %s769, 512
          %s771 = scalar_lea.vmem [#allocation19], %s770
          %s773 = ssub.s32 8192, 8192
          %774 = vsyncadd %s768, %s773
          %s775 = smul.addr %s40, 128
          %s776 = smul.addr %s775, 64
          %s777 = scalar_lea.hbm %s14, %s776
          %s778 = sshll.u32 %s771, 4
          %s779 = int_to_ptr.vmem [resolvable:$true] %s778
          %784 = dma.hbm_to_vmem [thread:$0]  %s777, 8192, %s779, %s768, 128, 128, 8
        $region76: #{tpu_custom_call.1} parent=27 // pred_fallthru
          _
        // Predicated region
        $region77: #{tpu_custom_call.1} parent=27 // pred_check
          %p785 = pneg %p439
        $region78: #{tpu_custom_call.1} parent=27 // pred_check_branch
          %787 = sbr.rel (%p785) target = $region80
        $region79: #{tpu_custom_call.1} parent=27 // pred_region
          %p788 = scmp.lt.s32.totalorder %s40, 1
          %s789 = scalar_select %p788, %s40, 1
          %s790 = smul.addr %s789, 2
          %s791 = scalar_lea.vmem %s15, %s790
        $region80: #{tpu_custom_call.1} parent=27 // pred_fallthru
          _
        // Predicated region
        $region81: #{tpu_custom_call.1} parent=27 // pred_check
          %p792 = pneg %p465
        $region82: #{tpu_custom_call.1} parent=27 // pred_check_branch
          %794 = sbr.rel (%p792) target = $region84
        $region83: #{tpu_custom_call.1} parent=27 // pred_region
          %p795 = scmp.lt.s32.totalorder %s40, 1
          %s796 = scalar_select %p795, %s40, 1
          %s797 = smul.addr %s796, 2
          %s798 = scalar_lea.vmem %s16, %s797
        $region84: #{tpu_custom_call.1} parent=27 // pred_fallthru
          _
        // Predicated region
        $region85: #{tpu_custom_call.1} parent=27 // pred_check
          %p799 = pneg %p491
        $region86: #{tpu_custom_call.1} parent=27 // pred_check_branch
          %801 = sbr.rel (%p799) target = $region88
        $region87: #{tpu_custom_call.1} parent=27 // pred_region
          %s802 = sand.u32 %s32, 1
          %s803 = scalar_lea.sflag [#allocation4], %s802
          %s804 = sand.u32 %s481, 1
          %s805 = smul.addr %s804, 2
          %s806 = scalar_lea.vmem [#allocation20], %s805
          %s808 = ssub.s32 32, 32
          %809 = vsyncadd %s803, %s808
          %s810 = smul.addr %s40, 2
          %s811 = smul.addr %s810, 16
          %s812 = scalar_lea.hbm %s17, %s811
          %s814 = sshll.u32 %s806, 4
          %s815 = int_to_ptr.vmem [resolvable:$true] %s814
          %817 = dma.hbm_to_vmem [thread:$0]  %s812, 32, %s815, %s803
        $region88: #{tpu_custom_call.1} parent=27 // pred_fallthru
          _
      $region28: #{tpu_custom_call.1} parent=5 // pred_fallthru
        _
      %p818 = scmp.le.s32.totalorder 1, %s32
      %p819 = scmp.lt.s32.totalorder %s32, 5
      %p820 = pnand %p818, %p819
      %p821 = pneg %p820
      // Predicated region
      $region89: #{tpu_custom_call.1} parent=5 // pred_check
        _
      $region90: #{tpu_custom_call.1} parent=5 // pred_check_branch
        %823 = sbr.rel (%p820) target = $region92
      $region91: #{tpu_custom_call.1} parent=5 // pred_region
        %s824 = ssub.s32 %s32, 1
        %s825 = sand.u32 %s37, 1
        %s826 = scalar_lea.sflag [#allocation4], %s825
        %s827 = sand.u32 %s57, 1
        %s828 = smul.addr %s827, 16
        %s829 = scalar_lea.vmem [#allocation3], %s828
        // Predicated region
        $region93: #{tpu_custom_call.1} parent=91 // pred_check
          %p830 = pneg %p70
        $region94: #{tpu_custom_call.1} parent=91 // pred_check_branch
          %832 = sbr.rel (%p830) target = $region96
        $region95: #{tpu_custom_call.1} parent=91 // pred_region
          %833 = dma.done %s826, 256
        $region96: #{tpu_custom_call.1} parent=91 // pred_fallthru
          _
        // Predicated region
        $region97: #{tpu_custom_call.1} parent=91 // pred_check
          %p834 = pneg %p91
        $region98: #{tpu_custom_call.1} parent=91 // pred_check_branch
          %836 = sbr.rel (%p834) target = $region100
        $region99: #{tpu_custom_call.1} parent=91 // pred_region
          %837 = dma.done [#allocation7], 256
        $region100: #{tpu_custom_call.1} parent=91 // pred_fallthru
          _
        %s838 = sand.u32 %s37, 1
        %s839 = scalar_lea.sflag [#allocation4], %s838
        %s840 = sand.u32 %s104, 1
        %s841 = smul.addr %s840, 16
        %s842 = scalar_lea.vmem [#allocation8], %s841
        // Predicated region
        $region101: #{tpu_custom_call.1} parent=91 // pred_check
          %p843 = pneg %p117
        $region102: #{tpu_custom_call.1} parent=91 // pred_check_branch
          %845 = sbr.rel (%p843) target = $region104
        $region103: #{tpu_custom_call.1} parent=91 // pred_region
          %846 = dma.done %s839, 256
        $region104: #{tpu_custom_call.1} parent=91 // pred_fallthru
          _
        // Predicated region
        $region105: #{tpu_custom_call.1} parent=91 // pred_check
          %p847 = pneg %p138
        $region106: #{tpu_custom_call.1} parent=91 // pred_check_branch
          %849 = sbr.rel (%p847) target = $region108
        $region107: #{tpu_custom_call.1} parent=91 // pred_region
          %850 = dma.done [#allocation7], 32
        $region108: #{tpu_custom_call.1} parent=91 // pred_fallthru
          _
        // Predicated region
        $region109: #{tpu_custom_call.1} parent=91 // pred_check
          %p851 = pneg %p159
        $region110: #{tpu_custom_call.1} parent=91 // pred_check_branch
          %853 = sbr.rel (%p851) target = $region112
        $region111: #{tpu_custom_call.1} parent=91 // pred_region
          %854 = dma.done [#allocation11], 32
        $region112: #{tpu_custom_call.1} parent=91 // pred_fallthru
          _
        %s855 = sand.u32 %s37, 1
        %s856 = scalar_lea.sflag [#allocation4], %s855
        %s857 = sand.u32 %s172, 1
        %s858 = scalar_lea.vmem [#allocation12], %s857
        // Predicated region
        $region113: #{tpu_custom_call.1} parent=91 // pred_check
          %p859 = pneg %p185
        $region114: #{tpu_custom_call.1} parent=91 // pred_check_branch
          %861 = sbr.rel (%p859) target = $region116
        $region115: #{tpu_custom_call.1} parent=91 // pred_region
          %862 = dma.done %s856, 16
        $region116: #{tpu_custom_call.1} parent=91 // pred_fallthru
          _
        %s863 = sand.u32 %s37, 1
        %s864 = scalar_lea.sflag [#allocation4], %s863
        %s865 = sand.u32 %s198, 1
        %s866 = smul.addr %s865, 768
        %s867 = scalar_lea.vmem [#allocation13], %s866
        // Predicated region
        $region117: #{tpu_custom_call.1} parent=91 // pred_check
          %p868 = pneg %p211
        $region118: #{tpu_custom_call.1} parent=91 // pred_check_branch
          %870 = sbr.rel (%p868) target = $region120
        $region119: #{tpu_custom_call.1} parent=91 // pred_region
          %871 = dma.done %s864, 12288
        $region120: #{tpu_custom_call.1} parent=91 // pred_fallthru
          _
        %s872 = sand.u32 %s37, 1
        %s873 = scalar_lea.sflag [#allocation4], %s872
        %s874 = sand.u32 %s250, 1
        %s875 = smul.addr %s874, 256
        %s876 = scalar_lea.vmem [#allocation14], %s875
        // Predicated region
        $region121: #{tpu_custom_call.1} parent=91 // pred_check
          %p877 = pneg %p263
        $region122: #{tpu_custom_call.1} parent=91 // pred_check_branch
          %879 = sbr.rel (%p877) target = $region124
        $region123: #{tpu_custom_call.1} parent=91 // pred_region
          %880 = dma.done %s873, 4096
        $region124: #{tpu_custom_call.1} parent=91 // pred_fallthru
          _
        %s881 = sand.u32 %s37, 1
        %s882 = scalar_lea.sflag [#allocation4], %s881
        %s883 = sand.u32 %s276, 1
        %s884 = smul.addr %s883, 2
        %s885 = scalar_lea.vmem [#allocation15], %s884
        // Predicated region
        $region125: #{tpu_custom_call.1} parent=91 // pred_check
          %p886 = pneg %p289
        $region126: #{tpu_custom_call.1} parent=91 // pred_check_branch
          %888 = sbr.rel (%p886) target = $region128
        $region127: #{tpu_custom_call.1} parent=91 // pred_region
          %889 = dma.done %s882, 32
        $region128: #{tpu_custom_call.1} parent=91 // pred_fallthru
          _
        %s890 = sand.u32 %s37, 1
        %s891 = scalar_lea.sflag [#allocation4], %s890
        %s892 = sand.u32 %s302, 1
        %s893 = smul.addr %s892, 2
        %s894 = scalar_lea.vmem [#allocation16], %s893
        // Predicated region
        $region129: #{tpu_custom_call.1} parent=91 // pred_check
          %p895 = pneg %p315
        $region130: #{tpu_custom_call.1} parent=91 // pred_check_branch
          %897 = sbr.rel (%p895) target = $region132
        $region131: #{tpu_custom_call.1} parent=91 // pred_region
          %898 = dma.done %s891, 32
        $region132: #{tpu_custom_call.1} parent=91 // pred_fallthru
          _
        %s899 = sand.u32 %s37, 1
        %s900 = scalar_lea.sflag [#allocation4], %s899
        %s901 = sand.u32 %s328, 1
        %s902 = smul.addr %s901, 2
        %s903 = scalar_lea.vmem [#allocation17], %s902
        // Predicated region
        $region133: #{tpu_custom_call.1} parent=91 // pred_check
          %p904 = pneg %p341
        $region134: #{tpu_custom_call.1} parent=91 // pred_check_branch
          %906 = sbr.rel (%p904) target = $region136
        $region135: #{tpu_custom_call.1} parent=91 // pred_region
          %907 = dma.done %s900, 32
        $region136: #{tpu_custom_call.1} parent=91 // pred_fallthru
          _
        %s908 = sand.u32 %s37, 1
        %s909 = scalar_lea.sflag [#allocation4], %s908
        %s910 = sand.u32 %s354, 1
        %s911 = smul.addr %s910, 512
        %s912 = scalar_lea.vmem [#allocation18], %s911
        // Predicated region
        $region137: #{tpu_custom_call.1} parent=91 // pred_check
          %p913 = pneg %p367
        $region138: #{tpu_custom_call.1} parent=91 // pred_check_branch
          %915 = sbr.rel (%p913) target = $region140
        $region139: #{tpu_custom_call.1} parent=91 // pred_region
          %916 = dma.done %s909, 8192
        $region140: #{tpu_custom_call.1} parent=91 // pred_fallthru
          _
        %s917 = sand.u32 %s37, 1
        %s918 = scalar_lea.sflag [#allocation4], %s917
        %s919 = sand.u32 %s406, 1
        %s920 = smul.addr %s919, 512
        %s921 = scalar_lea.vmem [#allocation19], %s920
        // Predicated region
        $region141: #{tpu_custom_call.1} parent=91 // pred_check
          %p922 = pneg %p419
        $region142: #{tpu_custom_call.1} parent=91 // pred_check_branch
          %924 = sbr.rel (%p922) target = $region144
        $region143: #{tpu_custom_call.1} parent=91 // pred_region
          %925 = dma.done %s918, 8192
        $region144: #{tpu_custom_call.1} parent=91 // pred_fallthru
          _
        %s926 = sand.u32 %s37, 1
        %s927 = scalar_lea.sflag [#allocation4], %s926
        %s928 = sand.u32 %s484, 1
        %s929 = smul.addr %s928, 2
        %s930 = scalar_lea.vmem [#allocation20], %s929
        // Predicated region
        $region145: #{tpu_custom_call.1} parent=91 // pred_check
          %p931 = pneg %p497
        $region146: #{tpu_custom_call.1} parent=91 // pred_check_branch
          %933 = sbr.rel (%p931) target = $region148
        $region147: #{tpu_custom_call.1} parent=91 // pred_region
          %934 = dma.done %s927, 32
        $region148: #{tpu_custom_call.1} parent=91 // pred_fallthru
          _
        %s935 = sand.u32 %s37, 1
        %s936 = scalar_lea.sflag [#allocation4], %s935
        %s937 = sand.u32 %s57, 1
        %s938 = smul.addr %s937, 16
        %s939 = scalar_lea.vmem [#allocation3], %s938
        %p940 = pneg %p70
        %p941 = pneg %p67
        %p942 = pneg %p91
        %p943 = pneg %p88
        %s944 = sand.u32 %s37, 1
        %s945 = scalar_lea.sflag [#allocation4], %s944
        %s946 = sand.u32 %s104, 1
        %s947 = smul.addr %s946, 16
        %s948 = scalar_lea.vmem [#allocation8], %s947
        %p949 = pneg %p117
        %p950 = pneg %p114
        %p951 = pneg %p138
        %p952 = pneg %p135
        %p953 = pneg %p159
        %p954 = pneg %p156
        %s955 = sand.u32 %s37, 1
        %s956 = scalar_lea.sflag [#allocation4], %s955
        %s957 = sand.u32 %s172, 1
        %s958 = scalar_lea.vmem [#allocation12], %s957
        %p959 = pneg %p185
        %p960 = pneg %p182
        %s961 = sand.u32 %s37, 1
        %s962 = scalar_lea.sflag [#allocation4], %s961
        %s963 = sand.u32 %s198, 1
        %s964 = smul.addr %s963, 768
        %s965 = scalar_lea.vmem [#allocation13], %s964
        %p966 = pneg %p211
        %p967 = pneg %p208
        %p968 = scmp.lt.s32.totalorder %s42, 1
        %s969 = scalar_select %p968, %s42, 1
        %s970 = smul.addr %s969, 6
        %s971 = scalar_lea.vmem %s7, %s970
        %p972 = pneg %p237
        %p973 = pneg %p234
        %s974 = sand.u32 %s37, 1
        %s975 = scalar_lea.sflag [#allocation4], %s974
        %s976 = sand.u32 %s250, 1
        %s977 = smul.addr %s976, 256
        %s978 = scalar_lea.vmem [#allocation14], %s977
        %p979 = pneg %p263
        %p980 = pneg %p260
        %s981 = sand.u32 %s37, 1
        %s982 = scalar_lea.sflag [#allocation4], %s981
        %s983 = sand.u32 %s276, 1
        %s984 = smul.addr %s983, 2
        %s985 = scalar_lea.vmem [#allocation15], %s984
        %p986 = pneg %p289
        %p987 = pneg %p286
        %s988 = sand.u32 %s37, 1
        %s989 = scalar_lea.sflag [#allocation4], %s988
        %s990 = sand.u32 %s302, 1
        %s991 = smul.addr %s990, 2
        %s992 = scalar_lea.vmem [#allocation16], %s991
        %p993 = pneg %p315
        %p994 = pneg %p312
        %s995 = sand.u32 %s37, 1
        %s996 = scalar_lea.sflag [#allocation4], %s995
        %s997 = sand.u32 %s328, 1
        %s998 = smul.addr %s997, 2
        %s999 = scalar_lea.vmem [#allocation17], %s998
        %p1000 = pneg %p341
        %p1001 = pneg %p338
        %s1002 = sand.u32 %s37, 1
        %s1003 = scalar_lea.sflag [#allocation4], %s1002
        %s1004 = sand.u32 %s354, 1
        %s1005 = smul.addr %s1004, 512
        %s1006 = scalar_lea.vmem [#allocation18], %s1005
        %p1007 = pneg %p367
        %p1008 = pneg %p364
        %p1009 = scmp.lt.s32.totalorder %s42, 1
        %s1010 = scalar_select %p1009, %s42, 1
        %s1011 = smul.addr %s1010, 4
        %s1012 = scalar_lea.vmem %s13, %s1011
        %p1013 = pneg %p393
        %p1014 = pneg %p390
        %s1015 = sand.u32 %s37, 1
        %s1016 = scalar_lea.sflag [#allocation4], %s1015
        %s1017 = sand.u32 %s406, 1
        %s1018 = smul.addr %s1017, 512
        %s1019 = scalar_lea.vmem [#allocation19], %s1018
        %p1020 = pneg %p419
        %p1021 = pneg %p416
        %p1022 = scmp.lt.s32.totalorder %s42, 1
        %s1023 = scalar_select %p1022, %s42, 1
        %s1024 = smul.addr %s1023, 2
        %s1025 = scalar_lea.vmem %s15, %s1024
        %p1026 = pneg %p445
        %p1027 = pneg %p442
        %p1028 = scmp.lt.s32.totalorder %s42, 1
        %s1029 = scalar_select %p1028, %s42, 1
        %s1030 = smul.addr %s1029, 2
        %s1031 = scalar_lea.vmem %s16, %s1030
        %p1032 = pneg %p471
        %p1033 = pneg %p468
        %s1034 = sand.u32 %s37, 1
        %s1035 = scalar_lea.sflag [#allocation4], %s1034
        %s1036 = sand.u32 %s484, 1
        %s1037 = smul.addr %s1036, 2
        %s1038 = scalar_lea.vmem [#allocation20], %s1037
        %p1039 = pneg %p497
        %p1040 = pneg %p494
        %p1041 = pneg %p523
        %p1042 = pneg %p520
        %s1043 = sand.u32 %s510, 1
        %s1044 = scalar_lea.sflag [#allocation5], %s1043
        %s1045 = sand.u32 %s510, 1
        %s1046 = smul.addr %s1045, 16
        %s1047 = scalar_lea.vmem [#allocation21], %s1046
        %p1048 = scmp.lt.s32.totalorder %s42, 1
        %s1049 = scalar_select %p1048, %s42, 1
        %s1050 = smul.addr %s1049, 6
        %s1051 = scalar_lea.vmem %s7, %s1050
        %p1052 = scmp.lt.s32.totalorder %s42, 1
        %s1053 = scalar_select %p1052, %s42, 1
        %s1054 = smul.addr %s1053, 4
        %s1055 = scalar_lea.vmem %s13, %s1054
        %p1056 = scmp.lt.s32.totalorder %s42, 1
        %s1057 = scalar_select %p1056, %s42, 1
        %s1058 = smul.addr %s1057, 2
        %s1059 = scalar_lea.vmem %s15, %s1058
        %p1060 = scmp.lt.s32.totalorder %s42, 1
        %s1061 = scalar_select %p1060, %s42, 1
        %s1062 = smul.addr %s1061, 2
        %s1063 = scalar_lea.vmem %s16, %s1062
        %p1064 = scmp.eq.s32.totalorder %s42, 0
        // Predicated region
        $region149: #{tpu_custom_call.1} parent=91 // pred_check
          %p1065 = pneg %p1064
        $region150: #{tpu_custom_call.1} parent=91 // pred_check_branch
          %1067 = sbr.rel (%p1065) target = $region152
        $region151: #{tpu_custom_call.1} parent=91 // pred_region
          %v1068 = vld [vmem:[%s829] sm:$0xff]
          %v1069 = vld [vmem:[%s829 + $0x8] sm:$0xff]
          %v1070 = vld [vmem:[#allocation6] sm:$0xff]
          %v1071 = vld [vmem:[#allocation6 + $0x8] sm:$0xff]
          %v1072 = vadd.f32 %v1068, %v1070
          %v1073 = vadd.f32 %v1069, %v1071
          %v1074 = vld [vmem:[%s842] sm:$0xff]
          %v1075 = vld [vmem:[%s842 + $0x8] sm:$0xff]
          %v1076 = vadd.f32 %v1072, %v1074
          %v1077 = vadd.f32 %v1073, %v1075
          %v1078 = vld [vmem:[#allocation9] sm:$0x3]
          %v1079 = vld [vmem:[#allocation10] sm:$0x3]
          %v1080 = vadd.f32 %v1076, %v1077
          %1081 = vadd.xlane.f32.xlu0 %v1080
          %v1082 = vpop.xlane.xlu0 %1081
          %v1083 = vrcp.pop 256.0
          %v1084 = vmul.f32 %v1082, %v1083
          %v1085 = vsub.f32 %v1076, %v1084
          %v1086 = vsub.f32 %v1077, %v1084
          %v1087 = vmul.f32 %v1085, %v1085
          %v1088 = vmul.f32 %v1086, %v1086
          %v1089 = vadd.f32 %v1087, %v1088
          %1090 = vadd.xlane.f32.xlu0 %v1089
          %v1091 = vpop.xlane.xlu0 %1090
          %v1092 = vmul.f32 %v1091, %v1083
          %v1093 = vadd.f32 %v1092, 1e-12
          %v1094 = vrsqrt.pop %v1093
          %v1095 = vmul.f32 %v1085, %v1094
          %v1096 = vmul.f32 %v1086, %v1094
          %v1098 = vlaneseq
          %v1099 = vshrl.u32 %v1098, 7
          %v1100 = vsub.s32 0, %v1099
          %v1101 = vrot.slane %v1078, %v1100
          %v1102 = vlaneseq
          %v1103 = vshrl.u32 %v1102, 7
          %v1104 = vsub.s32 1, %v1103
          %v1105 = vrot.slane %v1078, %v1104
          %v1108 = vmul.f32 %v1095, %v1101
          %v1109 = vmul.f32 %v1096, %v1105
          %v1111 = vlaneseq
          %v1112 = vshrl.u32 %v1111, 7
          %v1113 = vsub.s32 0, %v1112
          %v1114 = vrot.slane %v1079, %v1113
          %v1115 = vlaneseq
          %v1116 = vshrl.u32 %v1115, 7
          %v1117 = vsub.s32 1, %v1116
          %v1118 = vrot.slane %v1079, %v1117
          %v1121 = vadd.f32 %v1108, %v1114
          %v1122 = vadd.f32 %v1109, %v1118
          %1123 = vst [vmem:[#allocation2] sm:$0xff] %v1121
          %1124 = vst [vmem:[#allocation2 + $0x8] sm:$0xff] %v1122
        $region152: #{tpu_custom_call.1} parent=91 // pred_fallthru
          _
        %v1125 = vld [vmem:[#allocation2] sm:$0xff]
        %v1126 = vld [vmem:[#allocation2 + $0x8] sm:$0xff]
        %v1127 = vld [vmem:[%s867] sm:$0xff]
        %v1128 = vld [vmem:[%s867 + $0x8] sm:$0xff]
        %v1129 = vld [vmem:[%s867 + $0x10] sm:$0xff]
        %v1130 = vld [vmem:[%s867 + $0x18] sm:$0xff]
        %v1131 = vld [vmem:[%s867 + $0x20] sm:$0xff]
        %v1132 = vld [vmem:[%s867 + $0x28] sm:$0xff]
        %v1133 = vld [vmem:[%s867 + $0x30] sm:$0xff]
        %v1134 = vld [vmem:[%s867 + $0x38] sm:$0xff]
        %v1135 = vld [vmem:[%s867 + $0x40] sm:$0xff]
        %v1136 = vld [vmem:[%s867 + $0x48] sm:$0xff]
        %v1137 = vld [vmem:[%s867 + $0x50] sm:$0xff]
        %v1138 = vld [vmem:[%s867 + $0x58] sm:$0xff]
        %v1139 = vld [vmem:[%s867 + $0x60] sm:$0xff]
        %v1140 = vld [vmem:[%s867 + $0x68] sm:$0xff]
        %v1141 = vld [vmem:[%s867 + $0x70] sm:$0xff]
        %v1142 = vld [vmem:[%s867 + $0x78] sm:$0xff]
        %v1143 = vld [vmem:[%s867 + $0x80] sm:$0xff]
        %v1144 = vld [vmem:[%s867 + $0x88] sm:$0xff]
        %v1145 = vld [vmem:[%s867 + $0x90] sm:$0xff]
        %v1146 = vld [vmem:[%s867 + $0x98] sm:$0xff]
        %v1147 = vld [vmem:[%s867 + $0xa0] sm:$0xff]
        %v1148 = vld [vmem:[%s867 + $0xa8] sm:$0xff]
        %v1149 = vld [vmem:[%s867 + $0xb0] sm:$0xff]
        %v1150 = vld [vmem:[%s867 + $0xb8] sm:$0xff]
        %v1151 = vld [vmem:[%s867 + $0xc0] sm:$0xff]
        %v1152 = vld [vmem:[%s867 + $0xc8] sm:$0xff]
        %v1153 = vld [vmem:[%s867 + $0xd0] sm:$0xff]
        %v1154 = vld [vmem:[%s867 + $0xd8] sm:$0xff]
        %v1155 = vld [vmem:[%s867 + $0xe0] sm:$0xff]
        %v1156 = vld [vmem:[%s867 + $0xe8] sm:$0xff]
        %v1157 = vld [vmem:[%s867 + $0xf0] sm:$0xff]
        %v1158 = vld [vmem:[%s867 + $0xf8] sm:$0xff]
        %v1159 = vld [vmem:[%s867 + $0x100] sm:$0xff]
        %v1160 = vld [vmem:[%s867 + $0x108] sm:$0xff]
        %v1161 = vld [vmem:[%s867 + $0x110] sm:$0xff]
        %v1162 = vld [vmem:[%s867 + $0x118] sm:$0xff]
        %v1163 = vld [vmem:[%s867 + $0x120] sm:$0xff]
        %v1164 = vld [vmem:[%s867 + $0x128] sm:$0xff]
        %v1165 = vld [vmem:[%s867 + $0x130] sm:$0xff]
        %v1166 = vld [vmem:[%s867 + $0x138] sm:$0xff]
        %v1167 = vld [vmem:[%s867 + $0x140] sm:$0xff]
        %v1168 = vld [vmem:[%s867 + $0x148] sm:$0xff]
        %v1169 = vld [vmem:[%s867 + $0x150] sm:$0xff]
        %v1170 = vld [vmem:[%s867 + $0x158] sm:$0xff]
        %v1171 = vld [vmem:[%s867 + $0x160] sm:$0xff]
        %v1172 = vld [vmem:[%s867 + $0x168] sm:$0xff]
        %v1173 = vld [vmem:[%s867 + $0x170] sm:$0xff]
        %v1174 = vld [vmem:[%s867 + $0x178] sm:$0xff]
        %v1175 = vld [vmem:[%s867 + $0x180] sm:$0xff]
        %v1176 = vld [vmem:[%s867 + $0x188] sm:$0xff]
        %v1177 = vld [vmem:[%s867 + $0x190] sm:$0xff]
        %v1178 = vld [vmem:[%s867 + $0x198] sm:$0xff]
        %v1179 = vld [vmem:[%s867 + $0x1a0] sm:$0xff]
        %v1180 = vld [vmem:[%s867 + $0x1a8] sm:$0xff]
        %v1181 = vld [vmem:[%s867 + $0x1b0] sm:$0xff]
        %v1182 = vld [vmem:[%s867 + $0x1b8] sm:$0xff]
        %v1183 = vld [vmem:[%s867 + $0x1c0] sm:$0xff]
        %v1184 = vld [vmem:[%s867 + $0x1c8] sm:$0xff]
        %v1185 = vld [vmem:[%s867 + $0x1d0] sm:$0xff]
        %v1186 = vld [vmem:[%s867 + $0x1d8] sm:$0xff]
        %v1187 = vld [vmem:[%s867 + $0x1e0] sm:$0xff]
        %v1188 = vld [vmem:[%s867 + $0x1e8] sm:$0xff]
        %v1189 = vld [vmem:[%s867 + $0x1f0] sm:$0xff]
        %v1190 = vld [vmem:[%s867 + $0x1f8] sm:$0xff]
        %v1191 = vld [vmem:[%s867 + $0x200] sm:$0xff]
        %v1192 = vld [vmem:[%s867 + $0x208] sm:$0xff]
        %v1193 = vld [vmem:[%s867 + $0x210] sm:$0xff]
        %v1194 = vld [vmem:[%s867 + $0x218] sm:$0xff]
        %v1195 = vld [vmem:[%s867 + $0x220] sm:$0xff]
        %v1196 = vld [vmem:[%s867 + $0x228] sm:$0xff]
        %v1197 = vld [vmem:[%s867 + $0x230] sm:$0xff]
        %v1198 = vld [vmem:[%s867 + $0x238] sm:$0xff]
        %v1199 = vld [vmem:[%s867 + $0x240] sm:$0xff]
        %v1200 = vld [vmem:[%s867 + $0x248] sm:$0xff]
        %v1201 = vld [vmem:[%s867 + $0x250] sm:$0xff]
        %v1202 = vld [vmem:[%s867 + $0x258] sm:$0xff]
        %v1203 = vld [vmem:[%s867 + $0x260] sm:$0xff]
        %v1204 = vld [vmem:[%s867 + $0x268] sm:$0xff]
        %v1205 = vld [vmem:[%s867 + $0x270] sm:$0xff]
        %v1206 = vld [vmem:[%s867 + $0x278] sm:$0xff]
        %v1207 = vld [vmem:[%s867 + $0x280] sm:$0xff]
        %v1208 = vld [vmem:[%s867 + $0x288] sm:$0xff]
        %v1209 = vld [vmem:[%s867 + $0x290] sm:$0xff]
        %v1210 = vld [vmem:[%s867 + $0x298] sm:$0xff]
        %v1211 = vld [vmem:[%s867 + $0x2a0] sm:$0xff]
        %v1212 = vld [vmem:[%s867 + $0x2a8] sm:$0xff]
        %v1213 = vld [vmem:[%s867 + $0x2b0] sm:$0xff]
        %v1214 = vld [vmem:[%s867 + $0x2b8] sm:$0xff]
        %v1215 = vld [vmem:[%s867 + $0x2c0] sm:$0xff]
        %v1216 = vld [vmem:[%s867 + $0x2c8] sm:$0xff]
        %v1217 = vld [vmem:[%s867 + $0x2d0] sm:$0xff]
        %v1218 = vld [vmem:[%s867 + $0x2d8] sm:$0xff]
        %v1219 = vld [vmem:[%s867 + $0x2e0] sm:$0xff]
        %v1220 = vld [vmem:[%s867 + $0x2e8] sm:$0xff]
        %v1221 = vld [vmem:[%s867 + $0x2f0] sm:$0xff]
        %v1222 = vld [vmem:[%s867 + $0x2f8] sm:$0xff]
        %v1223 = vld [vmem:[%s1051] sm:$0x3f]
        %v1224 = vpack.c.bf16 %v1125, %v1125
        %v1225 = vpack.c.bf16 %v1126, %v1126
        %v1227 = vlaneseq
        %v1228 = vshrl.u32 %v1227, 7
        %v1229 = vsub.s32 0, %v1228
        %v1230 = vrot.slane %v1223, %v1229
        %v1231 = vlaneseq
        %v1232 = vshrl.u32 %v1231, 7
        %v1233 = vsub.s32 1, %v1232
        %v1234 = vrot.slane %v1223, %v1233
        %v1235 = vlaneseq
        %v1236 = vshrl.u32 %v1235, 7
        %v1237 = vsub.s32 2, %v1236
        %v1238 = vrot.slane %v1223, %v1237
        %v1239 = vlaneseq
        %v1240 = vshrl.u32 %v1239, 7
        %v1241 = vsub.s32 3, %v1240
        %v1242 = vrot.slane %v1223, %v1241
        %v1243 = vlaneseq
        %v1244 = vshrl.u32 %v1243, 7
        %v1245 = vsub.s32 4, %v1244
        %v1246 = vrot.slane %v1223, %v1245
        %v1247 = vlaneseq
        %v1248 = vshrl.u32 %v1247, 7
        %v1249 = vsub.s32 5, %v1248
        %v1250 = vrot.slane %v1223, %v1249
        %v1353 = vunpack.c.l.b16 %v1127
        %v1354 = vunpack.c.h.b16 %v1127
        %v1355 = vunpack.c.l.b16 %v1128
        %v1356 = vunpack.c.h.b16 %v1128
        %v1357 = vunpack.c.l.b16 %v1129
        %v1358 = vunpack.c.h.b16 %v1129
        %v1359 = vunpack.c.l.b16 %v1130
        %v1360 = vunpack.c.h.b16 %v1130
        %v1361 = vunpack.c.l.b16 %v1131
        %v1362 = vunpack.c.h.b16 %v1131
        %v1363 = vunpack.c.l.b16 %v1132
        %v1364 = vunpack.c.h.b16 %v1132
        %v1365 = vunpack.c.l.b16 %v1133
        %v1366 = vunpack.c.h.b16 %v1133
        %v1367 = vunpack.c.l.b16 %v1134
        %v1368 = vunpack.c.h.b16 %v1134
        %v1369 = vunpack.c.l.b16 %v1135
        %v1370 = vunpack.c.h.b16 %v1135
        %v1371 = vunpack.c.l.b16 %v1136
        %v1372 = vunpack.c.h.b16 %v1136
        %v1373 = vunpack.c.l.b16 %v1137
        %v1374 = vunpack.c.h.b16 %v1137
        %v1375 = vunpack.c.l.b16 %v1138
        %v1376 = vunpack.c.h.b16 %v1138
        %v1377 = vunpack.c.l.b16 %v1139
        %v1378 = vunpack.c.h.b16 %v1139
        %v1379 = vunpack.c.l.b16 %v1140
        %v1380 = vunpack.c.h.b16 %v1140
        %v1381 = vunpack.c.l.b16 %v1141
        %v1382 = vunpack.c.h.b16 %v1141
        %v1383 = vunpack.c.l.b16 %v1142
        %v1384 = vunpack.c.h.b16 %v1142
        %v1385 = vunpack.c.l.b16 %v1143
        %v1386 = vunpack.c.h.b16 %v1143
        %v1387 = vunpack.c.l.b16 %v1144
        %v1388 = vunpack.c.h.b16 %v1144
        %v1389 = vunpack.c.l.b16 %v1145
        %v1390 = vunpack.c.h.b16 %v1145
        %v1391 = vunpack.c.l.b16 %v1146
        %v1392 = vunpack.c.h.b16 %v1146
        %v1393 = vunpack.c.l.b16 %v1147
        %v1394 = vunpack.c.h.b16 %v1147
        %v1395 = vunpack.c.l.b16 %v1148
        %v1396 = vunpack.c.h.b16 %v1148
        %v1397 = vunpack.c.l.b16 %v1149
        %v1398 = vunpack.c.h.b16 %v1149
        %v1399 = vunpack.c.l.b16 %v1150
        %v1400 = vunpack.c.h.b16 %v1150
        %v1401 = vunpack.c.l.b16 %v1151
        %v1402 = vunpack.c.h.b16 %v1151
        %v1403 = vunpack.c.l.b16 %v1152
        %v1404 = vunpack.c.h.b16 %v1152
        %v1405 = vunpack.c.l.b16 %v1153
        %v1406 = vunpack.c.h.b16 %v1153
        %v1407 = vunpack.c.l.b16 %v1154
        %v1408 = vunpack.c.h.b16 %v1154
        %v1409 = vunpack.c.l.b16 %v1155
        %v1410 = vunpack.c.h.b16 %v1155
        %v1411 = vunpack.c.l.b16 %v1156
        %v1412 = vunpack.c.h.b16 %v1156
        %v1413 = vunpack.c.l.b16 %v1157
        %v1414 = vunpack.c.h.b16 %v1157
        %v1415 = vunpack.c.l.b16 %v1158
        %v1416 = vunpack.c.h.b16 %v1158
        %v1417 = vunpack.c.l.b16 %v1159
        %v1418 = vunpack.c.h.b16 %v1159
        %v1419 = vunpack.c.l.b16 %v1160
        %v1420 = vunpack.c.h.b16 %v1160
        %v1421 = vunpack.c.l.b16 %v1161
        %v1422 = vunpack.c.h.b16 %v1161
        %v1423 = vunpack.c.l.b16 %v1162
        %v1424 = vunpack.c.h.b16 %v1162
        %v1425 = vunpack.c.l.b16 %v1163
        %v1426 = vunpack.c.h.b16 %v1163
        %v1427 = vunpack.c.l.b16 %v1164
        %v1428 = vunpack.c.h.b16 %v1164
        %v1429 = vunpack.c.l.b16 %v1165
        %v1430 = vunpack.c.h.b16 %v1165
        %v1431 = vunpack.c.l.b16 %v1166
        %v1432 = vunpack.c.h.b16 %v1166
        %v1433 = vunpack.c.l.b16 %v1167
        %v1434 = vunpack.c.h.b16 %v1167
        %v1435 = vunpack.c.l.b16 %v1168
        %v1436 = vunpack.c.h.b16 %v1168
        %v1437 = vunpack.c.l.b16 %v1169
        %v1438 = vunpack.c.h.b16 %v1169
        %v1439 = vunpack.c.l.b16 %v1170
        %v1440 = vunpack.c.h.b16 %v1170
        %v1441 = vunpack.c.l.b16 %v1171
        %v1442 = vunpack.c.h.b16 %v1171
        %v1443 = vunpack.c.l.b16 %v1172
        %v1444 = vunpack.c.h.b16 %v1172
        %v1445 = vunpack.c.l.b16 %v1173
        %v1446 = vunpack.c.h.b16 %v1173
        %v1447 = vunpack.c.l.b16 %v1174
        %v1448 = vunpack.c.h.b16 %v1174
        %v1449 = vunpack.c.l.b16 %v1175
        %v1450 = vunpack.c.h.b16 %v1175
        %v1451 = vunpack.c.l.b16 %v1176
        %v1452 = vunpack.c.h.b16 %v1176
        %v1453 = vunpack.c.l.b16 %v1177
        %v1454 = vunpack.c.h.b16 %v1177
        %v1455 = vunpack.c.l.b16 %v1178
        %v1456 = vunpack.c.h.b16 %v1178
        %v1457 = vunpack.c.l.b16 %v1179
        %v1458 = vunpack.c.h.b16 %v1179
        %v1459 = vunpack.c.l.b16 %v1180
        %v1460 = vunpack.c.h.b16 %v1180
        %v1461 = vunpack.c.l.b16 %v1181
        %v1462 = vunpack.c.h.b16 %v1181
        %v1463 = vunpack.c.l.b16 %v1182
        %v1464 = vunpack.c.h.b16 %v1182
        %v1465 = vunpack.c.l.b16 %v1183
        %v1466 = vunpack.c.h.b16 %v1183
        %v1467 = vunpack.c.l.b16 %v1184
        %v1468 = vunpack.c.h.b16 %v1184
        %v1469 = vunpack.c.l.b16 %v1185
        %v1470 = vunpack.c.h.b16 %v1185
        %v1471 = vunpack.c.l.b16 %v1186
        %v1472 = vunpack.c.h.b16 %v1186
        %v1473 = vunpack.c.l.b16 %v1187
        %v1474 = vunpack.c.h.b16 %v1187
        %v1475 = vunpack.c.l.b16 %v1188
        %v1476 = vunpack.c.h.b16 %v1188
        %v1477 = vunpack.c.l.b16 %v1189
        %v1478 = vunpack.c.h.b16 %v1189
        %v1479 = vunpack.c.l.b16 %v1190
        %v1480 = vunpack.c.h.b16 %v1190
        %v1481 = vunpack.c.l.b16 %v1191
        %v1482 = vunpack.c.h.b16 %v1191
        %v1483 = vunpack.c.l.b16 %v1192
        %v1484 = vunpack.c.h.b16 %v1192
        %v1485 = vunpack.c.l.b16 %v1193
        %v1486 = vunpack.c.h.b16 %v1193
        %v1487 = vunpack.c.l.b16 %v1194
        %v1488 = vunpack.c.h.b16 %v1194
        %v1489 = vunpack.c.l.b16 %v1195
        %v1490 = vunpack.c.h.b16 %v1195
        %v1491 = vunpack.c.l.b16 %v1196
        %v1492 = vunpack.c.h.b16 %v1196
        %v1493 = vunpack.c.l.b16 %v1197
        %v1494 = vunpack.c.h.b16 %v1197
        %v1495 = vunpack.c.l.b16 %v1198
        %v1496 = vunpack.c.h.b16 %v1198
        %v1497 = vunpack.c.l.b16 %v1199
        %v1498 = vunpack.c.h.b16 %v1199
        %v1499 = vunpack.c.l.b16 %v1200
        %v1500 = vunpack.c.h.b16 %v1200
        %v1501 = vunpack.c.l.b16 %v1201
        %v1502 = vunpack.c.h.b16 %v1201
        %v1503 = vunpack.c.l.b16 %v1202
        %v1504 = vunpack.c.h.b16 %v1202
        %v1505 = vunpack.c.l.b16 %v1203
        %v1506 = vunpack.c.h.b16 %v1203
        %v1507 = vunpack.c.l.b16 %v1204
        %v1508 = vunpack.c.h.b16 %v1204
        %v1509 = vunpack.c.l.b16 %v1205
        %v1510 = vunpack.c.h.b16 %v1205
        %v1511 = vunpack.c.l.b16 %v1206
        %v1512 = vunpack.c.h.b16 %v1206
        %v1513 = vunpack.c.l.b16 %v1207
        %v1514 = vunpack.c.h.b16 %v1207
        %v1515 = vunpack.c.l.b16 %v1208
        %v1516 = vunpack.c.h.b16 %v1208
        %v1517 = vunpack.c.l.b16 %v1209
        %v1518 = vunpack.c.h.b16 %v1209
        %v1519 = vunpack.c.l.b16 %v1210
        %v1520 = vunpack.c.h.b16 %v1210
        %v1521 = vunpack.c.l.b16 %v1211
        %v1522 = vunpack.c.h.b16 %v1211
        %v1523 = vunpack.c.l.b16 %v1212
        %v1524 = vunpack.c.h.b16 %v1212
        %v1525 = vunpack.c.l.b16 %v1213
        %v1526 = vunpack.c.h.b16 %v1213
        %v1527 = vunpack.c.l.b16 %v1214
        %v1528 = vunpack.c.h.b16 %v1214
        %v1529 = vunpack.c.l.b16 %v1215
        %v1530 = vunpack.c.h.b16 %v1215
        %v1531 = vunpack.c.l.b16 %v1216
        %v1532 = vunpack.c.h.b16 %v1216
        %v1533 = vunpack.c.l.b16 %v1217
        %v1534 = vunpack.c.h.b16 %v1217
        %v1535 = vunpack.c.l.b16 %v1218
        %v1536 = vunpack.c.h.b16 %v1218
        %v1537 = vunpack.c.l.b16 %v1219
        %v1538 = vunpack.c.h.b16 %v1219
        %v1539 = vunpack.c.l.b16 %v1220
        %v1540 = vunpack.c.h.b16 %v1220
        %v1541 = vunpack.c.l.b16 %v1221
        %v1542 = vunpack.c.h.b16 %v1221
        %v1543 = vunpack.c.l.b16 %v1222
        %v1544 = vunpack.c.h.b16 %v1222
        %v1545 = vpack.c.b16 %v1359, %v1353
        %v1546 = vpack.c.b16 %v1360, %v1354
        %v1547 = vpack.c.b16 %v1361, %v1355
        %v1548 = vpack.c.b16 %v1362, %v1356
        %v1549 = vpack.c.b16 %v1363, %v1357
        %v1550 = vpack.c.b16 %v1364, %v1358
        %v1551 = vpack.c.b16 %v1371, %v1365
        %v1552 = vpack.c.b16 %v1372, %v1366
        %v1553 = vpack.c.b16 %v1373, %v1367
        %v1554 = vpack.c.b16 %v1374, %v1368
        %v1555 = vpack.c.b16 %v1375, %v1369
        %v1556 = vpack.c.b16 %v1376, %v1370
        %v1557 = vpack.c.b16 %v1383, %v1377
        %v1558 = vpack.c.b16 %v1384, %v1378
        %v1559 = vpack.c.b16 %v1385, %v1379
        %v1560 = vpack.c.b16 %v1386, %v1380
        %v1561 = vpack.c.b16 %v1387, %v1381
        %v1562 = vpack.c.b16 %v1388, %v1382
        %v1563 = vpack.c.b16 %v1395, %v1389
        %v1564 = vpack.c.b16 %v1396, %v1390
        %v1565 = vpack.c.b16 %v1397, %v1391
        %v1566 = vpack.c.b16 %v1398, %v1392
        %v1567 = vpack.c.b16 %v1399, %v1393
        %v1568 = vpack.c.b16 %v1400, %v1394
        %v1569 = vpack.c.b16 %v1407, %v1401
        %v1570 = vpack.c.b16 %v1408, %v1402
        %v1571 = vpack.c.b16 %v1409, %v1403
        %v1572 = vpack.c.b16 %v1410, %v1404
        %v1573 = vpack.c.b16 %v1411, %v1405
        %v1574 = vpack.c.b16 %v1412, %v1406
        %v1575 = vpack.c.b16 %v1419, %v1413
        %v1576 = vpack.c.b16 %v1420, %v1414
        %v1577 = vpack.c.b16 %v1421, %v1415
        %v1578 = vpack.c.b16 %v1422, %v1416
        %v1579 = vpack.c.b16 %v1423, %v1417
        %v1580 = vpack.c.b16 %v1424, %v1418
        %v1581 = vpack.c.b16 %v1431, %v1425
        %v1582 = vpack.c.b16 %v1432, %v1426
        %v1583 = vpack.c.b16 %v1433, %v1427
        %v1584 = vpack.c.b16 %v1434, %v1428
        %v1585 = vpack.c.b16 %v1435, %v1429
        %v1586 = vpack.c.b16 %v1436, %v1430
        %v1587 = vpack.c.b16 %v1443, %v1437
        %v1588 = vpack.c.b16 %v1444, %v1438
        %v1589 = vpack.c.b16 %v1445, %v1439
        %v1590 = vpack.c.b16 %v1446, %v1440
        %v1591 = vpack.c.b16 %v1447, %v1441
        %v1592 = vpack.c.b16 %v1448, %v1442
        %v1593 = vpack.c.b16 %v1455, %v1449
        %v1594 = vpack.c.b16 %v1456, %v1450
        %v1595 = vpack.c.b16 %v1457, %v1451
        %v1596 = vpack.c.b16 %v1458, %v1452
        %v1597 = vpack.c.b16 %v1459, %v1453
        %v1598 = vpack.c.b16 %v1460, %v1454
        %v1599 = vpack.c.b16 %v1467, %v1461
        %v1600 = vpack.c.b16 %v1468, %v1462
        %v1601 = vpack.c.b16 %v1469, %v1463
        %v1602 = vpack.c.b16 %v1470, %v1464
        %v1603 = vpack.c.b16 %v1471, %v1465
        %v1604 = vpack.c.b16 %v1472, %v1466
        %v1605 = vpack.c.b16 %v1479, %v1473
        %v1606 = vpack.c.b16 %v1480, %v1474
        %v1607 = vpack.c.b16 %v1481, %v1475
        %v1608 = vpack.c.b16 %v1482, %v1476
        %v1609 = vpack.c.b16 %v1483, %v1477
        %v1610 = vpack.c.b16 %v1484, %v1478
        %v1611 = vpack.c.b16 %v1491, %v1485
        %v1612 = vpack.c.b16 %v1492, %v1486
        %v1613 = vpack.c.b16 %v1493, %v1487
        %v1614 = vpack.c.b16 %v1494, %v1488
        %v1615 = vpack.c.b16 %v1495, %v1489
        %v1616 = vpack.c.b16 %v1496, %v1490
        %v1617 = vpack.c.b16 %v1503, %v1497
        %v1618 = vpack.c.b16 %v1504, %v1498
        %v1619 = vpack.c.b16 %v1505, %v1499
        %v1620 = vpack.c.b16 %v1506, %v1500
        %v1621 = vpack.c.b16 %v1507, %v1501
        %v1622 = vpack.c.b16 %v1508, %v1502
        %v1623 = vpack.c.b16 %v1515, %v1509
        %v1624 = vpack.c.b16 %v1516, %v1510
        %v1625 = vpack.c.b16 %v1517, %v1511
        %v1626 = vpack.c.b16 %v1518, %v1512
        %v1627 = vpack.c.b16 %v1519, %v1513
        %v1628 = vpack.c.b16 %v1520, %v1514
        %v1629 = vpack.c.b16 %v1527, %v1521
        %v1630 = vpack.c.b16 %v1528, %v1522
        %v1631 = vpack.c.b16 %v1529, %v1523
        %v1632 = vpack.c.b16 %v1530, %v1524
        %v1633 = vpack.c.b16 %v1531, %v1525
        %v1634 = vpack.c.b16 %v1532, %v1526
        %v1635 = vpack.c.b16 %v1539, %v1533
        %v1636 = vpack.c.b16 %v1540, %v1534
        %v1637 = vpack.c.b16 %v1541, %v1535
        %v1638 = vpack.c.b16 %v1542, %v1536
        %v1639 = vpack.c.b16 %v1543, %v1537
        %v1640 = vpack.c.b16 %v1544, %v1538
        %1737 = vmatprep.subr.bf16.mxu0 %v1588
        %1738 = vmatpush1.bf16.msra.mxu0 %v1587
        %1739 = vmatprep.subr.bf16.mxu0 %v1582
        %1740 = vmatpush1.bf16.msra.mxu0 %v1581
        %1741 = vmatprep.subr.bf16.mxu0 %v1576
        %1742 = vmatpush1.bf16.msra.mxu0 %v1575
        %1743 = vmatprep.subr.bf16.mxu0 %v1570
        %1744 = vmatpush1.bf16.msra.mxu0 %v1569
        %1745 = vmatprep.subr.bf16.mxu0 %v1564
        %1746 = vmatpush1.bf16.msra.mxu0 %v1563
        %1747 = vmatprep.subr.bf16.mxu0 %v1558
        %1748 = vmatpush1.bf16.msra.mxu0 %v1557
        %1749 = vmatprep.subr.bf16.mxu0 %v1552
        %1750 = vmatpush1.bf16.msra.mxu0 %v1551
        %1751 = vmatprep.subr.bf16.mxu0 %v1546
        %1752 = vmatpush1.bf16.msra.mxu0 %v1545
        %1753 = vmatprep.subr.bf16.mxu0 %v1636
        %1754 = vmatpush2.bf16.msra.mxu0 %v1635
        %1755 = vmatprep.subr.bf16.mxu0 %v1630
        %1756 = vmatpush2.bf16.msra.mxu0 %v1629
        %1757 = vmatprep.subr.bf16.mxu0 %v1624
        %1758 = vmatpush2.bf16.msra.mxu0 %v1623
        %1759 = vmatprep.subr.bf16.mxu0 %v1618
        %1760 = vmatpush2.bf16.msra.mxu0 %v1617
        %1761 = vmatprep.subr.bf16.mxu0 %v1612
        %1762 = vmatpush2.bf16.msra.mxu0 %v1611
        %1763 = vmatprep.subr.bf16.mxu0 %v1606
        %1764 = vmatpush2.bf16.msra.mxu0 %v1605
        %1765 = vmatprep.subr.bf16.mxu0 %v1600
        %1766 = vmatpush2.bf16.msra.mxu0 %v1599
        %1767 = vmatprep.subr.bf16.mxu0 %v1594
        %1768 = vmatpush2.bf16.msra.mxu0 %v1593
        %1769 = vmatprep.mubr.bf16.mxu0 %v1225
        %1770 = vmatmul.mubr.bf16.gmra.mxu0 %v1224
        %v1771 = vpop.f32.mrf.mxu0
        %v1772 = vadd.f32 %v1230, %v1771
        %v1773 = vpop.f32.mrf.mxu0
        %v1774 = vadd.f32 %v1234, %v1773
        %v1775 = vpop.f32.mrf.mxu0
        %v1776 = vpop.f32.mrf.mxu0
        %1777 = vdwg.mxu0
        %1778 = vmatprep.subr.bf16.mxu0 %v1590
        %1779 = vmatpush1.bf16.msra.mxu0 %v1589
        %1780 = vmatprep.subr.bf16.mxu0 %v1584
        %1781 = vmatpush1.bf16.msra.mxu0 %v1583
        %1782 = vmatprep.subr.bf16.mxu0 %v1578
        %1783 = vmatpush1.bf16.msra.mxu0 %v1577
        %1784 = vmatprep.subr.bf16.mxu0 %v1572
        %1785 = vmatpush1.bf16.msra.mxu0 %v1571
        %1786 = vmatprep.subr.bf16.mxu0 %v1566
        %1787 = vmatpush1.bf16.msra.mxu0 %v1565
        %1788 = vmatprep.subr.bf16.mxu0 %v1560
        %1789 = vmatpush1.bf16.msra.mxu0 %v1559
        %1790 = vmatprep.subr.bf16.mxu0 %v1554
        %1791 = vmatpush1.bf16.msra.mxu0 %v1553
        %1792 = vmatprep.subr.bf16.mxu0 %v1548
        %1793 = vmatpush1.bf16.msra.mxu0 %v1547
        %1794 = vmatprep.subr.bf16.mxu0 %v1638
        %1795 = vmatpush2.bf16.msra.mxu0 %v1637
        %1796 = vmatprep.subr.bf16.mxu0 %v1632
        %1797 = vmatpush2.bf16.msra.mxu0 %v1631
        %1798 = vmatprep.subr.bf16.mxu0 %v1626
        %1799 = vmatpush2.bf16.msra.mxu0 %v1625
        %1800 = vmatprep.subr.bf16.mxu0 %v1620
        %1801 = vmatpush2.bf16.msra.mxu0 %v1619
        %1802 = vmatprep.subr.bf16.mxu0 %v1614
        %1803 = vmatpush2.bf16.msra.mxu0 %v1613
        %1804 = vmatprep.subr.bf16.mxu0 %v1608
        %1805 = vmatpush2.bf16.msra.mxu0 %v1607
        %1806 = vmatprep.subr.bf16.mxu0 %v1602
        %1807 = vmatpush2.bf16.msra.mxu0 %v1601
        %1808 = vmatprep.subr.bf16.mxu0 %v1596
        %1809 = vmatpush2.bf16.msra.mxu0 %v1595
        %1810 = vmatprep.mubr.bf16.mxu0 %v1225
        %1811 = vmatmul.mubr.bf16.gmra.mxu0 %v1224
        %v1812 = vpop.f32.mrf.mxu0
        %v1813 = vadd.f32 %v1238, %v1812
        %v1814 = vpop.f32.mrf.mxu0
        %v1815 = vadd.f32 %v1242, %v1814
        %v1816 = vpop.f32.mrf.mxu0
        %v1817 = vpop.f32.mrf.mxu0
        %1818 = vdwg.mxu0
        %1819 = vmatprep.subr.bf16.mxu0 %v1592
        %1820 = vmatpush1.bf16.msra.mxu0 %v1591
        %1821 = vmatprep.subr.bf16.mxu0 %v1586
        %1822 = vmatpush1.bf16.msra.mxu0 %v1585
        %1823 = vmatprep.subr.bf16.mxu0 %v1580
        %1824 = vmatpush1.bf16.msra.mxu0 %v1579
        %1825 = vmatprep.subr.bf16.mxu0 %v1574
        %1826 = vmatpush1.bf16.msra.mxu0 %v1573
        %1827 = vmatprep.subr.bf16.mxu0 %v1568
        %1828 = vmatpush1.bf16.msra.mxu0 %v1567
        %1829 = vmatprep.subr.bf16.mxu0 %v1562
        %1830 = vmatpush1.bf16.msra.mxu0 %v1561
        %1831 = vmatprep.subr.bf16.mxu0 %v1556
        %1832 = vmatpush1.bf16.msra.mxu0 %v1555
        %1833 = vmatprep.subr.bf16.mxu0 %v1550
        %1834 = vmatpush1.bf16.msra.mxu0 %v1549
        %1835 = vmatprep.subr.bf16.mxu0 %v1640
        %1836 = vmatpush2.bf16.msra.mxu0 %v1639
        %1837 = vmatprep.subr.bf16.mxu0 %v1634
        %1838 = vmatpush2.bf16.msra.mxu0 %v1633
        %1839 = vmatprep.subr.bf16.mxu0 %v1628
        %1840 = vmatpush2.bf16.msra.mxu0 %v1627
        %1841 = vmatprep.subr.bf16.mxu0 %v1622
        %1842 = vmatpush2.bf16.msra.mxu0 %v1621
        %1843 = vmatprep.subr.bf16.mxu0 %v1616
        %1844 = vmatpush2.bf16.msra.mxu0 %v1615
        %1845 = vmatprep.subr.bf16.mxu0 %v1610
        %1846 = vmatpush2.bf16.msra.mxu0 %v1609
        %1847 = vmatprep.subr.bf16.mxu0 %v1604
        %1848 = vmatpush2.bf16.msra.mxu0 %v1603
        %1849 = vmatprep.subr.bf16.mxu0 %v1598
        %1850 = vmatpush2.bf16.msra.mxu0 %v1597
        %1851 = vmatprep.mubr.bf16.mxu0 %v1225
        %1852 = vmatmul.mubr.bf16.gmra.mxu0 %v1224
        %v1853 = vpop.f32.mrf.mxu0
        %v1854 = vadd.f32 %v1246, %v1853
        %v1855 = vpop.f32.mrf.mxu0
        %v1856 = vadd.f32 %v1250, %v1855
        %v1857 = vpop.f32.mrf.mxu0
        %v1858 = vpop.f32.mrf.mxu0
        %1859 = vdwg.mxu0
        %v1860 = vld [vmem:[%s858] sm:$0x1]
        %1861 = vmatprep.subr.mxu0 0.0
        %1862 = vmatpush1.xpose.msra.mxu0 0.0
        %1863 = vmatprep.subr.mxu0 0.0
        %1864 = vmatpush1.xpose.msra.mxu0 0.0
        %1865 = vmatprep.subr.mxu0 0.0
        %1866 = vmatpush1.xpose.msra.mxu0 0.0
        %1867 = vmatprep.subr.mxu0 0.0
        %1868 = vmatpush1.xpose.msra.mxu0 0.0
        %1869 = vmatprep.subr.mxu0 0.0
        %1870 = vmatpush1.xpose.msra.mxu0 0.0
        %1871 = vmatprep.subr.mxu0 0.0
        %1872 = vmatpush1.xpose.msra.mxu0 0.0
        %1873 = vmatprep.subr.mxu0 0.0
        %1874 = vmatpush1.xpose.msra.mxu0 0.0
        %1875 = vmatprep.subr.mxu0 0.0
        %1876 = vmatpush1.xpose.msra.mxu0 0.0
        %1877 = vmatprep.subr.mxu0 0.0
        %1878 = vmatpush1.xpose.msra.mxu0 0.0
        %1879 = vmatprep.subr.mxu0 0.0
        %1880 = vmatpush1.xpose.msra.mxu0 0.0
        %1881 = vmatprep.subr.mxu0 0.0
        %1882 = vmatpush1.xpose.msra.mxu0 0.0
        %1883 = vmatprep.subr.mxu0 0.0
        %1884 = vmatpush1.xpose.msra.mxu0 0.0
        %1885 = vmatprep.subr.mxu0 0.0
        %1886 = vmatpush1.xpose.msra.mxu0 0.0
        %1887 = vmatprep.subr.mxu0 0.0
        %1888 = vmatpush1.xpose.msra.mxu0 0.0
        %1889 = vmatprep.subr.mxu0 0.0
        %1890 = vmatpush1.xpose.msra.mxu0 0.0
        %1891 = vmatprep.subr.mxu0 0.0
        %1892 = vmatpush1.xpose.msra.mxu0 %v1813
        %1893 = vmatprep.subr.mxu0 0.0
        %1894 = vmatpush2.xpose.msra.mxu0 0.0
        %1895 = vmatprep.subr.mxu0 0.0
        %1896 = vmatpush2.xpose.msra.mxu0 0.0
        %1897 = vmatprep.subr.mxu0 0.0
        %1898 = vmatpush2.xpose.msra.mxu0 0.0
        %1899 = vmatprep.subr.mxu0 0.0
        %1900 = vmatpush2.xpose.msra.mxu0 0.0
        %1901 = vmatprep.subr.mxu0 0.0
        %1902 = vmatpush2.xpose.msra.mxu0 0.0
        %1903 = vmatprep.subr.mxu0 0.0
        %1904 = vmatpush2.xpose.msra.mxu0 0.0
        %1905 = vmatprep.subr.mxu0 0.0
        %1906 = vmatpush2.xpose.msra.mxu0 0.0
        %1907 = vmatprep.subr.mxu0 0.0
        %1908 = vmatpush2.xpose.msra.mxu0 0.0
        %1909 = vmatprep.subr.mxu0 0.0
        %1910 = vmatpush2.xpose.msra.mxu0 0.0
        %1911 = vmatprep.subr.mxu0 0.0
        %1912 = vmatpush2.xpose.msra.mxu0 0.0
        %1913 = vmatprep.subr.mxu0 0.0
        %1914 = vmatpush2.xpose.msra.mxu0 0.0
        %1915 = vmatprep.subr.mxu0 0.0
        %1916 = vmatpush2.xpose.msra.mxu0 0.0
        %1917 = vmatprep.subr.mxu0 0.0
        %1918 = vmatpush2.xpose.msra.mxu0 0.0
        %1919 = vmatprep.subr.mxu0 0.0
        %1920 = vmatpush2.xpose.msra.mxu0 0.0
        %1921 = vmatprep.subr.mxu0 0.0
        %1922 = vmatpush2.xpose.msra.mxu0 0.0
        %1923 = vmatprep.subr.mxu0 0.0
        %1924 = vmatpush2.xpose.msra.mxu0 0.0
        %1925 = vmatprep.mubr.f32.mxu0 0.0
        %1926 = vmatmul.mubr.f32.gmra.mxu0 %v1772
        %v1927 = vpop.f32.mrf.mxu0
        %v1928 = vadd.f32 0.0, %v1927
        %v1929 = vpop.f32.mrf.mxu0
        %1930 = vdwg.mxu0
        %v1931 = vmul.f32 %v1928, 0.088388346
        %v1933 = vlaneseq
        %v1934 = vshrl.u32 %v1933, 7
        %v1935 = vsub.s32 0, %v1934
        %v1936 = vrot.slane %v1860, %v1935
        %v1938 = vadd.f32 %v1931, %v1936
        %vm1939 = vcmask 64512
        %v1940 = vsel %vm1939, %v1938, -inf
        %1941 = vmax.xlane.f32.xlu0 %v1940
        %v1942 = vpop.xlane.xlu0 %1941
        %v1943 = vsub.f32 %v1938, %v1942
        %v1944 = vmul.f32 %v1943, 1.442695
        %v1945 = vpow.pop %v1944
        %v1946 = vsel %vm1939, %v1945, 0.0
        %1947 = vadd.xlane.f32.xlu0 %v1946
        %v1948 = vpop.xlane.xlu0 %1947
        %v1949 = vrcp.pop %v1948
        %v1950 = vmul.f32 %v1945, %v1949
        %v1952 = vsel %vm1939, %v1950, 0
        %1954 = vmatprep.subr.mxu0 0.0
        %1955 = vmatpush1.msra.mxu0 0.0
        %1956 = vmatprep.subr.mxu0 0.0
        %1957 = vmatpush1.msra.mxu0 0.0
        %1958 = vmatprep.subr.mxu0 0.0
        %1959 = vmatpush1.msra.mxu0 0.0
        %1960 = vmatprep.subr.mxu0 0.0
        %1961 = vmatpush1.msra.mxu0 0.0
        %1962 = vmatprep.subr.mxu0 0.0
        %1963 = vmatpush1.msra.mxu0 0.0
        %1964 = vmatprep.subr.mxu0 0.0
        %1965 = vmatpush1.msra.mxu0 0.0
        %1966 = vmatprep.subr.mxu0 0.0
        %1967 = vmatpush1.msra.mxu0 0.0
        %1968 = vmatprep.subr.mxu0 0.0
        %1969 = vmatpush1.msra.mxu0 0.0
        %1970 = vmatprep.subr.mxu0 0.0
        %1971 = vmatpush1.msra.mxu0 0.0
        %1972 = vmatprep.subr.mxu0 0.0
        %1973 = vmatpush1.msra.mxu0 0.0
        %1974 = vmatprep.subr.mxu0 0.0
        %1975 = vmatpush1.msra.mxu0 0.0
        %1976 = vmatprep.subr.mxu0 0.0
        %1977 = vmatpush1.msra.mxu0 0.0
        %1978 = vmatprep.subr.mxu0 0.0
        %1979 = vmatpush1.msra.mxu0 0.0
        %1980 = vmatprep.subr.mxu0 0.0
        %1981 = vmatpush1.msra.mxu0 0.0
        %1982 = vmatprep.subr.mxu0 0.0
        %1983 = vmatpush1.msra.mxu0 0.0
        %1984 = vmatprep.subr.mxu0 0.0
        %1985 = vmatpush1.msra.mxu0 %v1854
        %1986 = vmatprep.subr.mxu0 0.0
        %1987 = vmatpush2.msra.mxu0 0.0
        %1988 = vmatprep.subr.mxu0 0.0
        %1989 = vmatpush2.msra.mxu0 0.0
        %1990 = vmatprep.subr.mxu0 0.0
        %1991 = vmatpush2.msra.mxu0 0.0
        %1992 = vmatprep.subr.mxu0 0.0
        %1993 = vmatpush2.msra.mxu0 0.0
        %1994 = vmatprep.subr.mxu0 0.0
        %1995 = vmatpush2.msra.mxu0 0.0
        %1996 = vmatprep.subr.mxu0 0.0
        %1997 = vmatpush2.msra.mxu0 0.0
        %1998 = vmatprep.subr.mxu0 0.0
        %1999 = vmatpush2.msra.mxu0 0.0
        %2000 = vmatprep.subr.mxu0 0.0
        %2001 = vmatpush2.msra.mxu0 0.0
        %2002 = vmatprep.subr.mxu0 0.0
        %2003 = vmatpush2.msra.mxu0 0.0
        %2004 = vmatprep.subr.mxu0 0.0
        %2005 = vmatpush2.msra.mxu0 0.0
        %2006 = vmatprep.subr.mxu0 0.0
        %2007 = vmatpush2.msra.mxu0 0.0
        %2008 = vmatprep.subr.mxu0 0.0
        %2009 = vmatpush2.msra.mxu0 0.0
        %2010 = vmatprep.subr.mxu0 0.0
        %2011 = vmatpush2.msra.mxu0 0.0
        %2012 = vmatprep.subr.mxu0 0.0
        %2013 = vmatpush2.msra.mxu0 0.0
        %2014 = vmatprep.subr.mxu0 0.0
        %2015 = vmatpush2.msra.mxu0 0.0
        %2016 = vmatprep.subr.mxu0 0.0
        %2017 = vmatpush2.msra.mxu0 0.0
        %2018 = vmatprep.mubr.f32.mxu0 0.0
        %2019 = vmatmul.mubr.f32.gmra.mxu0 %v1952
        %v2020 = vpop.f32.mrf.mxu0
        %v2021 = vadd.f32 0.0, %v2020
        %v2022 = vpop.f32.mrf.mxu0
        %2023 = vdwg.mxu0
        %2024 = vmatprep.subr.mxu0 0.0
        %2025 = vmatpush1.xpose.msra.mxu0 0.0
        %2026 = vmatprep.subr.mxu0 0.0
        %2027 = vmatpush1.xpose.msra.mxu0 0.0
        %2028 = vmatprep.subr.mxu0 0.0
        %2029 = vmatpush1.xpose.msra.mxu0 0.0
        %2030 = vmatprep.subr.mxu0 0.0
        %2031 = vmatpush1.xpose.msra.mxu0 0.0
        %2032 = vmatprep.subr.mxu0 0.0
        %2033 = vmatpush1.xpose.msra.mxu0 0.0
        %2034 = vmatprep.subr.mxu0 0.0
        %2035 = vmatpush1.xpose.msra.mxu0 0.0
        %2036 = vmatprep.subr.mxu0 0.0
        %2037 = vmatpush1.xpose.msra.mxu0 0.0
        %2038 = vmatprep.subr.mxu0 0.0
        %2039 = vmatpush1.xpose.msra.mxu0 0.0
        %2040 = vmatprep.subr.mxu0 0.0
        %2041 = vmatpush1.xpose.msra.mxu0 0.0
        %2042 = vmatprep.subr.mxu0 0.0
        %2043 = vmatpush1.xpose.msra.mxu0 0.0
        %2044 = vmatprep.subr.mxu0 0.0
        %2045 = vmatpush1.xpose.msra.mxu0 0.0
        %2046 = vmatprep.subr.mxu0 0.0
        %2047 = vmatpush1.xpose.msra.mxu0 0.0
        %2048 = vmatprep.subr.mxu0 0.0
        %2049 = vmatpush1.xpose.msra.mxu0 0.0
        %2050 = vmatprep.subr.mxu0 0.0
        %2051 = vmatpush1.xpose.msra.mxu0 0.0
        %2052 = vmatprep.subr.mxu0 0.0
        %2053 = vmatpush1.xpose.msra.mxu0 0.0
        %2054 = vmatprep.subr.mxu0 0.0
        %2055 = vmatpush1.xpose.msra.mxu0 %v1815
        %2056 = vmatprep.subr.mxu0 0.0
        %2057 = vmatpush2.xpose.msra.mxu0 0.0
        %2058 = vmatprep.subr.mxu0 0.0
        %2059 = vmatpush2.xpose.msra.mxu0 0.0
        %2060 = vmatprep.subr.mxu0 0.0
        %2061 = vmatpush2.xpose.msra.mxu0 0.0
        %2062 = vmatprep.subr.mxu0 0.0
        %2063 = vmatpush2.xpose.msra.mxu0 0.0
        %2064 = vmatprep.subr.mxu0 0.0
        %2065 = vmatpush2.xpose.msra.mxu0 0.0
        %2066 = vmatprep.subr.mxu0 0.0
        %2067 = vmatpush2.xpose.msra.mxu0 0.0
        %2068 = vmatprep.subr.mxu0 0.0
        %2069 = vmatpush2.xpose.msra.mxu0 0.0
        %2070 = vmatprep.subr.mxu0 0.0
        %2071 = vmatpush2.xpose.msra.mxu0 0.0
        %2072 = vmatprep.subr.mxu0 0.0
        %2073 = vmatpush2.xpose.msra.mxu0 0.0
        %2074 = vmatprep.subr.mxu0 0.0
        %2075 = vmatpush2.xpose.msra.mxu0 0.0
        %2076 = vmatprep.subr.mxu0 0.0
        %2077 = vmatpush2.xpose.msra.mxu0 0.0
        %2078 = vmatprep.subr.mxu0 0.0
        %2079 = vmatpush2.xpose.msra.mxu0 0.0
        %2080 = vmatprep.subr.mxu0 0.0
        %2081 = vmatpush2.xpose.msra.mxu0 0.0
        %2082 = vmatprep.subr.mxu0 0.0
        %2083 = vmatpush2.xpose.msra.mxu0 0.0
        %2084 = vmatprep.subr.mxu0 0.0
        %2085 = vmatpush2.xpose.msra.mxu0 0.0
        %2086 = vmatprep.subr.mxu0 0.0
        %2087 = vmatpush2.xpose.msra.mxu0 0.0
        %2088 = vmatprep.mubr.f32.mxu0 0.0
        %2089 = vmatmul.mubr.f32.gmra.mxu0 %v1774
        %v2090 = vpop.f32.mrf.mxu0
        %v2091 = vadd.f32 0.0, %v2090
        %v2092 = vpop.f32.mrf.mxu0
        %2093 = vdwg.mxu0
        %v2094 = vmul.f32 %v2091, 0.088388346
        %v2095 = vadd.f32 %v2094, %v1936
        %v2096 = vsel %vm1939, %v2095, -inf
        %2097 = vmax.xlane.f32.xlu0 %v2096
        %v2098 = vpop.xlane.xlu0 %2097
        %v2099 = vsub.f32 %v2095, %v2098
        %v2100 = vmul.f32 %v2099, 1.442695
        %v2101 = vpow.pop %v2100
        %v2102 = vsel %vm1939, %v2101, 0.0
        %2103 = vadd.xlane.f32.xlu0 %v2102
        %v2104 = vpop.xlane.xlu0 %2103
        %v2105 = vrcp.pop %v2104
        %v2106 = vmul.f32 %v2101, %v2105
        %v2108 = vsel %vm1939, %v2106, 0
        %2110 = vmatprep.subr.mxu0 0.0
        %2111 = vmatpush1.msra.mxu0 0.0
        %2112 = vmatprep.subr.mxu0 0.0
        %2113 = vmatpush1.msra.mxu0 0.0
        %2114 = vmatprep.subr.mxu0 0.0
        %2115 = vmatpush1.msra.mxu0 0.0
        %2116 = vmatprep.subr.mxu0 0.0
        %2117 = vmatpush1.msra.mxu0 0.0
        %2118 = vmatprep.subr.mxu0 0.0
        %2119 = vmatpush1.msra.mxu0 0.0
        %2120 = vmatprep.subr.mxu0 0.0
        %2121 = vmatpush1.msra.mxu0 0.0
        %2122 = vmatprep.subr.mxu0 0.0
        %2123 = vmatpush1.msra.mxu0 0.0
        %2124 = vmatprep.subr.mxu0 0.0
        %2125 = vmatpush1.msra.mxu0 0.0
        %2126 = vmatprep.subr.mxu0 0.0
        %2127 = vmatpush1.msra.mxu0 0.0
        %2128 = vmatprep.subr.mxu0 0.0
        %2129 = vmatpush1.msra.mxu0 0.0
        %2130 = vmatprep.subr.mxu0 0.0
        %2131 = vmatpush1.msra.mxu0 0.0
        %2132 = vmatprep.subr.mxu0 0.0
        %2133 = vmatpush1.msra.mxu0 0.0
        %2134 = vmatprep.subr.mxu0 0.0
        %2135 = vmatpush1.msra.mxu0 0.0
        %2136 = vmatprep.subr.mxu0 0.0
        %2137 = vmatpush1.msra.mxu0 0.0
        %2138 = vmatprep.subr.mxu0 0.0
        %2139 = vmatpush1.msra.mxu0 0.0
        %2140 = vmatprep.subr.mxu0 0.0
        %2141 = vmatpush1.msra.mxu0 %v1856
        %2142 = vmatprep.subr.mxu0 0.0
        %2143 = vmatpush2.msra.mxu0 0.0
        %2144 = vmatprep.subr.mxu0 0.0
        %2145 = vmatpush2.msra.mxu0 0.0
        %2146 = vmatprep.subr.mxu0 0.0
        %2147 = vmatpush2.msra.mxu0 0.0
        %2148 = vmatprep.subr.mxu0 0.0
        %2149 = vmatpush2.msra.mxu0 0.0
        %2150 = vmatprep.subr.mxu0 0.0
        %2151 = vmatpush2.msra.mxu0 0.0
        %2152 = vmatprep.subr.mxu0 0.0
        %2153 = vmatpush2.msra.mxu0 0.0
        %2154 = vmatprep.subr.mxu0 0.0
        %2155 = vmatpush2.msra.mxu0 0.0
        %2156 = vmatprep.subr.mxu0 0.0
        %2157 = vmatpush2.msra.mxu0 0.0
        %2158 = vmatprep.subr.mxu0 0.0
        %2159 = vmatpush2.msra.mxu0 0.0
        %2160 = vmatprep.subr.mxu0 0.0
        %2161 = vmatpush2.msra.mxu0 0.0
        %2162 = vmatprep.subr.mxu0 0.0
        %2163 = vmatpush2.msra.mxu0 0.0
        %2164 = vmatprep.subr.mxu0 0.0
        %2165 = vmatpush2.msra.mxu0 0.0
        %2166 = vmatprep.subr.mxu0 0.0
        %2167 = vmatpush2.msra.mxu0 0.0
        %2168 = vmatprep.subr.mxu0 0.0
        %2169 = vmatpush2.msra.mxu0 0.0
        %2170 = vmatprep.subr.mxu0 0.0
        %2171 = vmatpush2.msra.mxu0 0.0
        %2172 = vmatprep.subr.mxu0 0.0
        %2173 = vmatpush2.msra.mxu0 0.0
        %2174 = vmatprep.mubr.f32.mxu0 0.0
        %2175 = vmatmul.mubr.f32.gmra.mxu0 %v2108
        %v2176 = vpop.f32.mrf.mxu0
        %v2177 = vadd.f32 0.0, %v2176
        %v2178 = vpop.f32.mrf.mxu0
        %2179 = vdwg.mxu0
        %v2180 = vpack.c.bf16 %v2021, %v2021
        %v2181 = vpack.c.bf16 %v2177, %v2177
        %v2182 = vld [vmem:[%s876] sm:$0xff]
        %v2183 = vld [vmem:[%s876 + $0x8] sm:$0xff]
        %v2184 = vld [vmem:[%s876 + $0x10] sm:$0xff]
        %v2185 = vld [vmem:[%s876 + $0x18] sm:$0xff]
        %v2186 = vld [vmem:[%s876 + $0x20] sm:$0xff]
        %v2187 = vld [vmem:[%s876 + $0x28] sm:$0xff]
        %v2188 = vld [vmem:[%s876 + $0x30] sm:$0xff]
        %v2189 = vld [vmem:[%s876 + $0x38] sm:$0xff]
        %v2190 = vld [vmem:[%s876 + $0x40] sm:$0xff]
        %v2191 = vld [vmem:[%s876 + $0x48] sm:$0xff]
        %v2192 = vld [vmem:[%s876 + $0x50] sm:$0xff]
        %v2193 = vld [vmem:[%s876 + $0x58] sm:$0xff]
        %v2194 = vld [vmem:[%s876 + $0x60] sm:$0xff]
        %v2195 = vld [vmem:[%s876 + $0x68] sm:$0xff]
        %v2196 = vld [vmem:[%s876 + $0x70] sm:$0xff]
        %v2197 = vld [vmem:[%s876 + $0x78] sm:$0xff]
        %v2198 = vld [vmem:[%s876 + $0x80] sm:$0xff]
        %v2199 = vld [vmem:[%s876 + $0x88] sm:$0xff]
        %v2200 = vld [vmem:[%s876 + $0x90] sm:$0xff]
        %v2201 = vld [vmem:[%s876 + $0x98] sm:$0xff]
        %v2202 = vld [vmem:[%s876 + $0xa0] sm:$0xff]
        %v2203 = vld [vmem:[%s876 + $0xa8] sm:$0xff]
        %v2204 = vld [vmem:[%s876 + $0xb0] sm:$0xff]
        %v2205 = vld [vmem:[%s876 + $0xb8] sm:$0xff]
        %v2206 = vld [vmem:[%s876 + $0xc0] sm:$0xff]
        %v2207 = vld [vmem:[%s876 + $0xc8] sm:$0xff]
        %v2208 = vld [vmem:[%s876 + $0xd0] sm:$0xff]
        %v2209 = vld [vmem:[%s876 + $0xd8] sm:$0xff]
        %v2210 = vld [vmem:[%s876 + $0xe0] sm:$0xff]
        %v2211 = vld [vmem:[%s876 + $0xe8] sm:$0xff]
        %v2212 = vld [vmem:[%s876 + $0xf0] sm:$0xff]
        %v2213 = vld [vmem:[%s876 + $0xf8] sm:$0xff]
        %v2214 = vld [vmem:[%s885] sm:$0x3]
        %v2216 = vlaneseq
        %v2217 = vshrl.u32 %v2216, 7
        %v2218 = vsub.s32 0, %v2217
        %v2219 = vrot.slane %v2214, %v2218
        %v2220 = vlaneseq
        %v2221 = vshrl.u32 %v2220, 7
        %v2222 = vsub.s32 1, %v2221
        %v2223 = vrot.slane %v2214, %v2222
        %v2258 = vunpack.c.l.b16 %v2182
        %v2259 = vunpack.c.h.b16 %v2182
        %v2260 = vunpack.c.l.b16 %v2183
        %v2261 = vunpack.c.h.b16 %v2183
        %v2262 = vunpack.c.l.b16 %v2184
        %v2263 = vunpack.c.h.b16 %v2184
        %v2264 = vunpack.c.l.b16 %v2185
        %v2265 = vunpack.c.h.b16 %v2185
        %v2266 = vunpack.c.l.b16 %v2186
        %v2267 = vunpack.c.h.b16 %v2186
        %v2268 = vunpack.c.l.b16 %v2187
        %v2269 = vunpack.c.h.b16 %v2187
        %v2270 = vunpack.c.l.b16 %v2188
        %v2271 = vunpack.c.h.b16 %v2188
        %v2272 = vunpack.c.l.b16 %v2189
        %v2273 = vunpack.c.h.b16 %v2189
        %v2274 = vunpack.c.l.b16 %v2190
        %v2275 = vunpack.c.h.b16 %v2190
        %v2276 = vunpack.c.l.b16 %v2191
        %v2277 = vunpack.c.h.b16 %v2191
        %v2278 = vunpack.c.l.b16 %v2192
        %v2279 = vunpack.c.h.b16 %v2192
        %v2280 = vunpack.c.l.b16 %v2193
        %v2281 = vunpack.c.h.b16 %v2193
        %v2282 = vunpack.c.l.b16 %v2194
        %v2283 = vunpack.c.h.b16 %v2194
        %v2284 = vunpack.c.l.b16 %v2195
        %v2285 = vunpack.c.h.b16 %v2195
        %v2286 = vunpack.c.l.b16 %v2196
        %v2287 = vunpack.c.h.b16 %v2196
        %v2288 = vunpack.c.l.b16 %v2197
        %v2289 = vunpack.c.h.b16 %v2197
        %v2290 = vunpack.c.l.b16 %v2198
        %v2291 = vunpack.c.h.b16 %v2198
        %v2292 = vunpack.c.l.b16 %v2199
        %v2293 = vunpack.c.h.b16 %v2199
        %v2294 = vunpack.c.l.b16 %v2200
        %v2295 = vunpack.c.h.b16 %v2200
        %v2296 = vunpack.c.l.b16 %v2201
        %v2297 = vunpack.c.h.b16 %v2201
        %v2298 = vunpack.c.l.b16 %v2202
        %v2299 = vunpack.c.h.b16 %v2202
        %v2300 = vunpack.c.l.b16 %v2203
        %v2301 = vunpack.c.h.b16 %v2203
        %v2302 = vunpack.c.l.b16 %v2204
        %v2303 = vunpack.c.h.b16 %v2204
        %v2304 = vunpack.c.l.b16 %v2205
        %v2305 = vunpack.c.h.b16 %v2205
        %v2306 = vunpack.c.l.b16 %v2206
        %v2307 = vunpack.c.h.b16 %v2206
        %v2308 = vunpack.c.l.b16 %v2207
        %v2309 = vunpack.c.h.b16 %v2207
        %v2310 = vunpack.c.l.b16 %v2208
        %v2311 = vunpack.c.h.b16 %v2208
        %v2312 = vunpack.c.l.b16 %v2209
        %v2313 = vunpack.c.h.b16 %v2209
        %v2314 = vunpack.c.l.b16 %v2210
        %v2315 = vunpack.c.h.b16 %v2210
        %v2316 = vunpack.c.l.b16 %v2211
        %v2317 = vunpack.c.h.b16 %v2211
        %v2318 = vunpack.c.l.b16 %v2212
        %v2319 = vunpack.c.h.b16 %v2212
        %v2320 = vunpack.c.l.b16 %v2213
        %v2321 = vunpack.c.h.b16 %v2213
        %v2322 = vpack.c.b16 %v2260, %v2258
        %v2323 = vpack.c.b16 %v2261, %v2259
        %v2324 = vpack.c.b16 %v2264, %v2262
        %v2325 = vpack.c.b16 %v2265, %v2263
        %v2326 = vpack.c.b16 %v2268, %v2266
        %v2327 = vpack.c.b16 %v2269, %v2267
        %v2328 = vpack.c.b16 %v2272, %v2270
        %v2329 = vpack.c.b16 %v2273, %v2271
        %v2330 = vpack.c.b16 %v2276, %v2274
        %v2331 = vpack.c.b16 %v2277, %v2275
        %v2332 = vpack.c.b16 %v2280, %v2278
        %v2333 = vpack.c.b16 %v2281, %v2279
        %v2334 = vpack.c.b16 %v2284, %v2282
        %v2335 = vpack.c.b16 %v2285, %v2283
        %v2336 = vpack.c.b16 %v2288, %v2286
        %v2337 = vpack.c.b16 %v2289, %v2287
        %v2338 = vpack.c.b16 %v2292, %v2290
        %v2339 = vpack.c.b16 %v2293, %v2291
        %v2340 = vpack.c.b16 %v2296, %v2294
        %v2341 = vpack.c.b16 %v2297, %v2295
        %v2342 = vpack.c.b16 %v2300, %v2298
        %v2343 = vpack.c.b16 %v2301, %v2299
        %v2344 = vpack.c.b16 %v2304, %v2302
        %v2345 = vpack.c.b16 %v2305, %v2303
        %v2346 = vpack.c.b16 %v2308, %v2306
        %v2347 = vpack.c.b16 %v2309, %v2307
        %v2348 = vpack.c.b16 %v2312, %v2310
        %v2349 = vpack.c.b16 %v2313, %v2311
        %v2350 = vpack.c.b16 %v2316, %v2314
        %v2351 = vpack.c.b16 %v2317, %v2315
        %v2352 = vpack.c.b16 %v2320, %v2318
        %v2353 = vpack.c.b16 %v2321, %v2319
        %2386 = vmatprep.subr.bf16.mxu0 %v2337
        %2387 = vmatpush1.bf16.msra.mxu0 %v2336
        %2388 = vmatprep.subr.bf16.mxu0 %v2335
        %2389 = vmatpush1.bf16.msra.mxu0 %v2334
        %2390 = vmatprep.subr.bf16.mxu0 %v2333
        %2391 = vmatpush1.bf16.msra.mxu0 %v2332
        %2392 = vmatprep.subr.bf16.mxu0 %v2331
        %2393 = vmatpush1.bf16.msra.mxu0 %v2330
        %2394 = vmatprep.subr.bf16.mxu0 %v2329
        %2395 = vmatpush1.bf16.msra.mxu0 %v2328
        %2396 = vmatprep.subr.bf16.mxu0 %v2327
        %2397 = vmatpush1.bf16.msra.mxu0 %v2326
        %2398 = vmatprep.subr.bf16.mxu0 %v2325
        %2399 = vmatpush1.bf16.msra.mxu0 %v2324
        %2400 = vmatprep.subr.bf16.mxu0 %v2323
        %2401 = vmatpush1.bf16.msra.mxu0 %v2322
        %2402 = vmatprep.subr.bf16.mxu0 %v2353
        %2403 = vmatpush2.bf16.msra.mxu0 %v2352
        %2404 = vmatprep.subr.bf16.mxu0 %v2351
        %2405 = vmatpush2.bf16.msra.mxu0 %v2350
        %2406 = vmatprep.subr.bf16.mxu0 %v2349
        %2407 = vmatpush2.bf16.msra.mxu0 %v2348
        %2408 = vmatprep.subr.bf16.mxu0 %v2347
        %2409 = vmatpush2.bf16.msra.mxu0 %v2346
        %2410 = vmatprep.subr.bf16.mxu0 %v2345
        %2411 = vmatpush2.bf16.msra.mxu0 %v2344
        %2412 = vmatprep.subr.bf16.mxu0 %v2343
        %2413 = vmatpush2.bf16.msra.mxu0 %v2342
        %2414 = vmatprep.subr.bf16.mxu0 %v2341
        %2415 = vmatpush2.bf16.msra.mxu0 %v2340
        %2416 = vmatprep.subr.bf16.mxu0 %v2339
        %2417 = vmatpush2.bf16.msra.mxu0 %v2338
        %2418 = vmatprep.mubr.bf16.mxu0 %v2181
        %2419 = vmatmul.mubr.bf16.gmra.mxu0 %v2180
        %v2420 = vpop.f32.mrf.mxu0
        %v2421 = vadd.f32 %v2219, %v2420
        %v2422 = vpop.f32.mrf.mxu0
        %v2423 = vadd.f32 %v2223, %v2422
        %v2424 = vpop.f32.mrf.mxu0
        %v2425 = vpop.f32.mrf.mxu0
        %2426 = vdwg.mxu0
        %v2427 = vadd.f32 %v1125, %v2421
        %v2428 = vadd.f32 %v1126, %v2423
        %v2429 = vld [vmem:[%s894] sm:$0x3]
        %v2430 = vld [vmem:[%s903] sm:$0x3]
        %v2431 = vadd.f32 %v2427, %v2428
        %2432 = vadd.xlane.f32.xlu0 %v2431
        %v2433 = vpop.xlane.xlu0 %2432
        %v2434 = vrcp.pop 256.0
        %v2435 = vmul.f32 %v2433, %v2434
        %v2436 = vsub.f32 %v2427, %v2435
        %v2437 = vsub.f32 %v2428, %v2435
        %v2438 = vmul.f32 %v2436, %v2436
        %v2439 = vmul.f32 %v2437, %v2437
        %v2440 = vadd.f32 %v2438, %v2439
        %2441 = vadd.xlane.f32.xlu0 %v2440
        %v2442 = vpop.xlane.xlu0 %2441
        %v2443 = vmul.f32 %v2442, %v2434
        %v2444 = vadd.f32 %v2443, 1e-12
        %v2445 = vrsqrt.pop %v2444
        %v2446 = vmul.f32 %v2436, %v2445
        %v2447 = vmul.f32 %v2437, %v2445
        %v2449 = vlaneseq
        %v2450 = vshrl.u32 %v2449, 7
        %v2451 = vsub.s32 0, %v2450
        %v2452 = vrot.slane %v2429, %v2451
        %v2453 = vlaneseq
        %v2454 = vshrl.u32 %v2453, 7
        %v2455 = vsub.s32 1, %v2454
        %v2456 = vrot.slane %v2429, %v2455
        %v2459 = vmul.f32 %v2446, %v2452
        %v2460 = vmul.f32 %v2447, %v2456
        %v2462 = vlaneseq
        %v2463 = vshrl.u32 %v2462, 7
        %v2464 = vsub.s32 0, %v2463
        %v2465 = vrot.slane %v2430, %v2464
        %v2466 = vlaneseq
        %v2467 = vshrl.u32 %v2466, 7
        %v2468 = vsub.s32 1, %v2467
        %v2469 = vrot.slane %v2430, %v2468
        %v2472 = vadd.f32 %v2459, %v2465
        %v2473 = vadd.f32 %v2460, %v2469
        %v2474 = vpack.c.bf16 %v2472, %v2472
        %v2475 = vpack.c.bf16 %v2473, %v2473
        %v2476 = vld [vmem:[%s912] sm:$0xff]
        %v2477 = vld [vmem:[%s912 + $0x8] sm:$0xff]
        %v2478 = vld [vmem:[%s912 + $0x10] sm:$0xff]
        %v2479 = vld [vmem:[%s912 + $0x18] sm:$0xff]
        %v2480 = vld [vmem:[%s912 + $0x20] sm:$0xff]
        %v2481 = vld [vmem:[%s912 + $0x28] sm:$0xff]
        %v2482 = vld [vmem:[%s912 + $0x30] sm:$0xff]
        %v2483 = vld [vmem:[%s912 + $0x38] sm:$0xff]
        %v2484 = vld [vmem:[%s912 + $0x40] sm:$0xff]
        %v2485 = vld [vmem:[%s912 + $0x48] sm:$0xff]
        %v2486 = vld [vmem:[%s912 + $0x50] sm:$0xff]
        %v2487 = vld [vmem:[%s912 + $0x58] sm:$0xff]
        %v2488 = vld [vmem:[%s912 + $0x60] sm:$0xff]
        %v2489 = vld [vmem:[%s912 + $0x68] sm:$0xff]
        %v2490 = vld [vmem:[%s912 + $0x70] sm:$0xff]
        %v2491 = vld [vmem:[%s912 + $0x78] sm:$0xff]
        %v2492 = vld [vmem:[%s912 + $0x80] sm:$0xff]
        %v2493 = vld [vmem:[%s912 + $0x88] sm:$0xff]
        %v2494 = vld [vmem:[%s912 + $0x90] sm:$0xff]
        %v2495 = vld [vmem:[%s912 + $0x98] sm:$0xff]
        %v2496 = vld [vmem:[%s912 + $0xa0] sm:$0xff]
        %v2497 = vld [vmem:[%s912 + $0xa8] sm:$0xff]
        %v2498 = vld [vmem:[%s912 + $0xb0] sm:$0xff]
        %v2499 = vld [vmem:[%s912 + $0xb8] sm:$0xff]
        %v2500 = vld [vmem:[%s912 + $0xc0] sm:$0xff]
        %v2501 = vld [vmem:[%s912 + $0xc8] sm:$0xff]
        %v2502 = vld [vmem:[%s912 + $0xd0] sm:$0xff]
        %v2503 = vld [vmem:[%s912 + $0xd8] sm:$0xff]
        %v2504 = vld [vmem:[%s912 + $0xe0] sm:$0xff]
        %v2505 = vld [vmem:[%s912 + $0xe8] sm:$0xff]
        %v2506 = vld [vmem:[%s912 + $0xf0] sm:$0xff]
        %v2507 = vld [vmem:[%s912 + $0xf8] sm:$0xff]
        %v2508 = vld [vmem:[%s912 + $0x100] sm:$0xff]
        %v2509 = vld [vmem:[%s912 + $0x108] sm:$0xff]
        %v2510 = vld [vmem:[%s912 + $0x110] sm:$0xff]
        %v2511 = vld [vmem:[%s912 + $0x118] sm:$0xff]
        %v2512 = vld [vmem:[%s912 + $0x120] sm:$0xff]
        %v2513 = vld [vmem:[%s912 + $0x128] sm:$0xff]
        %v2514 = vld [vmem:[%s912 + $0x130] sm:$0xff]
        %v2515 = vld [vmem:[%s912 + $0x138] sm:$0xff]
        %v2516 = vld [vmem:[%s912 + $0x140] sm:$0xff]
        %v2517 = vld [vmem:[%s912 + $0x148] sm:$0xff]
        %v2518 = vld [vmem:[%s912 + $0x150] sm:$0xff]
        %v2519 = vld [vmem:[%s912 + $0x158] sm:$0xff]
        %v2520 = vld [vmem:[%s912 + $0x160] sm:$0xff]
        %v2521 = vld [vmem:[%s912 + $0x168] sm:$0xff]
        %v2522 = vld [vmem:[%s912 + $0x170] sm:$0xff]
        %v2523 = vld [vmem:[%s912 + $0x178] sm:$0xff]
        %v2524 = vld [vmem:[%s912 + $0x180] sm:$0xff]
        %v2525 = vld [vmem:[%s912 + $0x188] sm:$0xff]
        %v2526 = vld [vmem:[%s912 + $0x190] sm:$0xff]
        %v2527 = vld [vmem:[%s912 + $0x198] sm:$0xff]
        %v2528 = vld [vmem:[%s912 + $0x1a0] sm:$0xff]
        %v2529 = vld [vmem:[%s912 + $0x1a8] sm:$0xff]
        %v2530 = vld [vmem:[%s912 + $0x1b0] sm:$0xff]
        %v2531 = vld [vmem:[%s912 + $0x1b8] sm:$0xff]
        %v2532 = vld [vmem:[%s912 + $0x1c0] sm:$0xff]
        %v2533 = vld [vmem:[%s912 + $0x1c8] sm:$0xff]
        %v2534 = vld [vmem:[%s912 + $0x1d0] sm:$0xff]
        %v2535 = vld [vmem:[%s912 + $0x1d8] sm:$0xff]
        %v2536 = vld [vmem:[%s912 + $0x1e0] sm:$0xff]
        %v2537 = vld [vmem:[%s912 + $0x1e8] sm:$0xff]
        %v2538 = vld [vmem:[%s912 + $0x1f0] sm:$0xff]
        %v2539 = vld [vmem:[%s912 + $0x1f8] sm:$0xff]
        %v2540 = vld [vmem:[%s1055] sm:$0xf]
        %v2542 = vlaneseq
        %v2543 = vshrl.u32 %v2542, 7
        %v2544 = vsub.s32 0, %v2543
        %v2545 = vrot.slane %v2540, %v2544
        %v2546 = vlaneseq
        %v2547 = vshrl.u32 %v2546, 7
        %v2548 = vsub.s32 1, %v2547
        %v2549 = vrot.slane %v2540, %v2548
        %v2550 = vlaneseq
        %v2551 = vshrl.u32 %v2550, 7
        %v2552 = vsub.s32 2, %v2551
        %v2553 = vrot.slane %v2540, %v2552
        %v2554 = vlaneseq
        %v2555 = vshrl.u32 %v2554, 7
        %v2556 = vsub.s32 3, %v2555
        %v2557 = vrot.slane %v2540, %v2556
        %v2626 = vunpack.c.l.b16 %v2476
        %v2627 = vunpack.c.h.b16 %v2476
        %v2628 = vunpack.c.l.b16 %v2477
        %v2629 = vunpack.c.h.b16 %v2477
        %v2630 = vunpack.c.l.b16 %v2478
        %v2631 = vunpack.c.h.b16 %v2478
        %v2632 = vunpack.c.l.b16 %v2479
        %v2633 = vunpack.c.h.b16 %v2479
        %v2634 = vunpack.c.l.b16 %v2480
        %v2635 = vunpack.c.h.b16 %v2480
        %v2636 = vunpack.c.l.b16 %v2481
        %v2637 = vunpack.c.h.b16 %v2481
        %v2638 = vunpack.c.l.b16 %v2482
        %v2639 = vunpack.c.h.b16 %v2482
        %v2640 = vunpack.c.l.b16 %v2483
        %v2641 = vunpack.c.h.b16 %v2483
        %v2642 = vunpack.c.l.b16 %v2484
        %v2643 = vunpack.c.h.b16 %v2484
        %v2644 = vunpack.c.l.b16 %v2485
        %v2645 = vunpack.c.h.b16 %v2485
        %v2646 = vunpack.c.l.b16 %v2486
        %v2647 = vunpack.c.h.b16 %v2486
        %v2648 = vunpack.c.l.b16 %v2487
        %v2649 = vunpack.c.h.b16 %v2487
        %v2650 = vunpack.c.l.b16 %v2488
        %v2651 = vunpack.c.h.b16 %v2488
        %v2652 = vunpack.c.l.b16 %v2489
        %v2653 = vunpack.c.h.b16 %v2489
        %v2654 = vunpack.c.l.b16 %v2490
        %v2655 = vunpack.c.h.b16 %v2490
        %v2656 = vunpack.c.l.b16 %v2491
        %v2657 = vunpack.c.h.b16 %v2491
        %v2658 = vunpack.c.l.b16 %v2492
        %v2659 = vunpack.c.h.b16 %v2492
        %v2660 = vunpack.c.l.b16 %v2493
        %v2661 = vunpack.c.h.b16 %v2493
        %v2662 = vunpack.c.l.b16 %v2494
        %v2663 = vunpack.c.h.b16 %v2494
        %v2664 = vunpack.c.l.b16 %v2495
        %v2665 = vunpack.c.h.b16 %v2495
        %v2666 = vunpack.c.l.b16 %v2496
        %v2667 = vunpack.c.h.b16 %v2496
        %v2668 = vunpack.c.l.b16 %v2497
        %v2669 = vunpack.c.h.b16 %v2497
        %v2670 = vunpack.c.l.b16 %v2498
        %v2671 = vunpack.c.h.b16 %v2498
        %v2672 = vunpack.c.l.b16 %v2499
        %v2673 = vunpack.c.h.b16 %v2499
        %v2674 = vunpack.c.l.b16 %v2500
        %v2675 = vunpack.c.h.b16 %v2500
        %v2676 = vunpack.c.l.b16 %v2501
        %v2677 = vunpack.c.h.b16 %v2501
        %v2678 = vunpack.c.l.b16 %v2502
        %v2679 = vunpack.c.h.b16 %v2502
        %v2680 = vunpack.c.l.b16 %v2503
        %v2681 = vunpack.c.h.b16 %v2503
        %v2682 = vunpack.c.l.b16 %v2504
        %v2683 = vunpack.c.h.b16 %v2504
        %v2684 = vunpack.c.l.b16 %v2505
        %v2685 = vunpack.c.h.b16 %v2505
        %v2686 = vunpack.c.l.b16 %v2506
        %v2687 = vunpack.c.h.b16 %v2506
        %v2688 = vunpack.c.l.b16 %v2507
        %v2689 = vunpack.c.h.b16 %v2507
        %v2690 = vunpack.c.l.b16 %v2508
        %v2691 = vunpack.c.h.b16 %v2508
        %v2692 = vunpack.c.l.b16 %v2509
        %v2693 = vunpack.c.h.b16 %v2509
        %v2694 = vunpack.c.l.b16 %v2510
        %v2695 = vunpack.c.h.b16 %v2510
        %v2696 = vunpack.c.l.b16 %v2511
        %v2697 = vunpack.c.h.b16 %v2511
        %v2698 = vunpack.c.l.b16 %v2512
        %v2699 = vunpack.c.h.b16 %v2512
        %v2700 = vunpack.c.l.b16 %v2513
        %v2701 = vunpack.c.h.b16 %v2513
        %v2702 = vunpack.c.l.b16 %v2514
        %v2703 = vunpack.c.h.b16 %v2514
        %v2704 = vunpack.c.l.b16 %v2515
        %v2705 = vunpack.c.h.b16 %v2515
        %v2706 = vunpack.c.l.b16 %v2516
        %v2707 = vunpack.c.h.b16 %v2516
        %v2708 = vunpack.c.l.b16 %v2517
        %v2709 = vunpack.c.h.b16 %v2517
        %v2710 = vunpack.c.l.b16 %v2518
        %v2711 = vunpack.c.h.b16 %v2518
        %v2712 = vunpack.c.l.b16 %v2519
        %v2713 = vunpack.c.h.b16 %v2519
        %v2714 = vunpack.c.l.b16 %v2520
        %v2715 = vunpack.c.h.b16 %v2520
        %v2716 = vunpack.c.l.b16 %v2521
        %v2717 = vunpack.c.h.b16 %v2521
        %v2718 = vunpack.c.l.b16 %v2522
        %v2719 = vunpack.c.h.b16 %v2522
        %v2720 = vunpack.c.l.b16 %v2523
        %v2721 = vunpack.c.h.b16 %v2523
        %v2722 = vunpack.c.l.b16 %v2524
        %v2723 = vunpack.c.h.b16 %v2524
        %v2724 = vunpack.c.l.b16 %v2525
        %v2725 = vunpack.c.h.b16 %v2525
        %v2726 = vunpack.c.l.b16 %v2526
        %v2727 = vunpack.c.h.b16 %v2526
        %v2728 = vunpack.c.l.b16 %v2527
        %v2729 = vunpack.c.h.b16 %v2527
        %v2730 = vunpack.c.l.b16 %v2528
        %v2731 = vunpack.c.h.b16 %v2528
        %v2732 = vunpack.c.l.b16 %v2529
        %v2733 = vunpack.c.h.b16 %v2529
        %v2734 = vunpack.c.l.b16 %v2530
        %v2735 = vunpack.c.h.b16 %v2530
        %v2736 = vunpack.c.l.b16 %v2531
        %v2737 = vunpack.c.h.b16 %v2531
        %v2738 = vunpack.c.l.b16 %v2532
        %v2739 = vunpack.c.h.b16 %v2532
        %v2740 = vunpack.c.l.b16 %v2533
        %v2741 = vunpack.c.h.b16 %v2533
        %v2742 = vunpack.c.l.b16 %v2534
        %v2743 = vunpack.c.h.b16 %v2534
        %v2744 = vunpack.c.l.b16 %v2535
        %v2745 = vunpack.c.h.b16 %v2535
        %v2746 = vunpack.c.l.b16 %v2536
        %v2747 = vunpack.c.h.b16 %v2536
        %v2748 = vunpack.c.l.b16 %v2537
        %v2749 = vunpack.c.h.b16 %v2537
        %v2750 = vunpack.c.l.b16 %v2538
        %v2751 = vunpack.c.h.b16 %v2538
        %v2752 = vunpack.c.l.b16 %v2539
        %v2753 = vunpack.c.h.b16 %v2539
        %v2754 = vpack.c.b16 %v2630, %v2626
        %v2755 = vpack.c.b16 %v2631, %v2627
        %v2756 = vpack.c.b16 %v2632, %v2628
        %v2757 = vpack.c.b16 %v2633, %v2629
        %v2758 = vpack.c.b16 %v2638, %v2634
        %v2759 = vpack.c.b16 %v2639, %v2635
        %v2760 = vpack.c.b16 %v2640, %v2636
        %v2761 = vpack.c.b16 %v2641, %v2637
        %v2762 = vpack.c.b16 %v2646, %v2642
        %v2763 = vpack.c.b16 %v2647, %v2643
        %v2764 = vpack.c.b16 %v2648, %v2644
        %v2765 = vpack.c.b16 %v2649, %v2645
        %v2766 = vpack.c.b16 %v2654, %v2650
        %v2767 = vpack.c.b16 %v2655, %v2651
        %v2768 = vpack.c.b16 %v2656, %v2652
        %v2769 = vpack.c.b16 %v2657, %v2653
        %v2770 = vpack.c.b16 %v2662, %v2658
        %v2771 = vpack.c.b16 %v2663, %v2659
        %v2772 = vpack.c.b16 %v2664, %v2660
        %v2773 = vpack.c.b16 %v2665, %v2661
        %v2774 = vpack.c.b16 %v2670, %v2666
        %v2775 = vpack.c.b16 %v2671, %v2667
        %v2776 = vpack.c.b16 %v2672, %v2668
        %v2777 = vpack.c.b16 %v2673, %v2669
        %v2778 = vpack.c.b16 %v2678, %v2674
        %v2779 = vpack.c.b16 %v2679, %v2675
        %v2780 = vpack.c.b16 %v2680, %v2676
        %v2781 = vpack.c.b16 %v2681, %v2677
        %v2782 = vpack.c.b16 %v2686, %v2682
        %v2783 = vpack.c.b16 %v2687, %v2683
        %v2784 = vpack.c.b16 %v2688, %v2684
        %v2785 = vpack.c.b16 %v2689, %v2685
        %v2786 = vpack.c.b16 %v2694, %v2690
        %v2787 = vpack.c.b16 %v2695, %v2691
        %v2788 = vpack.c.b16 %v2696, %v2692
        %v2789 = vpack.c.b16 %v2697, %v2693
        %v2790 = vpack.c.b16 %v2702, %v2698
        %v2791 = vpack.c.b16 %v2703, %v2699
        %v2792 = vpack.c.b16 %v2704, %v2700
        %v2793 = vpack.c.b16 %v2705, %v2701
        %v2794 = vpack.c.b16 %v2710, %v2706
        %v2795 = vpack.c.b16 %v2711, %v2707
        %v2796 = vpack.c.b16 %v2712, %v2708
        %v2797 = vpack.c.b16 %v2713, %v2709
        %v2798 = vpack.c.b16 %v2718, %v2714
        %v2799 = vpack.c.b16 %v2719, %v2715
        %v2800 = vpack.c.b16 %v2720, %v2716
        %v2801 = vpack.c.b16 %v2721, %v2717
        %v2802 = vpack.c.b16 %v2726, %v2722
        %v2803 = vpack.c.b16 %v2727, %v2723
        %v2804 = vpack.c.b16 %v2728, %v2724
        %v2805 = vpack.c.b16 %v2729, %v2725
        %v2806 = vpack.c.b16 %v2734, %v2730
        %v2807 = vpack.c.b16 %v2735, %v2731
        %v2808 = vpack.c.b16 %v2736, %v2732
        %v2809 = vpack.c.b16 %v2737, %v2733
        %v2810 = vpack.c.b16 %v2742, %v2738
        %v2811 = vpack.c.b16 %v2743, %v2739
        %v2812 = vpack.c.b16 %v2744, %v2740
        %v2813 = vpack.c.b16 %v2745, %v2741
        %v2814 = vpack.c.b16 %v2750, %v2746
        %v2815 = vpack.c.b16 %v2751, %v2747
        %v2816 = vpack.c.b16 %v2752, %v2748
        %v2817 = vpack.c.b16 %v2753, %v2749
        %2882 = vmatprep.subr.bf16.mxu0 %v2783
        %2883 = vmatpush1.bf16.msra.mxu0 %v2782
        %2884 = vmatprep.subr.bf16.mxu0 %v2779
        %2885 = vmatpush1.bf16.msra.mxu0 %v2778
        %2886 = vmatprep.subr.bf16.mxu0 %v2775
        %2887 = vmatpush1.bf16.msra.mxu0 %v2774
        %2888 = vmatprep.subr.bf16.mxu0 %v2771
        %2889 = vmatpush1.bf16.msra.mxu0 %v2770
        %2890 = vmatprep.subr.bf16.mxu0 %v2767
        %2891 = vmatpush1.bf16.msra.mxu0 %v2766
        %2892 = vmatprep.subr.bf16.mxu0 %v2763
        %2893 = vmatpush1.bf16.msra.mxu0 %v2762
        %2894 = vmatprep.subr.bf16.mxu0 %v2759
        %2895 = vmatpush1.bf16.msra.mxu0 %v2758
        %2896 = vmatprep.subr.bf16.mxu0 %v2755
        %2897 = vmatpush1.bf16.msra.mxu0 %v2754
        %2898 = vmatprep.subr.bf16.mxu0 %v2815
        %2899 = vmatpush2.bf16.msra.mxu0 %v2814
        %2900 = vmatprep.subr.bf16.mxu0 %v2811
        %2901 = vmatpush2.bf16.msra.mxu0 %v2810
        %2902 = vmatprep.subr.bf16.mxu0 %v2807
        %2903 = vmatpush2.bf16.msra.mxu0 %v2806
        %2904 = vmatprep.subr.bf16.mxu0 %v2803
        %2905 = vmatpush2.bf16.msra.mxu0 %v2802
        %2906 = vmatprep.subr.bf16.mxu0 %v2799
        %2907 = vmatpush2.bf16.msra.mxu0 %v2798
        %2908 = vmatprep.subr.bf16.mxu0 %v2795
        %2909 = vmatpush2.bf16.msra.mxu0 %v2794
        %2910 = vmatprep.subr.bf16.mxu0 %v2791
        %2911 = vmatpush2.bf16.msra.mxu0 %v2790
        %2912 = vmatprep.subr.bf16.mxu0 %v2787
        %2913 = vmatpush2.bf16.msra.mxu0 %v2786
        %2914 = vmatprep.mubr.bf16.mxu0 %v2475
        %2915 = vmatmul.mubr.bf16.gmra.mxu0 %v2474
        %v2916 = vpop.f32.mrf.mxu0
        %v2917 = vadd.f32 %v2545, %v2916
        %v2918 = vpop.f32.mrf.mxu0
        %v2919 = vadd.f32 %v2549, %v2918
        %v2920 = vpop.f32.mrf.mxu0
        %v2921 = vpop.f32.mrf.mxu0
        %2922 = vdwg.mxu0
        %2923 = vmatprep.subr.bf16.mxu0 %v2785
        %2924 = vmatpush1.bf16.msra.mxu0 %v2784
        %2925 = vmatprep.subr.bf16.mxu0 %v2781
        %2926 = vmatpush1.bf16.msra.mxu0 %v2780
        %2927 = vmatprep.subr.bf16.mxu0 %v2777
        %2928 = vmatpush1.bf16.msra.mxu0 %v2776
        %2929 = vmatprep.subr.bf16.mxu0 %v2773
        %2930 = vmatpush1.bf16.msra.mxu0 %v2772
        %2931 = vmatprep.subr.bf16.mxu0 %v2769
        %2932 = vmatpush1.bf16.msra.mxu0 %v2768
        %2933 = vmatprep.subr.bf16.mxu0 %v2765
        %2934 = vmatpush1.bf16.msra.mxu0 %v2764
        %2935 = vmatprep.subr.bf16.mxu0 %v2761
        %2936 = vmatpush1.bf16.msra.mxu0 %v2760
        %2937 = vmatprep.subr.bf16.mxu0 %v2757
        %2938 = vmatpush1.bf16.msra.mxu0 %v2756
        %2939 = vmatprep.subr.bf16.mxu0 %v2817
        %2940 = vmatpush2.bf16.msra.mxu0 %v2816
        %2941 = vmatprep.subr.bf16.mxu0 %v2813
        %2942 = vmatpush2.bf16.msra.mxu0 %v2812
        %2943 = vmatprep.subr.bf16.mxu0 %v2809
        %2944 = vmatpush2.bf16.msra.mxu0 %v2808
        %2945 = vmatprep.subr.bf16.mxu0 %v2805
        %2946 = vmatpush2.bf16.msra.mxu0 %v2804
        %2947 = vmatprep.subr.bf16.mxu0 %v2801
        %2948 = vmatpush2.bf16.msra.mxu0 %v2800
        %2949 = vmatprep.subr.bf16.mxu0 %v2797
        %2950 = vmatpush2.bf16.msra.mxu0 %v2796
        %2951 = vmatprep.subr.bf16.mxu0 %v2793
        %2952 = vmatpush2.bf16.msra.mxu0 %v2792
        %2953 = vmatprep.subr.bf16.mxu0 %v2789
        %2954 = vmatpush2.bf16.msra.mxu0 %v2788
        %2955 = vmatprep.mubr.bf16.mxu0 %v2475
        %2956 = vmatmul.mubr.bf16.gmra.mxu0 %v2474
        %v2957 = vpop.f32.mrf.mxu0
        %v2958 = vadd.f32 %v2553, %v2957
        %v2959 = vpop.f32.mrf.mxu0
        %v2960 = vadd.f32 %v2557, %v2959
        %v2961 = vpop.f32.mrf.mxu0
        %v2962 = vpop.f32.mrf.mxu0
        %2963 = vdwg.mxu0
        %v2964 = vmul.f32 %v2917, %v2917
        %v2965 = vmul.f32 %v2919, %v2919
        %v2966 = vmul.f32 %v2958, %v2958
        %v2967 = vmul.f32 %v2960, %v2960
        %v2968 = vmul.f32 %v2917, %v2964
        %v2969 = vmul.f32 %v2919, %v2965
        %v2970 = vmul.f32 %v2958, %v2966
        %v2971 = vmul.f32 %v2960, %v2967
        %v2972 = vmul.f32 %v2968, 0.044715
        %v2973 = vmul.f32 %v2969, 0.044715
        %v2974 = vmul.f32 %v2970, 0.044715
        %v2975 = vmul.f32 %v2971, 0.044715
        %v2976 = vadd.f32 %v2917, %v2972
        %v2977 = vadd.f32 %v2919, %v2973
        %v2978 = vadd.f32 %v2958, %v2974
        %v2979 = vadd.f32 %v2960, %v2975
        %v2980 = vmul.f32 %v2976, 0.7978846
        %v2981 = vmul.f32 %v2977, 0.7978846
        %v2982 = vmul.f32 %v2978, 0.7978846
        %v2983 = vmul.f32 %v2979, 0.7978846
        %v2984 = vtanh.pop %v2980
        %v2985 = vtanh.pop %v2981
        %v2986 = vtanh.pop %v2982
        %v2987 = vtanh.pop %v2983
        %v2988 = vadd.f32 %v2984, 1.0
        %v2989 = vadd.f32 %v2985, 1.0
        %v2990 = vadd.f32 %v2986, 1.0
        %v2991 = vadd.f32 %v2987, 1.0
        %v2992 = vmul.f32 %v2988, 0.5
        %v2993 = vmul.f32 %v2989, 0.5
        %v2994 = vmul.f32 %v2990, 0.5
        %v2995 = vmul.f32 %v2991, 0.5
        %v2996 = vmul.f32 %v2917, %v2992
        %v2997 = vmul.f32 %v2919, %v2993
        %v2998 = vmul.f32 %v2958, %v2994
        %v2999 = vmul.f32 %v2960, %v2995
        %v3000 = vpack.c.bf16 %v2996, %v2996
        %v3001 = vpack.c.bf16 %v2997, %v2997
        %v3002 = vpack.c.bf16 %v2998, %v2998
        %v3003 = vpack.c.bf16 %v2999, %v2999
        %v3004 = vld [vmem:[%s921] sm:$0xff]
        %v3005 = vld [vmem:[%s921 + $0x8] sm:$0xff]
        %v3006 = vld [vmem:[%s921 + $0x10] sm:$0xff]
        %v3007 = vld [vmem:[%s921 + $0x18] sm:$0xff]
        %v3008 = vld [vmem:[%s921 + $0x20] sm:$0xff]
        %v3009 = vld [vmem:[%s921 + $0x28] sm:$0xff]
        %v3010 = vld [vmem:[%s921 + $0x30] sm:$0xff]
        %v3011 = vld [vmem:[%s921 + $0x38] sm:$0xff]
        %v3012 = vld [vmem:[%s921 + $0x40] sm:$0xff]
        %v3013 = vld [vmem:[%s921 + $0x48] sm:$0xff]
        %v3014 = vld [vmem:[%s921 + $0x50] sm:$0xff]
        %v3015 = vld [vmem:[%s921 + $0x58] sm:$0xff]
        %v3016 = vld [vmem:[%s921 + $0x60] sm:$0xff]
        %v3017 = vld [vmem:[%s921 + $0x68] sm:$0xff]
        %v3018 = vld [vmem:[%s921 + $0x70] sm:$0xff]
        %v3019 = vld [vmem:[%s921 + $0x78] sm:$0xff]
        %v3020 = vld [vmem:[%s921 + $0x80] sm:$0xff]
        %v3021 = vld [vmem:[%s921 + $0x88] sm:$0xff]
        %v3022 = vld [vmem:[%s921 + $0x90] sm:$0xff]
        %v3023 = vld [vmem:[%s921 + $0x98] sm:$0xff]
        %v3024 = vld [vmem:[%s921 + $0xa0] sm:$0xff]
        %v3025 = vld [vmem:[%s921 + $0xa8] sm:$0xff]
        %v3026 = vld [vmem:[%s921 + $0xb0] sm:$0xff]
        %v3027 = vld [vmem:[%s921 + $0xb8] sm:$0xff]
        %v3028 = vld [vmem:[%s921 + $0xc0] sm:$0xff]
        %v3029 = vld [vmem:[%s921 + $0xc8] sm:$0xff]
        %v3030 = vld [vmem:[%s921 + $0xd0] sm:$0xff]
        %v3031 = vld [vmem:[%s921 + $0xd8] sm:$0xff]
        %v3032 = vld [vmem:[%s921 + $0xe0] sm:$0xff]
        %v3033 = vld [vmem:[%s921 + $0xe8] sm:$0xff]
        %v3034 = vld [vmem:[%s921 + $0xf0] sm:$0xff]
        %v3035 = vld [vmem:[%s921 + $0xf8] sm:$0xff]
        %v3036 = vld [vmem:[%s921 + $0x100] sm:$0xff]
        %v3037 = vld [vmem:[%s921 + $0x108] sm:$0xff]
        %v3038 = vld [vmem:[%s921 + $0x110] sm:$0xff]
        %v3039 = vld [vmem:[%s921 + $0x118] sm:$0xff]
        %v3040 = vld [vmem:[%s921 + $0x120] sm:$0xff]
        %v3041 = vld [vmem:[%s921 + $0x128] sm:$0xff]
        %v3042 = vld [vmem:[%s921 + $0x130] sm:$0xff]
        %v3043 = vld [vmem:[%s921 + $0x138] sm:$0xff]
        %v3044 = vld [vmem:[%s921 + $0x140] sm:$0xff]
        %v3045 = vld [vmem:[%s921 + $0x148] sm:$0xff]
        %v3046 = vld [vmem:[%s921 + $0x150] sm:$0xff]
        %v3047 = vld [vmem:[%s921 + $0x158] sm:$0xff]
        %v3048 = vld [vmem:[%s921 + $0x160] sm:$0xff]
        %v3049 = vld [vmem:[%s921 + $0x168] sm:$0xff]
        %v3050 = vld [vmem:[%s921 + $0x170] sm:$0xff]
        %v3051 = vld [vmem:[%s921 + $0x178] sm:$0xff]
        %v3052 = vld [vmem:[%s921 + $0x180] sm:$0xff]
        %v3053 = vld [vmem:[%s921 + $0x188] sm:$0xff]
        %v3054 = vld [vmem:[%s921 + $0x190] sm:$0xff]
        %v3055 = vld [vmem:[%s921 + $0x198] sm:$0xff]
        %v3056 = vld [vmem:[%s921 + $0x1a0] sm:$0xff]
        %v3057 = vld [vmem:[%s921 + $0x1a8] sm:$0xff]
        %v3058 = vld [vmem:[%s921 + $0x1b0] sm:$0xff]
        %v3059 = vld [vmem:[%s921 + $0x1b8] sm:$0xff]
        %v3060 = vld [vmem:[%s921 + $0x1c0] sm:$0xff]
        %v3061 = vld [vmem:[%s921 + $0x1c8] sm:$0xff]
        %v3062 = vld [vmem:[%s921 + $0x1d0] sm:$0xff]
        %v3063 = vld [vmem:[%s921 + $0x1d8] sm:$0xff]
        %v3064 = vld [vmem:[%s921 + $0x1e0] sm:$0xff]
        %v3065 = vld [vmem:[%s921 + $0x1e8] sm:$0xff]
        %v3066 = vld [vmem:[%s921 + $0x1f0] sm:$0xff]
        %v3067 = vld [vmem:[%s921 + $0x1f8] sm:$0xff]
        %v3068 = vld [vmem:[%s1059] sm:$0x3]
        %v3070 = vlaneseq
        %v3071 = vshrl.u32 %v3070, 7
        %v3072 = vsub.s32 0, %v3071
        %v3073 = vrot.slane %v3068, %v3072
        %v3074 = vlaneseq
        %v3075 = vshrl.u32 %v3074, 7
        %v3076 = vsub.s32 1, %v3075
        %v3077 = vrot.slane %v3068, %v3076
        %v3144 = vunpack.c.l.b16 %v3004
        %v3145 = vunpack.c.h.b16 %v3004
        %v3146 = vunpack.c.l.b16 %v3005
        %v3147 = vunpack.c.h.b16 %v3005
        %v3148 = vunpack.c.l.b16 %v3006
        %v3149 = vunpack.c.h.b16 %v3006
        %v3150 = vunpack.c.l.b16 %v3007
        %v3151 = vunpack.c.h.b16 %v3007
        %v3152 = vunpack.c.l.b16 %v3008
        %v3153 = vunpack.c.h.b16 %v3008
        %v3154 = vunpack.c.l.b16 %v3009
        %v3155 = vunpack.c.h.b16 %v3009
        %v3156 = vunpack.c.l.b16 %v3010
        %v3157 = vunpack.c.h.b16 %v3010
        %v3158 = vunpack.c.l.b16 %v3011
        %v3159 = vunpack.c.h.b16 %v3011
        %v3160 = vunpack.c.l.b16 %v3012
        %v3161 = vunpack.c.h.b16 %v3012
        %v3162 = vunpack.c.l.b16 %v3013
        %v3163 = vunpack.c.h.b16 %v3013
        %v3164 = vunpack.c.l.b16 %v3014
        %v3165 = vunpack.c.h.b16 %v3014
        %v3166 = vunpack.c.l.b16 %v3015
        %v3167 = vunpack.c.h.b16 %v3015
        %v3168 = vunpack.c.l.b16 %v3016
        %v3169 = vunpack.c.h.b16 %v3016
        %v3170 = vunpack.c.l.b16 %v3017
        %v3171 = vunpack.c.h.b16 %v3017
        %v3172 = vunpack.c.l.b16 %v3018
        %v3173 = vunpack.c.h.b16 %v3018
        %v3174 = vunpack.c.l.b16 %v3019
        %v3175 = vunpack.c.h.b16 %v3019
        %v3176 = vunpack.c.l.b16 %v3020
        %v3177 = vunpack.c.h.b16 %v3020
        %v3178 = vunpack.c.l.b16 %v3021
        %v3179 = vunpack.c.h.b16 %v3021
        %v3180 = vunpack.c.l.b16 %v3022
        %v3181 = vunpack.c.h.b16 %v3022
        %v3182 = vunpack.c.l.b16 %v3023
        %v3183 = vunpack.c.h.b16 %v3023
        %v3184 = vunpack.c.l.b16 %v3024
        %v3185 = vunpack.c.h.b16 %v3024
        %v3186 = vunpack.c.l.b16 %v3025
        %v3187 = vunpack.c.h.b16 %v3025
        %v3188 = vunpack.c.l.b16 %v3026
        %v3189 = vunpack.c.h.b16 %v3026
        %v3190 = vunpack.c.l.b16 %v3027
        %v3191 = vunpack.c.h.b16 %v3027
        %v3192 = vunpack.c.l.b16 %v3028
        %v3193 = vunpack.c.h.b16 %v3028
        %v3194 = vunpack.c.l.b16 %v3029
        %v3195 = vunpack.c.h.b16 %v3029
        %v3196 = vunpack.c.l.b16 %v3030
        %v3197 = vunpack.c.h.b16 %v3030
        %v3198 = vunpack.c.l.b16 %v3031
        %v3199 = vunpack.c.h.b16 %v3031
        %v3200 = vunpack.c.l.b16 %v3032
        %v3201 = vunpack.c.h.b16 %v3032
        %v3202 = vunpack.c.l.b16 %v3033
        %v3203 = vunpack.c.h.b16 %v3033
        %v3204 = vunpack.c.l.b16 %v3034
        %v3205 = vunpack.c.h.b16 %v3034
        %v3206 = vunpack.c.l.b16 %v3035
        %v3207 = vunpack.c.h.b16 %v3035
        %v3208 = vunpack.c.l.b16 %v3036
        %v3209 = vunpack.c.h.b16 %v3036
        %v3210 = vunpack.c.l.b16 %v3037
        %v3211 = vunpack.c.h.b16 %v3037
        %v3212 = vunpack.c.l.b16 %v3038
        %v3213 = vunpack.c.h.b16 %v3038
        %v3214 = vunpack.c.l.b16 %v3039
        %v3215 = vunpack.c.h.b16 %v3039
        %v3216 = vunpack.c.l.b16 %v3040
        %v3217 = vunpack.c.h.b16 %v3040
        %v3218 = vunpack.c.l.b16 %v3041
        %v3219 = vunpack.c.h.b16 %v3041
        %v3220 = vunpack.c.l.b16 %v3042
        %v3221 = vunpack.c.h.b16 %v3042
        %v3222 = vunpack.c.l.b16 %v3043
        %v3223 = vunpack.c.h.b16 %v3043
        %v3224 = vunpack.c.l.b16 %v3044
        %v3225 = vunpack.c.h.b16 %v3044
        %v3226 = vunpack.c.l.b16 %v3045
        %v3227 = vunpack.c.h.b16 %v3045
        %v3228 = vunpack.c.l.b16 %v3046
        %v3229 = vunpack.c.h.b16 %v3046
        %v3230 = vunpack.c.l.b16 %v3047
        %v3231 = vunpack.c.h.b16 %v3047
        %v3232 = vunpack.c.l.b16 %v3048
        %v3233 = vunpack.c.h.b16 %v3048
        %v3234 = vunpack.c.l.b16 %v3049
        %v3235 = vunpack.c.h.b16 %v3049
        %v3236 = vunpack.c.l.b16 %v3050
        %v3237 = vunpack.c.h.b16 %v3050
        %v3238 = vunpack.c.l.b16 %v3051
        %v3239 = vunpack.c.h.b16 %v3051
        %v3240 = vunpack.c.l.b16 %v3052
        %v3241 = vunpack.c.h.b16 %v3052
        %v3242 = vunpack.c.l.b16 %v3053
        %v3243 = vunpack.c.h.b16 %v3053
        %v3244 = vunpack.c.l.b16 %v3054
        %v3245 = vunpack.c.h.b16 %v3054
        %v3246 = vunpack.c.l.b16 %v3055
        %v3247 = vunpack.c.h.b16 %v3055
        %v3248 = vunpack.c.l.b16 %v3056
        %v3249 = vunpack.c.h.b16 %v3056
        %v3250 = vunpack.c.l.b16 %v3057
        %v3251 = vunpack.c.h.b16 %v3057
        %v3252 = vunpack.c.l.b16 %v3058
        %v3253 = vunpack.c.h.b16 %v3058
        %v3254 = vunpack.c.l.b16 %v3059
        %v3255 = vunpack.c.h.b16 %v3059
        %v3256 = vunpack.c.l.b16 %v3060
        %v3257 = vunpack.c.h.b16 %v3060
        %v3258 = vunpack.c.l.b16 %v3061
        %v3259 = vunpack.c.h.b16 %v3061
        %v3260 = vunpack.c.l.b16 %v3062
        %v3261 = vunpack.c.h.b16 %v3062
        %v3262 = vunpack.c.l.b16 %v3063
        %v3263 = vunpack.c.h.b16 %v3063
        %v3264 = vunpack.c.l.b16 %v3064
        %v3265 = vunpack.c.h.b16 %v3064
        %v3266 = vunpack.c.l.b16 %v3065
        %v3267 = vunpack.c.h.b16 %v3065
        %v3268 = vunpack.c.l.b16 %v3066
        %v3269 = vunpack.c.h.b16 %v3066
        %v3270 = vunpack.c.l.b16 %v3067
        %v3271 = vunpack.c.h.b16 %v3067
        %v3272 = vpack.c.b16 %v3146, %v3144
        %v3273 = vpack.c.b16 %v3147, %v3145
        %v3274 = vpack.c.b16 %v3150, %v3148
        %v3275 = vpack.c.b16 %v3151, %v3149
        %v3276 = vpack.c.b16 %v3154, %v3152
        %v3277 = vpack.c.b16 %v3155, %v3153
        %v3278 = vpack.c.b16 %v3158, %v3156
        %v3279 = vpack.c.b16 %v3159, %v3157
        %v3280 = vpack.c.b16 %v3162, %v3160
        %v3281 = vpack.c.b16 %v3163, %v3161
        %v3282 = vpack.c.b16 %v3166, %v3164
        %v3283 = vpack.c.b16 %v3167, %v3165
        %v3284 = vpack.c.b16 %v3170, %v3168
        %v3285 = vpack.c.b16 %v3171, %v3169
        %v3286 = vpack.c.b16 %v3174, %v3172
        %v3287 = vpack.c.b16 %v3175, %v3173
        %v3288 = vpack.c.b16 %v3178, %v3176
        %v3289 = vpack.c.b16 %v3179, %v3177
        %v3290 = vpack.c.b16 %v3182, %v3180
        %v3291 = vpack.c.b16 %v3183, %v3181
        %v3292 = vpack.c.b16 %v3186, %v3184
        %v3293 = vpack.c.b16 %v3187, %v3185
        %v3294 = vpack.c.b16 %v3190, %v3188
        %v3295 = vpack.c.b16 %v3191, %v3189
        %v3296 = vpack.c.b16 %v3194, %v3192
        %v3297 = vpack.c.b16 %v3195, %v3193
        %v3298 = vpack.c.b16 %v3198, %v3196
        %v3299 = vpack.c.b16 %v3199, %v3197
        %v3300 = vpack.c.b16 %v3202, %v3200
        %v3301 = vpack.c.b16 %v3203, %v3201
        %v3302 = vpack.c.b16 %v3206, %v3204
        %v3303 = vpack.c.b16 %v3207, %v3205
        %v3304 = vpack.c.b16 %v3210, %v3208
        %v3305 = vpack.c.b16 %v3211, %v3209
        %v3306 = vpack.c.b16 %v3214, %v3212
        %v3307 = vpack.c.b16 %v3215, %v3213
        %v3308 = vpack.c.b16 %v3218, %v3216
        %v3309 = vpack.c.b16 %v3219, %v3217
        %v3310 = vpack.c.b16 %v3222, %v3220
        %v3311 = vpack.c.b16 %v3223, %v3221
        %v3312 = vpack.c.b16 %v3226, %v3224
        %v3313 = vpack.c.b16 %v3227, %v3225
        %v3314 = vpack.c.b16 %v3230, %v3228
        %v3315 = vpack.c.b16 %v3231, %v3229
        %v3316 = vpack.c.b16 %v3234, %v3232
        %v3317 = vpack.c.b16 %v3235, %v3233
        %v3318 = vpack.c.b16 %v3238, %v3236
        %v3319 = vpack.c.b16 %v3239, %v3237
        %v3320 = vpack.c.b16 %v3242, %v3240
        %v3321 = vpack.c.b16 %v3243, %v3241
        %v3322 = vpack.c.b16 %v3246, %v3244
        %v3323 = vpack.c.b16 %v3247, %v3245
        %v3324 = vpack.c.b16 %v3250, %v3248
        %v3325 = vpack.c.b16 %v3251, %v3249
        %v3326 = vpack.c.b16 %v3254, %v3252
        %v3327 = vpack.c.b16 %v3255, %v3253
        %v3328 = vpack.c.b16 %v3258, %v3256
        %v3329 = vpack.c.b16 %v3259, %v3257
        %v3330 = vpack.c.b16 %v3262, %v3260
        %v3331 = vpack.c.b16 %v3263, %v3261
        %v3332 = vpack.c.b16 %v3266, %v3264
        %v3333 = vpack.c.b16 %v3267, %v3265
        %v3334 = vpack.c.b16 %v3270, %v3268
        %v3335 = vpack.c.b16 %v3271, %v3269
        %3400 = vmatprep.subr.bf16.mxu0 %v3287
        %3401 = vmatpush1.bf16.msra.mxu0 %v3286
        %3402 = vmatprep.subr.bf16.mxu0 %v3285
        %3403 = vmatpush1.bf16.msra.mxu0 %v3284
        %3404 = vmatprep.subr.bf16.mxu0 %v3283
        %3405 = vmatpush1.bf16.msra.mxu0 %v3282
        %3406 = vmatprep.subr.bf16.mxu0 %v3281
        %3407 = vmatpush1.bf16.msra.mxu0 %v3280
        %3408 = vmatprep.subr.bf16.mxu0 %v3279
        %3409 = vmatpush1.bf16.msra.mxu0 %v3278
        %3410 = vmatprep.subr.bf16.mxu0 %v3277
        %3411 = vmatpush1.bf16.msra.mxu0 %v3276
        %3412 = vmatprep.subr.bf16.mxu0 %v3275
        %3413 = vmatpush1.bf16.msra.mxu0 %v3274
        %3414 = vmatprep.subr.bf16.mxu0 %v3273
        %3415 = vmatpush1.bf16.msra.mxu0 %v3272
        %3416 = vmatprep.subr.bf16.mxu0 %v3303
        %3417 = vmatpush2.bf16.msra.mxu0 %v3302
        %3418 = vmatprep.subr.bf16.mxu0 %v3301
        %3419 = vmatpush2.bf16.msra.mxu0 %v3300
        %3420 = vmatprep.subr.bf16.mxu0 %v3299
        %3421 = vmatpush2.bf16.msra.mxu0 %v3298
        %3422 = vmatprep.subr.bf16.mxu0 %v3297
        %3423 = vmatpush2.bf16.msra.mxu0 %v3296
        %3424 = vmatprep.subr.bf16.mxu0 %v3295
        %3425 = vmatpush2.bf16.msra.mxu0 %v3294
        %3426 = vmatprep.subr.bf16.mxu0 %v3293
        %3427 = vmatpush2.bf16.msra.mxu0 %v3292
        %3428 = vmatprep.subr.bf16.mxu0 %v3291
        %3429 = vmatpush2.bf16.msra.mxu0 %v3290
        %3430 = vmatprep.subr.bf16.mxu0 %v3289
        %3431 = vmatpush2.bf16.msra.mxu0 %v3288
        %3432 = vmatprep.mubr.bf16.mxu0 %v3001
        %3433 = vmatmul.mubr.bf16.gmra.mxu0 %v3000
        %v3434 = vpop.f32.mrf.mxu0
        %v3435 = vadd.f32 %v3073, %v3434
        %v3436 = vpop.f32.mrf.mxu0
        %v3437 = vadd.f32 %v3077, %v3436
        %v3438 = vpop.f32.mrf.mxu0
        %v3439 = vpop.f32.mrf.mxu0
        %3440 = vdwg.mxu0
        %3441 = vmatprep.subr.bf16.mxu0 %v3319
        %3442 = vmatpush1.bf16.msra.mxu0 %v3318
        %3443 = vmatprep.subr.bf16.mxu0 %v3317
        %3444 = vmatpush1.bf16.msra.mxu0 %v3316
        %3445 = vmatprep.subr.bf16.mxu0 %v3315
        %3446 = vmatpush1.bf16.msra.mxu0 %v3314
        %3447 = vmatprep.subr.bf16.mxu0 %v3313
        %3448 = vmatpush1.bf16.msra.mxu0 %v3312
        %3449 = vmatprep.subr.bf16.mxu0 %v3311
        %3450 = vmatpush1.bf16.msra.mxu0 %v3310
        %3451 = vmatprep.subr.bf16.mxu0 %v3309
        %3452 = vmatpush1.bf16.msra.mxu0 %v3308
        %3453 = vmatprep.subr.bf16.mxu0 %v3307
        %3454 = vmatpush1.bf16.msra.mxu0 %v3306
        %3455 = vmatprep.subr.bf16.mxu0 %v3305
        %3456 = vmatpush1.bf16.msra.mxu0 %v3304
        %3457 = vmatprep.subr.bf16.mxu0 %v3335
        %3458 = vmatpush2.bf16.msra.mxu0 %v3334
        %3459 = vmatprep.subr.bf16.mxu0 %v3333
        %3460 = vmatpush2.bf16.msra.mxu0 %v3332
        %3461 = vmatprep.subr.bf16.mxu0 %v3331
        %3462 = vmatpush2.bf16.msra.mxu0 %v3330
        %3463 = vmatprep.subr.bf16.mxu0 %v3329
        %3464 = vmatpush2.bf16.msra.mxu0 %v3328
        %3465 = vmatprep.subr.bf16.mxu0 %v3327
        %3466 = vmatpush2.bf16.msra.mxu0 %v3326
        %3467 = vmatprep.subr.bf16.mxu0 %v3325
        %3468 = vmatpush2.bf16.msra.mxu0 %v3324
        %3469 = vmatprep.subr.bf16.mxu0 %v3323
        %3470 = vmatpush2.bf16.msra.mxu0 %v3322
        %3471 = vmatprep.subr.bf16.mxu0 %v3321
        %3472 = vmatpush2.bf16.msra.mxu0 %v3320
        %3473 = vmatprep.mubr.bf16.mxu0 %v3003
        %3474 = vmatmul.mubr.bf16.gmra.mxu0 %v3002
        %v3475 = vpop.f32.mrf.mxu0
        %v3476 = vadd.f32 %v3435, %v3475
        %v3477 = vpop.f32.mrf.mxu0
        %v3478 = vadd.f32 %v3437, %v3477
        %v3479 = vpop.f32.mrf.mxu0
        %v3480 = vpop.f32.mrf.mxu0
        %3481 = vdwg.mxu0
        %v3482 = vadd.f32 %v2472, %v3476
        %v3483 = vadd.f32 %v2473, %v3478
        %v3484 = vld [vmem:[%s1063] sm:$0x3]
        %v3485 = vld [vmem:[%s930] sm:$0x3]
        %v3486 = vadd.f32 %v3482, %v3483
        %3487 = vadd.xlane.f32.xlu0 %v3486
        %v3488 = vpop.xlane.xlu0 %3487
        %v3489 = vmul.f32 %v3488, %v2434
        %v3490 = vsub.f32 %v3482, %v3489
        %v3491 = vsub.f32 %v3483, %v3489
        %v3492 = vmul.f32 %v3490, %v3490
        %v3493 = vmul.f32 %v3491, %v3491
        %v3494 = vadd.f32 %v3492, %v3493
        %3495 = vadd.xlane.f32.xlu0 %v3494
        %v3496 = vpop.xlane.xlu0 %3495
        %v3497 = vmul.f32 %v3496, %v2434
        %v3498 = vadd.f32 %v3497, 1e-12
        %v3499 = vrsqrt.pop %v3498
        %v3500 = vmul.f32 %v3490, %v3499
        %v3501 = vmul.f32 %v3491, %v3499
        %v3503 = vlaneseq
        %v3504 = vshrl.u32 %v3503, 7
        %v3505 = vsub.s32 0, %v3504
        %v3506 = vrot.slane %v3484, %v3505
        %v3507 = vlaneseq
        %v3508 = vshrl.u32 %v3507, 7
        %v3509 = vsub.s32 1, %v3508
        %v3510 = vrot.slane %v3484, %v3509
        %v3513 = vmul.f32 %v3500, %v3506
        %v3514 = vmul.f32 %v3501, %v3510
        %v3516 = vlaneseq
        %v3517 = vshrl.u32 %v3516, 7
        %v3518 = vsub.s32 0, %v3517
        %v3519 = vrot.slane %v3485, %v3518
        %v3520 = vlaneseq
        %v3521 = vshrl.u32 %v3520, 7
        %v3522 = vsub.s32 1, %v3521
        %v3523 = vrot.slane %v3485, %v3522
        %v3526 = vadd.f32 %v3513, %v3519
        %v3527 = vadd.f32 %v3514, %v3523
        %3528 = vst [vmem:[#allocation2] sm:$0xff] %v3526
        %3529 = vst [vmem:[#allocation2 + $0x8] sm:$0xff] %v3527
        %p3530 = scmp.eq.s32.totalorder %s42, 1
        // Predicated region
        $region153: #{tpu_custom_call.1} parent=91 // pred_check
          %p3531 = pneg %p3530
        $region154: #{tpu_custom_call.1} parent=91 // pred_check_branch
          %3533 = sbr.rel (%p3531) target = $region156
        $region155: #{tpu_custom_call.1} parent=91 // pred_region
          %3534 = vst [vmem:[%s1047] sm:$0xff] %v3526
          %3535 = vst [vmem:[%s1047 + $0x8] sm:$0xff] %v3527
        $region156: #{tpu_custom_call.1} parent=91 // pred_fallthru
          _
        %s3536 = sand.u32 %s510, 1
        %s3537 = scalar_lea.sflag [#allocation5], %s3536
        %s3538 = sand.u32 %s510, 1
        %s3539 = smul.addr %s3538, 16
        %s3540 = scalar_lea.vmem [#allocation21], %s3539
        // Predicated region
        $region157: #{tpu_custom_call.1} parent=91 // pred_check
          %p3541 = pneg %p520
        $region158: #{tpu_custom_call.1} parent=91 // pred_check_branch
          %3543 = sbr.rel (%p3541) target = $region160
        $region159: #{tpu_custom_call.1} parent=91 // pred_region
          %s3545 = ssub.s32 256, 256
          %3546 = vsyncadd %s3537, %s3545
          %s3547 = smul.addr %s41, 2
          %s3548 = smul.addr %s3547, 128
          %s3549 = scalar_lea.hbm %s18, %s3548
          %s3551 = sshll.u32 %s3540, 4
          %s3552 = int_to_ptr.vmem [resolvable:$true] %s3551
          %3554 = dma.vmem_to_hbm [thread:$0]  %s3552, 256, %s3549, %s3537
        $region160: #{tpu_custom_call.1} parent=91 // pred_fallthru
          _
      $region92: #{tpu_custom_call.1} parent=5 // pred_fallthru
        _
      %p3555 = scmp.le.s32.totalorder 2, %s32
      // Predicated region
      $region161: #{tpu_custom_call.1} parent=5 // pred_check
        %p3556 = pneg %p3555
      $region162: #{tpu_custom_call.1} parent=5 // pred_check_branch
        %3558 = sbr.rel (%p3556) target = $region164
      $region163: #{tpu_custom_call.1} parent=5 // pred_region
        %s3559 = ssub.s32 %s32, 2
        // Predicated region
        $region165: #{tpu_custom_call.1} parent=163 // pred_check
          %p3560 = pneg %p526
        $region166: #{tpu_custom_call.1} parent=163 // pred_check_branch
          %3562 = sbr.rel (%p3560) target = $region168
        $region167: #{tpu_custom_call.1} parent=163 // pred_region
          %s3563 = sand.u32 %s511, 1
          %s3564 = scalar_lea.sflag [#allocation5], %s3563
          %s3565 = sand.u32 %s511, 1
          %s3566 = smul.addr %s3565, 16
          %s3567 = scalar_lea.vmem [#allocation21], %s3566
          %3568 = dma.done %s3564, 256
        $region168: #{tpu_custom_call.1} parent=163 // pred_fallthru
          _
      $region164: #{tpu_custom_call.1} parent=5 // pred_fallthru
        _
    $region6: #{tpu_custom_call.1} parent=1 // loop_footer
      %s36 = sadd.s32 1, %s32
    $region7: #{tpu_custom_call.1} parent=1 // loop_footer_branch
      %31 = sbr.rel target = $region3
    $region8: #{tpu_custom_call.1} parent=1 // loop_exit
      _
    %3569 = vsyncpa [#allocation4], 1
    %s3570 = scalar_lea.sflag [#allocation4], 1
    %3571 = vsyncpa %s3570, 1
    %3572 = vsyncpa [#allocation7], 1
    %3573 = vsyncpa [#allocation11], 1
    %3574 = vsyncpa [#allocation5], 1
    %s3575 = scalar_lea.sflag [#allocation5], 1
    %3576 = vsyncpa %s3575, 1

</llo_original>
